<compile_context>
chip_gen: v7x
topology: tpu7x:2x2x1
jax: 0.10.0
libtpu: 0.0.40
codegen_flags: <defaults>
</compile_context>

<pallas_src>
import functools

import jax
import jax.numpy as jnp
from jax.experimental import pallas as pl
from jax.experimental.pallas import tpu as pltpu


# ----------------------------------------------------------------------------
# Fused per-batch-element BERT encoder kernel
# ----------------------------------------------------------------------------

def _bert_encoder_kernel(emb_ref, mask_ref, emb_g_ref, emb_b_ref,
                         qkv_w_ref, qkv_b_ref, o_w_ref, o_b_ref,
                         ln1_g_ref, ln1_b_ref, i_w_ref, i_b_ref,
                         f_w_ref, f_b_ref, ln2_g_ref, ln2_b_ref,
                         cls_ref, *, num_layers, num_heads, head_dim, eps):
    S, H = emb_ref.shape[1], emb_ref.shape[2]
    scale = 1.0 / (head_dim ** 0.5)
    inv_sqrt2 = 1.0 / (2.0 ** 0.5)

    def layernorm(h, g, b):
        mean = jnp.mean(h, axis=-1, keepdims=True)
        c = h - mean
        var = jnp.mean(c * c, axis=-1, keepdims=True)
        return c * jax.lax.rsqrt(var + eps) * g + b

    def mxu(a, w, bias):
        # bf16 MXU inputs, f32 accumulation; bias add in f32.
        return jax.lax.dot_general(
            a.astype(jnp.bfloat16), w, (((1,), (0,)), ((), ())),
            preferred_element_type=jnp.float32) + bias

    # --- embedding LayerNorm (no residual input) ---
    h = layernorm(emb_ref[0], emb_g_ref[...], emb_b_ref[...])        # [S, H]
    mask_add = mask_ref[0]                                           # [1, S]

    for l in range(num_layers):                                      # static unroll
        x = h

        # fused Q/K/V projection: [S, H] @ [H, 3H] -> [S, 3H]
        qkv = mxu(x, qkv_w_ref[l], qkv_b_ref[l])

        # attention with in-kernel head split; output projection folded per head:
        #   ctx @ o_w  ==  sum_h ctx_h @ o_w[rows of head h]
        o_w_l = o_w_ref[l]                                           # [H, H] bf16
        attn_out = jnp.zeros((S, H), jnp.float32)
        for hh in range(num_heads):
            lo = hh * head_dim
            qh = qkv[:, lo:lo + head_dim]                            # [S, dh]
            kh = qkv[:, H + lo:H + lo + head_dim]                    # [S, dh]
            vh = qkv[:, 2 * H + lo:2 * H + lo + head_dim]            # [S, dh]

            s = jax.lax.dot_general(                                 # q @ k^T
                qh.astype(jnp.bfloat16), kh.astype(jnp.bfloat16),
                (((1,), (1,)), ((), ())),
                preferred_element_type=jnp.float32) * scale          # [S, S]
            s = s + mask_add                                         # additive mask
            s = s - jnp.max(s, axis=-1, keepdims=True)
            p = jnp.exp(s)
            p = p * pl.reciprocal(jnp.sum(p, axis=-1, keepdims=True), approx=True)

            ctx_h = jax.lax.dot_general(                             # p @ v
                p.astype(jnp.bfloat16), vh.astype(jnp.bfloat16),
                (((1,), (0,)), ((), ())),
                preferred_element_type=jnp.float32)                  # [S, dh]

            attn_out = attn_out + jax.lax.dot_general(
                ctx_h.astype(jnp.bfloat16), o_w_l[lo:lo + head_dim, :],
                (((1,), (0,)), ((), ())),
                preferred_element_type=jnp.float32)                  # [S, H]
        attn_out = attn_out + o_b_ref[l]

        h1 = layernorm(x + attn_out, ln1_g_ref[l], ln1_b_ref[l])     # LN(x + attn)

        inter = mxu(h1, i_w_ref[l], i_b_ref[l])                      # [S, I]
        inter = 0.5 * inter * (1.0 + jax.lax.erf(inter * inv_sqrt2)) # exact GELU
        ffn = mxu(inter, f_w_ref[l], f_b_ref[l])                     # [S, H]

        h = layernorm(h1 + ffn, ln2_g_ref[l], ln2_b_ref[l])          # LN(h1 + ffn)

    # only the CLS row goes back to HBM
    cls_ref[0] = h[0:1, :]


# ----------------------------------------------------------------------------
# Mini-BERT config, parameters and forward wrapper
# ----------------------------------------------------------------------------

CFG = dict(
    vocab_size=100,
    type_vocab_size=2,
    max_position=16,
    hidden=32,
    num_heads=4,
    head_dim=8,
    intermediate=128,
    num_layers=2,
    batch=2,
    seq=8,
)


def init_params(key, cfg):
    H, I, L = cfg["hidden"], cfg["intermediate"], cfg["num_layers"]

    def nrm(k, shape, scale=0.02):
        return scale * jax.random.normal(k, shape, dtype=jnp.float32)

    keys = iter(jax.random.split(key, 16))
    return {
        "word_emb": nrm(next(keys), (cfg["vocab_size"], H)),
        "pos_emb": nrm(next(keys), (cfg["max_position"], H)),
        "type_emb": nrm(next(keys), (cfg["type_vocab_size"], H)),
        "emb_ln_g": jnp.ones((1, H), jnp.float32),
        "emb_ln_b": jnp.zeros((1, H), jnp.float32),
        # stacked per-layer weights; matmul weights stored bf16 (MXU inputs),
        # biases / LayerNorm params stay f32 (exact elementwise math).
        "qkv_w": nrm(next(keys), (L, H, 3 * H)).astype(jnp.bfloat16),
        "qkv_b": jnp.zeros((L, 1, 3 * H), jnp.float32),
        "o_w": nrm(next(keys), (L, H, H)).astype(jnp.bfloat16),
        "o_b": jnp.zeros((L, 1, H), jnp.float32),
        "ln1_g": jnp.ones((L, 1, H), jnp.float32),
        "ln1_b": jnp.zeros((L, 1, H), jnp.float32),
        "i_w": nrm(next(keys), (L, H, I)).astype(jnp.bfloat16),
        "i_b": jnp.zeros((L, 1, I), jnp.float32),
        "f_w": nrm(next(keys), (L, I, H)).astype(jnp.bfloat16),
        "f_b": jnp.zeros((L, 1, H), jnp.float32),
        "ln2_g": jnp.ones((L, 1, H), jnp.float32),
        "ln2_b": jnp.zeros((L, 1, H), jnp.float32),
    }


def bert_cls_forward(params, input_ids, attention_mask, token_type_ids, cfg):
    B, S = input_ids.shape
    H, I, L = cfg["hidden"], cfg["intermediate"], cfg["num_layers"]

    # --- embeddings (gathers are glue; everything else runs in the fused kernel) ---
    positions = jnp.arange(S, dtype=jnp.int32)
    emb = (params["word_emb"][input_ids]
           + params["pos_emb"][positions][None, :, :]
           + params["type_emb"][token_type_ids]).astype(jnp.float32)      # [B, S, H]

    # additive attention mask (HF BERT: (1 - mask) * -10000), shape [B, 1, S]
    mask_add = ((1.0 - attention_mask.astype(jnp.float32)) * -10000.0).reshape(B, 1, S)

    kernel = functools.partial(
        _bert_encoder_kernel,
        num_layers=L, num_heads=cfg["num_heads"], head_dim=cfg["head_dim"],
        eps=1e-12)

    def rep(shape):  # weight/param spec: full array, resident across grid steps
        return pl.BlockSpec(shape, lambda b, _s=shape: (0,) * len(_s))

    out = pl.pallas_call(
        kernel,
        out_shape=jax.ShapeDtypeStruct((B, 1, H), jnp.float32),
        grid=(B,),
        in_specs=[
            pl.BlockSpec((1, S, H), lambda b: (b, 0, 0)),   # embeddings (per batch)
            pl.BlockSpec((1, 1, S), lambda b: (b, 0, 0)),   # additive mask
            rep((1, H)), rep((1, H)),                        # embedding LN
            rep((L, H, 3 * H)), rep((L, 1, 3 * H)),          # fused QKV
            rep((L, H, H)), rep((L, 1, H)),                  # attn output proj
            rep((L, 1, H)), rep((L, 1, H)),                  # LN1
            rep((L, H, I)), rep((L, 1, I)),                  # FFN intermediate
            rep((L, I, H)), rep((L, 1, H)),                  # FFN output
            rep((L, 1, H)), rep((L, 1, H)),                  # LN2
        ],
        out_specs=pl.BlockSpec((1, 1, H), lambda b: (b, 0, 0)),
        compiler_params=pltpu.CompilerParams(dimension_semantics=("parallel",)),
    )(emb, mask_add,
      params["emb_ln_g"], params["emb_ln_b"],
      params["qkv_w"], params["qkv_b"],
      params["o_w"], params["o_b"],
      params["ln1_g"], params["ln1_b"],
      params["i_w"], params["i_b"],
      params["f_w"], params["f_b"],
      params["ln2_g"], params["ln2_b"])

    # cls_embedding = last_hidden_state[:, 0, :]
    return out[:, 0, :]


# ----------------------------------------------------------------------------

if __name__ == "__main__":
    key = jax.random.PRNGKey(0)
    k_param, k_ids = jax.random.split(key)

    params = init_params(k_param, CFG)

    B, S = CFG["batch"], CFG["seq"]
    input_ids = jax.random.randint(k_ids, (B, S), 0, CFG["vocab_size"], dtype=jnp.int32)
    attention_mask = jnp.ones((B, S), dtype=jnp.int32).at[1, 6:].set(0)  # pad tail of row 1
    token_type_ids = jnp.zeros((B, S), dtype=jnp.int32)

    cls_embedding = bert_cls_forward(params, input_ids, attention_mask,
                                     token_type_ids, CFG)
    cls_embedding = jax.block_until_ready(cls_embedding)

    assert cls_embedding.shape == (B, CFG["hidden"])
    assert cls_embedding.dtype == jnp.float32
    print("KERNEL_OK")
</pallas_src>

<mosaic_0001>
module attributes {stable_mosaic.version = 11 : i64} {
  func.func @_bert_encoder_kernel(%arg0: i32, %arg1: memref<1x8x32xf32, #tpu.memory_space<vmem>>, %arg2: memref<1x1x8xf32, #tpu.memory_space<vmem>>, %arg3: memref<1x32xf32, #tpu.memory_space<vmem>>, %arg4: memref<1x32xf32, #tpu.memory_space<vmem>>, %arg5: memref<2x32x96xbf16, #tpu.memory_space<vmem>>, %arg6: memref<2x1x96xf32, #tpu.memory_space<vmem>>, %arg7: memref<2x32x32xbf16, #tpu.memory_space<vmem>>, %arg8: memref<2x1x32xf32, #tpu.memory_space<vmem>>, %arg9: memref<2x1x32xf32, #tpu.memory_space<vmem>>, %arg10: memref<2x1x32xf32, #tpu.memory_space<vmem>>, %arg11: memref<2x32x128xbf16, #tpu.memory_space<vmem>>, %arg12: memref<2x1x128xf32, #tpu.memory_space<vmem>>, %arg13: memref<2x128x32xbf16, #tpu.memory_space<vmem>>, %arg14: memref<2x1x32xf32, #tpu.memory_space<vmem>>, %arg15: memref<2x1x32xf32, #tpu.memory_space<vmem>>, %arg16: memref<2x1x32xf32, #tpu.memory_space<vmem>>, %arg17: memref<1x1x32xf32, #tpu.memory_space<vmem>>) attributes {dimension_semantics = [#tpu.dimension_semantics<parallel>], iteration_bounds = array<i64: 2>, scalar_prefetch = 0 : i64, scratch_operands = 0 : i64, tpu.core_type = #tpu.core_type<tc>, window_params = [{transform_indices = @transform_0, window_bounds = array<i64: 1, 8, 32>}, {transform_indices = @transform_1, window_bounds = array<i64: 1, 1, 8>}, {pipeline_mode = #tpu.pipeline_mode<synchronous>, transform_indices = @transform_2, window_bounds = array<i64: 1, 32>}, {pipeline_mode = #tpu.pipeline_mode<synchronous>, transform_indices = @transform_3, window_bounds = array<i64: 1, 32>}, {pipeline_mode = #tpu.pipeline_mode<synchronous>, transform_indices = @transform_4, window_bounds = array<i64: 2, 32, 96>}, {pipeline_mode = #tpu.pipeline_mode<synchronous>, transform_indices = @transform_5, window_bounds = array<i64: 2, 1, 96>}, {pipeline_mode = #tpu.pipeline_mode<synchronous>, transform_indices = @transform_6, window_bounds = array<i64: 2, 32, 32>}, {pipeline_mode = #tpu.pipeline_mode<synchronous>, transform_indices = @transform_7, window_bounds = array<i64: 2, 1, 32>}, {pipeline_mode = #tpu.pipeline_mode<synchronous>, transform_indices = @transform_8, window_bounds = array<i64: 2, 1, 32>}, {pipeline_mode = #tpu.pipeline_mode<synchronous>, transform_indices = @transform_9, window_bounds = array<i64: 2, 1, 32>}, {pipeline_mode = #tpu.pipeline_mode<synchronous>, transform_indices = @transform_10, window_bounds = array<i64: 2, 32, 128>}, {pipeline_mode = #tpu.pipeline_mode<synchronous>, transform_indices = @transform_11, window_bounds = array<i64: 2, 1, 128>}, {pipeline_mode = #tpu.pipeline_mode<synchronous>, transform_indices = @transform_12, window_bounds = array<i64: 2, 128, 32>}, {pipeline_mode = #tpu.pipeline_mode<synchronous>, transform_indices = @transform_13, window_bounds = array<i64: 2, 1, 32>}, {pipeline_mode = #tpu.pipeline_mode<synchronous>, transform_indices = @transform_14, window_bounds = array<i64: 2, 1, 32>}, {pipeline_mode = #tpu.pipeline_mode<synchronous>, transform_indices = @transform_15, window_bounds = array<i64: 2, 1, 32>}, {transform_indices = @transform_16, window_bounds = array<i64: 1, 1, 32>}]} {
    %c0 = arith.constant 0 : index
    %c0_0 = arith.constant 0 : index
    %c0_1 = arith.constant 0 : index
    %0 = vector.load %arg1[%c0, %c0_0, %c0_1] : memref<1x8x32xf32, #tpu.memory_space<vmem>>, vector<1x8x32xf32>
    %1 = vector.shape_cast %0 : vector<1x8x32xf32> to vector<8x32xf32>
    %c0_2 = arith.constant 0 : index
    %c0_3 = arith.constant 0 : index
    %2 = vector.load %arg3[%c0_2, %c0_3] : memref<1x32xf32, #tpu.memory_space<vmem>>, vector<1x32xf32>
    %c0_4 = arith.constant 0 : index
    %c0_5 = arith.constant 0 : index
    %3 = vector.load %arg4[%c0_4, %c0_5] : memref<1x32xf32, #tpu.memory_space<vmem>>, vector<1x32xf32>
    %cst = arith.constant dense<0.000000e+00> : vector<8xf32>
    %4 = vector.multi_reduction <add>, %1, %cst [1] : vector<8x32xf32> to vector<8xf32>
    %5 = vector.shape_cast %4 : vector<8xf32> to vector<8x1xf32>
    %cst_6 = arith.constant 3.200000e+01 : f32
    %6 = vector.broadcast %cst_6 : f32 to vector<8x1xf32>
    %7 = arith.divf %5, %6 : vector<8x1xf32>
    %8 = vector.broadcast %7 : vector<8x1xf32> to vector<8x32xf32>
    %9 = arith.subf %1, %8 : vector<8x32xf32>
    %10 = arith.mulf %9, %9 : vector<8x32xf32>
    %cst_7 = arith.constant dense<0.000000e+00> : vector<8xf32>
    %11 = vector.multi_reduction <add>, %10, %cst_7 [1] : vector<8x32xf32> to vector<8xf32>
    %12 = vector.shape_cast %11 : vector<8xf32> to vector<8x1xf32>
    %cst_8 = arith.constant 3.200000e+01 : f32
    %13 = vector.broadcast %cst_8 : f32 to vector<8x1xf32>
    %14 = arith.divf %12, %13 : vector<8x1xf32>
    %cst_9 = arith.constant 9.99999996E-13 : f32
    %15 = vector.broadcast %cst_9 : f32 to vector<8x1xf32>
    %16 = arith.addf %14, %15 : vector<8x1xf32>
    %17 = math.rsqrt %16 : vector<8x1xf32>
    %18 = vector.broadcast %17 : vector<8x1xf32> to vector<8x32xf32>
    %19 = arith.mulf %9, %18 : vector<8x32xf32>
    %20 = vector.broadcast %2 : vector<1x32xf32> to vector<8x32xf32>
    %21 = arith.mulf %19, %20 : vector<8x32xf32>
    %22 = vector.broadcast %3 : vector<1x32xf32> to vector<8x32xf32>
    %23 = arith.addf %21, %22 : vector<8x32xf32>
    %c0_10 = arith.constant 0 : index
    %c0_11 = arith.constant 0 : index
    %c0_12 = arith.constant 0 : index
    %24 = vector.load %arg2[%c0_10, %c0_11, %c0_12] : memref<1x1x8xf32, #tpu.memory_space<vmem>>, vector<1x1x8xf32>
    %25 = vector.shape_cast %24 : vector<1x1x8xf32> to vector<1x8xf32>
    %c0_13 = arith.constant 0 : index
    %c0_14 = arith.constant 0 : index
    %c0_15 = arith.constant 0 : index
    %26 = vector.load %arg5[%c0_13, %c0_14, %c0_15] : memref<2x32x96xbf16, #tpu.memory_space<vmem>>, vector<1x32x96xbf16>
    %27 = vector.shape_cast %26 : vector<1x32x96xbf16> to vector<32x96xbf16>
    %c0_16 = arith.constant 0 : index
    %c0_17 = arith.constant 0 : index
    %c0_18 = arith.constant 0 : index
    %28 = vector.load %arg6[%c0_16, %c0_17, %c0_18] : memref<2x1x96xf32, #tpu.memory_space<vmem>>, vector<1x1x96xf32>
    %29 = vector.shape_cast %28 : vector<1x1x96xf32> to vector<1x96xf32>
    %30 = arith.truncf %23 : vector<8x32xf32> to vector<8x32xbf16>
    %cst_19 = arith.constant dense<0.000000e+00> : vector<8x96xf32>
    %31 = tpu.matmul %30, %27, %cst_19 {dimension_numbers = #tpu.dot_dimension_numbers<[1], [0], [0], [1], [0, 0, 1, 1], [], []>} : vector<8x32xbf16>, vector<32x96xbf16>, vector<8x96xf32> -> vector<8x96xf32>
    %32 = vector.broadcast %29 : vector<1x96xf32> to vector<8x96xf32>
    %33 = arith.addf %31, %32 : vector<8x96xf32>
    %c0_20 = arith.constant 0 : index
    %c0_21 = arith.constant 0 : index
    %c0_22 = arith.constant 0 : index
    %34 = vector.load %arg7[%c0_20, %c0_21, %c0_22] : memref<2x32x32xbf16, #tpu.memory_space<vmem>>, vector<1x32x32xbf16>
    %35 = vector.shape_cast %34 : vector<1x32x32xbf16> to vector<32x32xbf16>
    %cst_23 = arith.constant 0.000000e+00 : f32
    %36 = vector.broadcast %cst_23 : f32 to vector<8x32xf32>
    %37 = vector.extract_strided_slice %33 {offsets = [0, 0], sizes = [8, 8], strides = [1, 1]} : vector<8x96xf32> to vector<8x8xf32>
    %38 = vector.extract_strided_slice %33 {offsets = [0, 32], sizes = [8, 8], strides = [1, 1]} : vector<8x96xf32> to vector<8x8xf32>
    %39 = vector.extract_strided_slice %33 {offsets = [0, 64], sizes = [8, 8], strides = [1, 1]} : vector<8x96xf32> to vector<8x8xf32>
    %40 = arith.truncf %37 : vector<8x8xf32> to vector<8x8xbf16>
    %41 = arith.truncf %38 : vector<8x8xf32> to vector<8x8xbf16>
    %cst_24 = arith.constant dense<0.000000e+00> : vector<8x8xf32>
    %42 = tpu.matmul %40, %41, %cst_24 {dimension_numbers = #tpu.dot_dimension_numbers<[1], [1], [0], [0], [0, 0, 1, 0], [], []>} : vector<8x8xbf16>, vector<8x8xbf16>, vector<8x8xf32> -> vector<8x8xf32>
    %cst_25 = arith.constant 0.353553385 : f32
    %43 = vector.broadcast %cst_25 : f32 to vector<8x8xf32>
    %44 = arith.mulf %42, %43 : vector<8x8xf32>
    %45 = vector.broadcast %25 : vector<1x8xf32> to vector<8x8xf32>
    %46 = arith.addf %44, %45 : vector<8x8xf32>
    %cst_26 = arith.constant dense<0xFF800000> : vector<8xf32>
    %47 = vector.multi_reduction <maximumf>, %46, %cst_26 [1] : vector<8x8xf32> to vector<8xf32>
    %48 = vector.shape_cast %47 : vector<8xf32> to vector<8x1xf32>
    %49 = vector.broadcast %48 : vector<8x1xf32> to vector<8x8xf32>
    %50 = arith.subf %46, %49 : vector<8x8xf32>
    %51 = math.exp %50 : vector<8x8xf32>
    %cst_27 = arith.constant dense<0.000000e+00> : vector<8xf32>
    %52 = vector.multi_reduction <add>, %51, %cst_27 [1] : vector<8x8xf32> to vector<8xf32>
    %53 = vector.shape_cast %52 : vector<8xf32> to vector<8x1xf32>
    %54 = tpu.reciprocal %53 {approx = true} : vector<8x1xf32> -> vector<8x1xf32>
    %55 = vector.broadcast %54 : vector<8x1xf32> to vector<8x8xf32>
    %56 = arith.mulf %51, %55 : vector<8x8xf32>
    %57 = arith.truncf %56 : vector<8x8xf32> to vector<8x8xbf16>
    %58 = arith.truncf %39 : vector<8x8xf32> to vector<8x8xbf16>
    %cst_28 = arith.constant dense<0.000000e+00> : vector<8x8xf32>
    %59 = tpu.matmul %57, %58, %cst_28 {dimension_numbers = #tpu.dot_dimension_numbers<[1], [0], [0], [1], [0, 0, 1, 1], [], []>} : vector<8x8xbf16>, vector<8x8xbf16>, vector<8x8xf32> -> vector<8x8xf32>
    %60 = arith.truncf %59 : vector<8x8xf32> to vector<8x8xbf16>
    %61 = vector.extract_strided_slice %35 {offsets = [0, 0], sizes = [8, 32], strides = [1, 1]} : vector<32x32xbf16> to vector<8x32xbf16>
    %cst_29 = arith.constant dense<0.000000e+00> : vector<8x32xf32>
    %62 = tpu.matmul %60, %61, %cst_29 {dimension_numbers = #tpu.dot_dimension_numbers<[1], [0], [0], [1], [0, 0, 1, 1], [], []>} : vector<8x8xbf16>, vector<8x32xbf16>, vector<8x32xf32> -> vector<8x32xf32>
    %63 = arith.addf %36, %62 : vector<8x32xf32>
    %64 = vector.extract_strided_slice %33 {offsets = [0, 8], sizes = [8, 8], strides = [1, 1]} : vector<8x96xf32> to vector<8x8xf32>
    %65 = vector.extract_strided_slice %33 {offsets = [0, 40], sizes = [8, 8], strides = [1, 1]} : vector<8x96xf32> to vector<8x8xf32>
    %66 = vector.extract_strided_slice %33 {offsets = [0, 72], sizes = [8, 8], strides = [1, 1]} : vector<8x96xf32> to vector<8x8xf32>
    %67 = arith.truncf %64 : vector<8x8xf32> to vector<8x8xbf16>
    %68 = arith.truncf %65 : vector<8x8xf32> to vector<8x8xbf16>
    %cst_30 = arith.constant dense<0.000000e+00> : vector<8x8xf32>
    %69 = tpu.matmul %67, %68, %cst_30 {dimension_numbers = #tpu.dot_dimension_numbers<[1], [1], [0], [0], [0, 0, 1, 0], [], []>} : vector<8x8xbf16>, vector<8x8xbf16>, vector<8x8xf32> -> vector<8x8xf32>
    %cst_31 = arith.constant 0.353553385 : f32
    %70 = vector.broadcast %cst_31 : f32 to vector<8x8xf32>
    %71 = arith.mulf %69, %70 : vector<8x8xf32>
    %72 = vector.broadcast %25 : vector<1x8xf32> to vector<8x8xf32>
    %73 = arith.addf %71, %72 : vector<8x8xf32>
    %cst_32 = arith.constant dense<0xFF800000> : vector<8xf32>
    %74 = vector.multi_reduction <maximumf>, %73, %cst_32 [1] : vector<8x8xf32> to vector<8xf32>
    %75 = vector.shape_cast %74 : vector<8xf32> to vector<8x1xf32>
    %76 = vector.broadcast %75 : vector<8x1xf32> to vector<8x8xf32>
    %77 = arith.subf %73, %76 : vector<8x8xf32>
    %78 = math.exp %77 : vector<8x8xf32>
    %cst_33 = arith.constant dense<0.000000e+00> : vector<8xf32>
    %79 = vector.multi_reduction <add>, %78, %cst_33 [1] : vector<8x8xf32> to vector<8xf32>
    %80 = vector.shape_cast %79 : vector<8xf32> to vector<8x1xf32>
    %81 = tpu.reciprocal %80 {approx = true} : vector<8x1xf32> -> vector<8x1xf32>
    %82 = vector.broadcast %81 : vector<8x1xf32> to vector<8x8xf32>
    %83 = arith.mulf %78, %82 : vector<8x8xf32>
    %84 = arith.truncf %83 : vector<8x8xf32> to vector<8x8xbf16>
    %85 = arith.truncf %66 : vector<8x8xf32> to vector<8x8xbf16>
    %cst_34 = arith.constant dense<0.000000e+00> : vector<8x8xf32>
    %86 = tpu.matmul %84, %85, %cst_34 {dimension_numbers = #tpu.dot_dimension_numbers<[1], [0], [0], [1], [0, 0, 1, 1], [], []>} : vector<8x8xbf16>, vector<8x8xbf16>, vector<8x8xf32> -> vector<8x8xf32>
    %87 = arith.truncf %86 : vector<8x8xf32> to vector<8x8xbf16>
    %88 = vector.extract_strided_slice %35 {offsets = [8, 0], sizes = [8, 32], strides = [1, 1]} : vector<32x32xbf16> to vector<8x32xbf16>
    %cst_35 = arith.constant dense<0.000000e+00> : vector<8x32xf32>
    %89 = tpu.matmul %87, %88, %cst_35 {dimension_numbers = #tpu.dot_dimension_numbers<[1], [0], [0], [1], [0, 0, 1, 1], [], []>} : vector<8x8xbf16>, vector<8x32xbf16>, vector<8x32xf32> -> vector<8x32xf32>
    %90 = arith.addf %63, %89 : vector<8x32xf32>
    %91 = vector.extract_strided_slice %33 {offsets = [0, 16], sizes = [8, 8], strides = [1, 1]} : vector<8x96xf32> to vector<8x8xf32>
    %92 = vector.extract_strided_slice %33 {offsets = [0, 48], sizes = [8, 8], strides = [1, 1]} : vector<8x96xf32> to vector<8x8xf32>
    %93 = vector.extract_strided_slice %33 {offsets = [0, 80], sizes = [8, 8], strides = [1, 1]} : vector<8x96xf32> to vector<8x8xf32>
    %94 = arith.truncf %91 : vector<8x8xf32> to vector<8x8xbf16>
    %95 = arith.truncf %92 : vector<8x8xf32> to vector<8x8xbf16>
    %cst_36 = arith.constant dense<0.000000e+00> : vector<8x8xf32>
    %96 = tpu.matmul %94, %95, %cst_36 {dimension_numbers = #tpu.dot_dimension_numbers<[1], [1], [0], [0], [0, 0, 1, 0], [], []>} : vector<8x8xbf16>, vector<8x8xbf16>, vector<8x8xf32> -> vector<8x8xf32>
    %cst_37 = arith.constant 0.353553385 : f32
    %97 = vector.broadcast %cst_37 : f32 to vector<8x8xf32>
    %98 = arith.mulf %96, %97 : vector<8x8xf32>
    %99 = vector.broadcast %25 : vector<1x8xf32> to vector<8x8xf32>
    %100 = arith.addf %98, %99 : vector<8x8xf32>
    %cst_38 = arith.constant dense<0xFF800000> : vector<8xf32>
    %101 = vector.multi_reduction <maximumf>, %100, %cst_38 [1] : vector<8x8xf32> to vector<8xf32>
    %102 = vector.shape_cast %101 : vector<8xf32> to vector<8x1xf32>
    %103 = vector.broadcast %102 : vector<8x1xf32> to vector<8x8xf32>
    %104 = arith.subf %100, %103 : vector<8x8xf32>
    %105 = math.exp %104 : vector<8x8xf32>
    %cst_39 = arith.constant dense<0.000000e+00> : vector<8xf32>
    %106 = vector.multi_reduction <add>, %105, %cst_39 [1] : vector<8x8xf32> to vector<8xf32>
    %107 = vector.shape_cast %106 : vector<8xf32> to vector<8x1xf32>
    %108 = tpu.reciprocal %107 {approx = true} : vector<8x1xf32> -> vector<8x1xf32>
    %109 = vector.broadcast %108 : vector<8x1xf32> to vector<8x8xf32>
    %110 = arith.mulf %105, %109 : vector<8x8xf32>
    %111 = arith.truncf %110 : vector<8x8xf32> to vector<8x8xbf16>
    %112 = arith.truncf %93 : vector<8x8xf32> to vector<8x8xbf16>
    %cst_40 = arith.constant dense<0.000000e+00> : vector<8x8xf32>
    %113 = tpu.matmul %111, %112, %cst_40 {dimension_numbers = #tpu.dot_dimension_numbers<[1], [0], [0], [1], [0, 0, 1, 1], [], []>} : vector<8x8xbf16>, vector<8x8xbf16>, vector<8x8xf32> -> vector<8x8xf32>
    %114 = arith.truncf %113 : vector<8x8xf32> to vector<8x8xbf16>
    %115 = vector.extract_strided_slice %35 {offsets = [16, 0], sizes = [8, 32], strides = [1, 1]} : vector<32x32xbf16> to vector<8x32xbf16>
    %cst_41 = arith.constant dense<0.000000e+00> : vector<8x32xf32>
    %116 = tpu.matmul %114, %115, %cst_41 {dimension_numbers = #tpu.dot_dimension_numbers<[1], [0], [0], [1], [0, 0, 1, 1], [], []>} : vector<8x8xbf16>, vector<8x32xbf16>, vector<8x32xf32> -> vector<8x32xf32>
    %117 = arith.addf %90, %116 : vector<8x32xf32>
    %118 = vector.extract_strided_slice %33 {offsets = [0, 24], sizes = [8, 8], strides = [1, 1]} : vector<8x96xf32> to vector<8x8xf32>
    %119 = vector.extract_strided_slice %33 {offsets = [0, 56], sizes = [8, 8], strides = [1, 1]} : vector<8x96xf32> to vector<8x8xf32>
    %120 = vector.extract_strided_slice %33 {offsets = [0, 88], sizes = [8, 8], strides = [1, 1]} : vector<8x96xf32> to vector<8x8xf32>
    %121 = arith.truncf %118 : vector<8x8xf32> to vector<8x8xbf16>
    %122 = arith.truncf %119 : vector<8x8xf32> to vector<8x8xbf16>
    %cst_42 = arith.constant dense<0.000000e+00> : vector<8x8xf32>
    %123 = tpu.matmul %121, %122, %cst_42 {dimension_numbers = #tpu.dot_dimension_numbers<[1], [1], [0], [0], [0, 0, 1, 0], [], []>} : vector<8x8xbf16>, vector<8x8xbf16>, vector<8x8xf32> -> vector<8x8xf32>
    %cst_43 = arith.constant 0.353553385 : f32
    %124 = vector.broadcast %cst_43 : f32 to vector<8x8xf32>
    %125 = arith.mulf %123, %124 : vector<8x8xf32>
    %126 = vector.broadcast %25 : vector<1x8xf32> to vector<8x8xf32>
    %127 = arith.addf %125, %126 : vector<8x8xf32>
    %cst_44 = arith.constant dense<0xFF800000> : vector<8xf32>
    %128 = vector.multi_reduction <maximumf>, %127, %cst_44 [1] : vector<8x8xf32> to vector<8xf32>
    %129 = vector.shape_cast %128 : vector<8xf32> to vector<8x1xf32>
    %130 = vector.broadcast %129 : vector<8x1xf32> to vector<8x8xf32>
    %131 = arith.subf %127, %130 : vector<8x8xf32>
    %132 = math.exp %131 : vector<8x8xf32>
    %cst_45 = arith.constant dense<0.000000e+00> : vector<8xf32>
    %133 = vector.multi_reduction <add>, %132, %cst_45 [1] : vector<8x8xf32> to vector<8xf32>
    %134 = vector.shape_cast %133 : vector<8xf32> to vector<8x1xf32>
    %135 = tpu.reciprocal %134 {approx = true} : vector<8x1xf32> -> vector<8x1xf32>
    %136 = vector.broadcast %135 : vector<8x1xf32> to vector<8x8xf32>
    %137 = arith.mulf %132, %136 : vector<8x8xf32>
    %138 = arith.truncf %137 : vector<8x8xf32> to vector<8x8xbf16>
    %139 = arith.truncf %120 : vector<8x8xf32> to vector<8x8xbf16>
    %cst_46 = arith.constant dense<0.000000e+00> : vector<8x8xf32>
    %140 = tpu.matmul %138, %139, %cst_46 {dimension_numbers = #tpu.dot_dimension_numbers<[1], [0], [0], [1], [0, 0, 1, 1], [], []>} : vector<8x8xbf16>, vector<8x8xbf16>, vector<8x8xf32> -> vector<8x8xf32>
    %141 = arith.truncf %140 : vector<8x8xf32> to vector<8x8xbf16>
    %142 = vector.extract_strided_slice %35 {offsets = [24, 0], sizes = [8, 32], strides = [1, 1]} : vector<32x32xbf16> to vector<8x32xbf16>
    %cst_47 = arith.constant dense<0.000000e+00> : vector<8x32xf32>
    %143 = tpu.matmul %141, %142, %cst_47 {dimension_numbers = #tpu.dot_dimension_numbers<[1], [0], [0], [1], [0, 0, 1, 1], [], []>} : vector<8x8xbf16>, vector<8x32xbf16>, vector<8x32xf32> -> vector<8x32xf32>
    %144 = arith.addf %117, %143 : vector<8x32xf32>
    %c0_48 = arith.constant 0 : index
    %c0_49 = arith.constant 0 : index
    %c0_50 = arith.constant 0 : index
    %145 = vector.load %arg8[%c0_48, %c0_49, %c0_50] : memref<2x1x32xf32, #tpu.memory_space<vmem>>, vector<1x1x32xf32>
    %146 = vector.shape_cast %145 : vector<1x1x32xf32> to vector<1x32xf32>
    %147 = vector.broadcast %146 : vector<1x32xf32> to vector<8x32xf32>
    %148 = arith.addf %144, %147 : vector<8x32xf32>
    %149 = arith.addf %23, %148 : vector<8x32xf32>
    %c0_51 = arith.constant 0 : index
    %c0_52 = arith.constant 0 : index
    %c0_53 = arith.constant 0 : index
    %150 = vector.load %arg9[%c0_51, %c0_52, %c0_53] : memref<2x1x32xf32, #tpu.memory_space<vmem>>, vector<1x1x32xf32>
    %151 = vector.shape_cast %150 : vector<1x1x32xf32> to vector<1x32xf32>
    %c0_54 = arith.constant 0 : index
    %c0_55 = arith.constant 0 : index
    %c0_56 = arith.constant 0 : index
    %152 = vector.load %arg10[%c0_54, %c0_55, %c0_56] : memref<2x1x32xf32, #tpu.memory_space<vmem>>, vector<1x1x32xf32>
    %153 = vector.shape_cast %152 : vector<1x1x32xf32> to vector<1x32xf32>
    %cst_57 = arith.constant dense<0.000000e+00> : vector<8xf32>
    %154 = vector.multi_reduction <add>, %149, %cst_57 [1] : vector<8x32xf32> to vector<8xf32>
    %155 = vector.shape_cast %154 : vector<8xf32> to vector<8x1xf32>
    %cst_58 = arith.constant 3.200000e+01 : f32
    %156 = vector.broadcast %cst_58 : f32 to vector<8x1xf32>
    %157 = arith.divf %155, %156 : vector<8x1xf32>
    %158 = vector.broadcast %157 : vector<8x1xf32> to vector<8x32xf32>
    %159 = arith.subf %149, %158 : vector<8x32xf32>
    %160 = arith.mulf %159, %159 : vector<8x32xf32>
    %cst_59 = arith.constant dense<0.000000e+00> : vector<8xf32>
    %161 = vector.multi_reduction <add>, %160, %cst_59 [1] : vector<8x32xf32> to vector<8xf32>
    %162 = vector.shape_cast %161 : vector<8xf32> to vector<8x1xf32>
    %cst_60 = arith.constant 3.200000e+01 : f32
    %163 = vector.broadcast %cst_60 : f32 to vector<8x1xf32>
    %164 = arith.divf %162, %163 : vector<8x1xf32>
    %cst_61 = arith.constant 9.99999996E-13 : f32
    %165 = vector.broadcast %cst_61 : f32 to vector<8x1xf32>
    %166 = arith.addf %164, %165 : vector<8x1xf32>
    %167 = math.rsqrt %166 : vector<8x1xf32>
    %168 = vector.broadcast %167 : vector<8x1xf32> to vector<8x32xf32>
    %169 = arith.mulf %159, %168 : vector<8x32xf32>
    %170 = vector.broadcast %151 : vector<1x32xf32> to vector<8x32xf32>
    %171 = arith.mulf %169, %170 : vector<8x32xf32>
    %172 = vector.broadcast %153 : vector<1x32xf32> to vector<8x32xf32>
    %173 = arith.addf %171, %172 : vector<8x32xf32>
    %c0_62 = arith.constant 0 : index
    %c0_63 = arith.constant 0 : index
    %c0_64 = arith.constant 0 : index
    %174 = vector.load %arg11[%c0_62, %c0_63, %c0_64] : memref<2x32x128xbf16, #tpu.memory_space<vmem>>, vector<1x32x128xbf16>
    %175 = vector.shape_cast %174 : vector<1x32x128xbf16> to vector<32x128xbf16>
    %c0_65 = arith.constant 0 : index
    %c0_66 = arith.constant 0 : index
    %c0_67 = arith.constant 0 : index
    %176 = vector.load %arg12[%c0_65, %c0_66, %c0_67] : memref<2x1x128xf32, #tpu.memory_space<vmem>>, vector<1x1x128xf32>
    %177 = vector.shape_cast %176 : vector<1x1x128xf32> to vector<1x128xf32>
    %178 = arith.truncf %173 : vector<8x32xf32> to vector<8x32xbf16>
    %cst_68 = arith.constant dense<0.000000e+00> : vector<8x128xf32>
    %179 = tpu.matmul %178, %175, %cst_68 {dimension_numbers = #tpu.dot_dimension_numbers<[1], [0], [0], [1], [0, 0, 1, 1], [], []>} : vector<8x32xbf16>, vector<32x128xbf16>, vector<8x128xf32> -> vector<8x128xf32>
    %180 = vector.broadcast %177 : vector<1x128xf32> to vector<8x128xf32>
    %181 = arith.addf %179, %180 : vector<8x128xf32>
    %cst_69 = arith.constant 5.000000e-01 : f32
    %182 = vector.broadcast %cst_69 : f32 to vector<8x128xf32>
    %183 = arith.mulf %182, %181 : vector<8x128xf32>
    %cst_70 = arith.constant 0.707106769 : f32
    %184 = vector.broadcast %cst_70 : f32 to vector<8x128xf32>
    %185 = arith.mulf %181, %184 : vector<8x128xf32>
    %186 = math.erf %185 : vector<8x128xf32>
    %cst_71 = arith.constant 1.000000e+00 : f32
    %187 = vector.broadcast %cst_71 : f32 to vector<8x128xf32>
    %188 = arith.addf %187, %186 : vector<8x128xf32>
    %189 = arith.mulf %183, %188 : vector<8x128xf32>
    %c0_72 = arith.constant 0 : index
    %c0_73 = arith.constant 0 : index
    %c0_74 = arith.constant 0 : index
    %190 = vector.load %arg13[%c0_72, %c0_73, %c0_74] : memref<2x128x32xbf16, #tpu.memory_space<vmem>>, vector<1x128x32xbf16>
    %191 = vector.shape_cast %190 : vector<1x128x32xbf16> to vector<128x32xbf16>
    %c0_75 = arith.constant 0 : index
    %c0_76 = arith.constant 0 : index
    %c0_77 = arith.constant 0 : index
    %192 = vector.load %arg14[%c0_75, %c0_76, %c0_77] : memref<2x1x32xf32, #tpu.memory_space<vmem>>, vector<1x1x32xf32>
    %193 = vector.shape_cast %192 : vector<1x1x32xf32> to vector<1x32xf32>
    %194 = arith.truncf %189 : vector<8x128xf32> to vector<8x128xbf16>
    %cst_78 = arith.constant dense<0.000000e+00> : vector<8x32xf32>
    %195 = tpu.matmul %194, %191, %cst_78 {dimension_numbers = #tpu.dot_dimension_numbers<[1], [0], [0], [1], [0, 0, 1, 1], [], []>} : vector<8x128xbf16>, vector<128x32xbf16>, vector<8x32xf32> -> vector<8x32xf32>
    %196 = vector.broadcast %193 : vector<1x32xf32> to vector<8x32xf32>
    %197 = arith.addf %195, %196 : vector<8x32xf32>
    %198 = arith.addf %173, %197 : vector<8x32xf32>
    %c0_79 = arith.constant 0 : index
    %c0_80 = arith.constant 0 : index
    %c0_81 = arith.constant 0 : index
    %199 = vector.load %arg15[%c0_79, %c0_80, %c0_81] : memref<2x1x32xf32, #tpu.memory_space<vmem>>, vector<1x1x32xf32>
    %200 = vector.shape_cast %199 : vector<1x1x32xf32> to vector<1x32xf32>
    %c0_82 = arith.constant 0 : index
    %c0_83 = arith.constant 0 : index
    %c0_84 = arith.constant 0 : index
    %201 = vector.load %arg16[%c0_82, %c0_83, %c0_84] : memref<2x1x32xf32, #tpu.memory_space<vmem>>, vector<1x1x32xf32>
    %202 = vector.shape_cast %201 : vector<1x1x32xf32> to vector<1x32xf32>
    %cst_85 = arith.constant dense<0.000000e+00> : vector<8xf32>
    %203 = vector.multi_reduction <add>, %198, %cst_85 [1] : vector<8x32xf32> to vector<8xf32>
    %204 = vector.shape_cast %203 : vector<8xf32> to vector<8x1xf32>
    %cst_86 = arith.constant 3.200000e+01 : f32
    %205 = vector.broadcast %cst_86 : f32 to vector<8x1xf32>
    %206 = arith.divf %204, %205 : vector<8x1xf32>
    %207 = vector.broadcast %206 : vector<8x1xf32> to vector<8x32xf32>
    %208 = arith.subf %198, %207 : vector<8x32xf32>
    %209 = arith.mulf %208, %208 : vector<8x32xf32>
    %cst_87 = arith.constant dense<0.000000e+00> : vector<8xf32>
    %210 = vector.multi_reduction <add>, %209, %cst_87 [1] : vector<8x32xf32> to vector<8xf32>
    %211 = vector.shape_cast %210 : vector<8xf32> to vector<8x1xf32>
    %cst_88 = arith.constant 3.200000e+01 : f32
    %212 = vector.broadcast %cst_88 : f32 to vector<8x1xf32>
    %213 = arith.divf %211, %212 : vector<8x1xf32>
    %cst_89 = arith.constant 9.99999996E-13 : f32
    %214 = vector.broadcast %cst_89 : f32 to vector<8x1xf32>
    %215 = arith.addf %213, %214 : vector<8x1xf32>
    %216 = math.rsqrt %215 : vector<8x1xf32>
    %217 = vector.broadcast %216 : vector<8x1xf32> to vector<8x32xf32>
    %218 = arith.mulf %208, %217 : vector<8x32xf32>
    %219 = vector.broadcast %200 : vector<1x32xf32> to vector<8x32xf32>
    %220 = arith.mulf %218, %219 : vector<8x32xf32>
    %221 = vector.broadcast %202 : vector<1x32xf32> to vector<8x32xf32>
    %222 = arith.addf %220, %221 : vector<8x32xf32>
    %c1 = arith.constant 1 : index
    %c0_90 = arith.constant 0 : index
    %c0_91 = arith.constant 0 : index
    %223 = vector.load %arg5[%c1, %c0_90, %c0_91] : memref<2x32x96xbf16, #tpu.memory_space<vmem>>, vector<1x32x96xbf16>
    %224 = vector.shape_cast %223 : vector<1x32x96xbf16> to vector<32x96xbf16>
    %c1_92 = arith.constant 1 : index
    %c0_93 = arith.constant 0 : index
    %c0_94 = arith.constant 0 : index
    %225 = vector.load %arg6[%c1_92, %c0_93, %c0_94] : memref<2x1x96xf32, #tpu.memory_space<vmem>>, vector<1x1x96xf32>
    %226 = vector.shape_cast %225 : vector<1x1x96xf32> to vector<1x96xf32>
    %227 = arith.truncf %222 : vector<8x32xf32> to vector<8x32xbf16>
    %cst_95 = arith.constant dense<0.000000e+00> : vector<8x96xf32>
    %228 = tpu.matmul %227, %224, %cst_95 {dimension_numbers = #tpu.dot_dimension_numbers<[1], [0], [0], [1], [0, 0, 1, 1], [], []>} : vector<8x32xbf16>, vector<32x96xbf16>, vector<8x96xf32> -> vector<8x96xf32>
    %229 = vector.broadcast %226 : vector<1x96xf32> to vector<8x96xf32>
    %230 = arith.addf %228, %229 : vector<8x96xf32>
    %c1_96 = arith.constant 1 : index
    %c0_97 = arith.constant 0 : index
    %c0_98 = arith.constant 0 : index
    %231 = vector.load %arg7[%c1_96, %c0_97, %c0_98] : memref<2x32x32xbf16, #tpu.memory_space<vmem>>, vector<1x32x32xbf16>
    %232 = vector.shape_cast %231 : vector<1x32x32xbf16> to vector<32x32xbf16>
    %cst_99 = arith.constant 0.000000e+00 : f32
    %233 = vector.broadcast %cst_99 : f32 to vector<8x32xf32>
    %234 = vector.extract_strided_slice %230 {offsets = [0, 0], sizes = [8, 8], strides = [1, 1]} : vector<8x96xf32> to vector<8x8xf32>
    %235 = vector.extract_strided_slice %230 {offsets = [0, 32], sizes = [8, 8], strides = [1, 1]} : vector<8x96xf32> to vector<8x8xf32>
    %236 = vector.extract_strided_slice %230 {offsets = [0, 64], sizes = [8, 8], strides = [1, 1]} : vector<8x96xf32> to vector<8x8xf32>
    %237 = arith.truncf %234 : vector<8x8xf32> to vector<8x8xbf16>
    %238 = arith.truncf %235 : vector<8x8xf32> to vector<8x8xbf16>
    %cst_100 = arith.constant dense<0.000000e+00> : vector<8x8xf32>
    %239 = tpu.matmul %237, %238, %cst_100 {dimension_numbers = #tpu.dot_dimension_numbers<[1], [1], [0], [0], [0, 0, 1, 0], [], []>} : vector<8x8xbf16>, vector<8x8xbf16>, vector<8x8xf32> -> vector<8x8xf32>
    %cst_101 = arith.constant 0.353553385 : f32
    %240 = vector.broadcast %cst_101 : f32 to vector<8x8xf32>
    %241 = arith.mulf %239, %240 : vector<8x8xf32>
    %242 = vector.broadcast %25 : vector<1x8xf32> to vector<8x8xf32>
    %243 = arith.addf %241, %242 : vector<8x8xf32>
    %cst_102 = arith.constant dense<0xFF800000> : vector<8xf32>
    %244 = vector.multi_reduction <maximumf>, %243, %cst_102 [1] : vector<8x8xf32> to vector<8xf32>
    %245 = vector.shape_cast %244 : vector<8xf32> to vector<8x1xf32>
    %246 = vector.broadcast %245 : vector<8x1xf32> to vector<8x8xf32>
    %247 = arith.subf %243, %246 : vector<8x8xf32>
    %248 = math.exp %247 : vector<8x8xf32>
    %cst_103 = arith.constant dense<0.000000e+00> : vector<8xf32>
    %249 = vector.multi_reduction <add>, %248, %cst_103 [1] : vector<8x8xf32> to vector<8xf32>
    %250 = vector.shape_cast %249 : vector<8xf32> to vector<8x1xf32>
    %251 = tpu.reciprocal %250 {approx = true} : vector<8x1xf32> -> vector<8x1xf32>
    %252 = vector.broadcast %251 : vector<8x1xf32> to vector<8x8xf32>
    %253 = arith.mulf %248, %252 : vector<8x8xf32>
    %254 = arith.truncf %253 : vector<8x8xf32> to vector<8x8xbf16>
    %255 = arith.truncf %236 : vector<8x8xf32> to vector<8x8xbf16>
    %cst_104 = arith.constant dense<0.000000e+00> : vector<8x8xf32>
    %256 = tpu.matmul %254, %255, %cst_104 {dimension_numbers = #tpu.dot_dimension_numbers<[1], [0], [0], [1], [0, 0, 1, 1], [], []>} : vector<8x8xbf16>, vector<8x8xbf16>, vector<8x8xf32> -> vector<8x8xf32>
    %257 = arith.truncf %256 : vector<8x8xf32> to vector<8x8xbf16>
    %258 = vector.extract_strided_slice %232 {offsets = [0, 0], sizes = [8, 32], strides = [1, 1]} : vector<32x32xbf16> to vector<8x32xbf16>
    %cst_105 = arith.constant dense<0.000000e+00> : vector<8x32xf32>
    %259 = tpu.matmul %257, %258, %cst_105 {dimension_numbers = #tpu.dot_dimension_numbers<[1], [0], [0], [1], [0, 0, 1, 1], [], []>} : vector<8x8xbf16>, vector<8x32xbf16>, vector<8x32xf32> -> vector<8x32xf32>
    %260 = arith.addf %233, %259 : vector<8x32xf32>
    %261 = vector.extract_strided_slice %230 {offsets = [0, 8], sizes = [8, 8], strides = [1, 1]} : vector<8x96xf32> to vector<8x8xf32>
    %262 = vector.extract_strided_slice %230 {offsets = [0, 40], sizes = [8, 8], strides = [1, 1]} : vector<8x96xf32> to vector<8x8xf32>
    %263 = vector.extract_strided_slice %230 {offsets = [0, 72], sizes = [8, 8], strides = [1, 1]} : vector<8x96xf32> to vector<8x8xf32>
    %264 = arith.truncf %261 : vector<8x8xf32> to vector<8x8xbf16>
    %265 = arith.truncf %262 : vector<8x8xf32> to vector<8x8xbf16>
    %cst_106 = arith.constant dense<0.000000e+00> : vector<8x8xf32>
    %266 = tpu.matmul %264, %265, %cst_106 {dimension_numbers = #tpu.dot_dimension_numbers<[1], [1], [0], [0], [0, 0, 1, 0], [], []>} : vector<8x8xbf16>, vector<8x8xbf16>, vector<8x8xf32> -> vector<8x8xf32>
    %cst_107 = arith.constant 0.353553385 : f32
    %267 = vector.broadcast %cst_107 : f32 to vector<8x8xf32>
    %268 = arith.mulf %266, %267 : vector<8x8xf32>
    %269 = vector.broadcast %25 : vector<1x8xf32> to vector<8x8xf32>
    %270 = arith.addf %268, %269 : vector<8x8xf32>
    %cst_108 = arith.constant dense<0xFF800000> : vector<8xf32>
    %271 = vector.multi_reduction <maximumf>, %270, %cst_108 [1] : vector<8x8xf32> to vector<8xf32>
    %272 = vector.shape_cast %271 : vector<8xf32> to vector<8x1xf32>
    %273 = vector.broadcast %272 : vector<8x1xf32> to vector<8x8xf32>
    %274 = arith.subf %270, %273 : vector<8x8xf32>
    %275 = math.exp %274 : vector<8x8xf32>
    %cst_109 = arith.constant dense<0.000000e+00> : vector<8xf32>
    %276 = vector.multi_reduction <add>, %275, %cst_109 [1] : vector<8x8xf32> to vector<8xf32>
    %277 = vector.shape_cast %276 : vector<8xf32> to vector<8x1xf32>
    %278 = tpu.reciprocal %277 {approx = true} : vector<8x1xf32> -> vector<8x1xf32>
    %279 = vector.broadcast %278 : vector<8x1xf32> to vector<8x8xf32>
    %280 = arith.mulf %275, %279 : vector<8x8xf32>
    %281 = arith.truncf %280 : vector<8x8xf32> to vector<8x8xbf16>
    %282 = arith.truncf %263 : vector<8x8xf32> to vector<8x8xbf16>
    %cst_110 = arith.constant dense<0.000000e+00> : vector<8x8xf32>
    %283 = tpu.matmul %281, %282, %cst_110 {dimension_numbers = #tpu.dot_dimension_numbers<[1], [0], [0], [1], [0, 0, 1, 1], [], []>} : vector<8x8xbf16>, vector<8x8xbf16>, vector<8x8xf32> -> vector<8x8xf32>
    %284 = arith.truncf %283 : vector<8x8xf32> to vector<8x8xbf16>
    %285 = vector.extract_strided_slice %232 {offsets = [8, 0], sizes = [8, 32], strides = [1, 1]} : vector<32x32xbf16> to vector<8x32xbf16>
    %cst_111 = arith.constant dense<0.000000e+00> : vector<8x32xf32>
    %286 = tpu.matmul %284, %285, %cst_111 {dimension_numbers = #tpu.dot_dimension_numbers<[1], [0], [0], [1], [0, 0, 1, 1], [], []>} : vector<8x8xbf16>, vector<8x32xbf16>, vector<8x32xf32> -> vector<8x32xf32>
    %287 = arith.addf %260, %286 : vector<8x32xf32>
    %288 = vector.extract_strided_slice %230 {offsets = [0, 16], sizes = [8, 8], strides = [1, 1]} : vector<8x96xf32> to vector<8x8xf32>
    %289 = vector.extract_strided_slice %230 {offsets = [0, 48], sizes = [8, 8], strides = [1, 1]} : vector<8x96xf32> to vector<8x8xf32>
    %290 = vector.extract_strided_slice %230 {offsets = [0, 80], sizes = [8, 8], strides = [1, 1]} : vector<8x96xf32> to vector<8x8xf32>
    %291 = arith.truncf %288 : vector<8x8xf32> to vector<8x8xbf16>
    %292 = arith.truncf %289 : vector<8x8xf32> to vector<8x8xbf16>
    %cst_112 = arith.constant dense<0.000000e+00> : vector<8x8xf32>
    %293 = tpu.matmul %291, %292, %cst_112 {dimension_numbers = #tpu.dot_dimension_numbers<[1], [1], [0], [0], [0, 0, 1, 0], [], []>} : vector<8x8xbf16>, vector<8x8xbf16>, vector<8x8xf32> -> vector<8x8xf32>
    %cst_113 = arith.constant 0.353553385 : f32
    %294 = vector.broadcast %cst_113 : f32 to vector<8x8xf32>
    %295 = arith.mulf %293, %294 : vector<8x8xf32>
    %296 = vector.broadcast %25 : vector<1x8xf32> to vector<8x8xf32>
    %297 = arith.addf %295, %296 : vector<8x8xf32>
    %cst_114 = arith.constant dense<0xFF800000> : vector<8xf32>
    %298 = vector.multi_reduction <maximumf>, %297, %cst_114 [1] : vector<8x8xf32> to vector<8xf32>
    %299 = vector.shape_cast %298 : vector<8xf32> to vector<8x1xf32>
    %300 = vector.broadcast %299 : vector<8x1xf32> to vector<8x8xf32>
    %301 = arith.subf %297, %300 : vector<8x8xf32>
    %302 = math.exp %301 : vector<8x8xf32>
    %cst_115 = arith.constant dense<0.000000e+00> : vector<8xf32>
    %303 = vector.multi_reduction <add>, %302, %cst_115 [1] : vector<8x8xf32> to vector<8xf32>
    %304 = vector.shape_cast %303 : vector<8xf32> to vector<8x1xf32>
    %305 = tpu.reciprocal %304 {approx = true} : vector<8x1xf32> -> vector<8x1xf32>
    %306 = vector.broadcast %305 : vector<8x1xf32> to vector<8x8xf32>
    %307 = arith.mulf %302, %306 : vector<8x8xf32>
    %308 = arith.truncf %307 : vector<8x8xf32> to vector<8x8xbf16>
    %309 = arith.truncf %290 : vector<8x8xf32> to vector<8x8xbf16>
    %cst_116 = arith.constant dense<0.000000e+00> : vector<8x8xf32>
    %310 = tpu.matmul %308, %309, %cst_116 {dimension_numbers = #tpu.dot_dimension_numbers<[1], [0], [0], [1], [0, 0, 1, 1], [], []>} : vector<8x8xbf16>, vector<8x8xbf16>, vector<8x8xf32> -> vector<8x8xf32>
    %311 = arith.truncf %310 : vector<8x8xf32> to vector<8x8xbf16>
    %312 = vector.extract_strided_slice %232 {offsets = [16, 0], sizes = [8, 32], strides = [1, 1]} : vector<32x32xbf16> to vector<8x32xbf16>
    %cst_117 = arith.constant dense<0.000000e+00> : vector<8x32xf32>
    %313 = tpu.matmul %311, %312, %cst_117 {dimension_numbers = #tpu.dot_dimension_numbers<[1], [0], [0], [1], [0, 0, 1, 1], [], []>} : vector<8x8xbf16>, vector<8x32xbf16>, vector<8x32xf32> -> vector<8x32xf32>
    %314 = arith.addf %287, %313 : vector<8x32xf32>
    %315 = vector.extract_strided_slice %230 {offsets = [0, 24], sizes = [8, 8], strides = [1, 1]} : vector<8x96xf32> to vector<8x8xf32>
    %316 = vector.extract_strided_slice %230 {offsets = [0, 56], sizes = [8, 8], strides = [1, 1]} : vector<8x96xf32> to vector<8x8xf32>
    %317 = vector.extract_strided_slice %230 {offsets = [0, 88], sizes = [8, 8], strides = [1, 1]} : vector<8x96xf32> to vector<8x8xf32>
    %318 = arith.truncf %315 : vector<8x8xf32> to vector<8x8xbf16>
    %319 = arith.truncf %316 : vector<8x8xf32> to vector<8x8xbf16>
    %cst_118 = arith.constant dense<0.000000e+00> : vector<8x8xf32>
    %320 = tpu.matmul %318, %319, %cst_118 {dimension_numbers = #tpu.dot_dimension_numbers<[1], [1], [0], [0], [0, 0, 1, 0], [], []>} : vector<8x8xbf16>, vector<8x8xbf16>, vector<8x8xf32> -> vector<8x8xf32>
    %cst_119 = arith.constant 0.353553385 : f32
    %321 = vector.broadcast %cst_119 : f32 to vector<8x8xf32>
    %322 = arith.mulf %320, %321 : vector<8x8xf32>
    %323 = vector.broadcast %25 : vector<1x8xf32> to vector<8x8xf32>
    %324 = arith.addf %322, %323 : vector<8x8xf32>
    %cst_120 = arith.constant dense<0xFF800000> : vector<8xf32>
    %325 = vector.multi_reduction <maximumf>, %324, %cst_120 [1] : vector<8x8xf32> to vector<8xf32>
    %326 = vector.shape_cast %325 : vector<8xf32> to vector<8x1xf32>
    %327 = vector.broadcast %326 : vector<8x1xf32> to vector<8x8xf32>
    %328 = arith.subf %324, %327 : vector<8x8xf32>
    %329 = math.exp %328 : vector<8x8xf32>
    %cst_121 = arith.constant dense<0.000000e+00> : vector<8xf32>
    %330 = vector.multi_reduction <add>, %329, %cst_121 [1] : vector<8x8xf32> to vector<8xf32>
    %331 = vector.shape_cast %330 : vector<8xf32> to vector<8x1xf32>
    %332 = tpu.reciprocal %331 {approx = true} : vector<8x1xf32> -> vector<8x1xf32>
    %333 = vector.broadcast %332 : vector<8x1xf32> to vector<8x8xf32>
    %334 = arith.mulf %329, %333 : vector<8x8xf32>
    %335 = arith.truncf %334 : vector<8x8xf32> to vector<8x8xbf16>
    %336 = arith.truncf %317 : vector<8x8xf32> to vector<8x8xbf16>
    %cst_122 = arith.constant dense<0.000000e+00> : vector<8x8xf32>
    %337 = tpu.matmul %335, %336, %cst_122 {dimension_numbers = #tpu.dot_dimension_numbers<[1], [0], [0], [1], [0, 0, 1, 1], [], []>} : vector<8x8xbf16>, vector<8x8xbf16>, vector<8x8xf32> -> vector<8x8xf32>
    %338 = arith.truncf %337 : vector<8x8xf32> to vector<8x8xbf16>
    %339 = vector.extract_strided_slice %232 {offsets = [24, 0], sizes = [8, 32], strides = [1, 1]} : vector<32x32xbf16> to vector<8x32xbf16>
    %cst_123 = arith.constant dense<0.000000e+00> : vector<8x32xf32>
    %340 = tpu.matmul %338, %339, %cst_123 {dimension_numbers = #tpu.dot_dimension_numbers<[1], [0], [0], [1], [0, 0, 1, 1], [], []>} : vector<8x8xbf16>, vector<8x32xbf16>, vector<8x32xf32> -> vector<8x32xf32>
    %341 = arith.addf %314, %340 : vector<8x32xf32>
    %c1_124 = arith.constant 1 : index
    %c0_125 = arith.constant 0 : index
    %c0_126 = arith.constant 0 : index
    %342 = vector.load %arg8[%c1_124, %c0_125, %c0_126] : memref<2x1x32xf32, #tpu.memory_space<vmem>>, vector<1x1x32xf32>
    %343 = vector.shape_cast %342 : vector<1x1x32xf32> to vector<1x32xf32>
    %344 = vector.broadcast %343 : vector<1x32xf32> to vector<8x32xf32>
    %345 = arith.addf %341, %344 : vector<8x32xf32>
    %346 = arith.addf %222, %345 : vector<8x32xf32>
    %c1_127 = arith.constant 1 : index
    %c0_128 = arith.constant 0 : index
    %c0_129 = arith.constant 0 : index
    %347 = vector.load %arg9[%c1_127, %c0_128, %c0_129] : memref<2x1x32xf32, #tpu.memory_space<vmem>>, vector<1x1x32xf32>
    %348 = vector.shape_cast %347 : vector<1x1x32xf32> to vector<1x32xf32>
    %c1_130 = arith.constant 1 : index
    %c0_131 = arith.constant 0 : index
    %c0_132 = arith.constant 0 : index
    %349 = vector.load %arg10[%c1_130, %c0_131, %c0_132] : memref<2x1x32xf32, #tpu.memory_space<vmem>>, vector<1x1x32xf32>
    %350 = vector.shape_cast %349 : vector<1x1x32xf32> to vector<1x32xf32>
    %cst_133 = arith.constant dense<0.000000e+00> : vector<8xf32>
    %351 = vector.multi_reduction <add>, %346, %cst_133 [1] : vector<8x32xf32> to vector<8xf32>
    %352 = vector.shape_cast %351 : vector<8xf32> to vector<8x1xf32>
    %cst_134 = arith.constant 3.200000e+01 : f32
    %353 = vector.broadcast %cst_134 : f32 to vector<8x1xf32>
    %354 = arith.divf %352, %353 : vector<8x1xf32>
    %355 = vector.broadcast %354 : vector<8x1xf32> to vector<8x32xf32>
    %356 = arith.subf %346, %355 : vector<8x32xf32>
    %357 = arith.mulf %356, %356 : vector<8x32xf32>
    %cst_135 = arith.constant dense<0.000000e+00> : vector<8xf32>
    %358 = vector.multi_reduction <add>, %357, %cst_135 [1] : vector<8x32xf32> to vector<8xf32>
    %359 = vector.shape_cast %358 : vector<8xf32> to vector<8x1xf32>
    %cst_136 = arith.constant 3.200000e+01 : f32
    %360 = vector.broadcast %cst_136 : f32 to vector<8x1xf32>
    %361 = arith.divf %359, %360 : vector<8x1xf32>
    %cst_137 = arith.constant 9.99999996E-13 : f32
    %362 = vector.broadcast %cst_137 : f32 to vector<8x1xf32>
    %363 = arith.addf %361, %362 : vector<8x1xf32>
    %364 = math.rsqrt %363 : vector<8x1xf32>
    %365 = vector.broadcast %364 : vector<8x1xf32> to vector<8x32xf32>
    %366 = arith.mulf %356, %365 : vector<8x32xf32>
    %367 = vector.broadcast %348 : vector<1x32xf32> to vector<8x32xf32>
    %368 = arith.mulf %366, %367 : vector<8x32xf32>
    %369 = vector.broadcast %350 : vector<1x32xf32> to vector<8x32xf32>
    %370 = arith.addf %368, %369 : vector<8x32xf32>
    %c1_138 = arith.constant 1 : index
    %c0_139 = arith.constant 0 : index
    %c0_140 = arith.constant 0 : index
    %371 = vector.load %arg11[%c1_138, %c0_139, %c0_140] : memref<2x32x128xbf16, #tpu.memory_space<vmem>>, vector<1x32x128xbf16>
    %372 = vector.shape_cast %371 : vector<1x32x128xbf16> to vector<32x128xbf16>
    %c1_141 = arith.constant 1 : index
    %c0_142 = arith.constant 0 : index
    %c0_143 = arith.constant 0 : index
    %373 = vector.load %arg12[%c1_141, %c0_142, %c0_143] : memref<2x1x128xf32, #tpu.memory_space<vmem>>, vector<1x1x128xf32>
    %374 = vector.shape_cast %373 : vector<1x1x128xf32> to vector<1x128xf32>
    %375 = arith.truncf %370 : vector<8x32xf32> to vector<8x32xbf16>
    %cst_144 = arith.constant dense<0.000000e+00> : vector<8x128xf32>
    %376 = tpu.matmul %375, %372, %cst_144 {dimension_numbers = #tpu.dot_dimension_numbers<[1], [0], [0], [1], [0, 0, 1, 1], [], []>} : vector<8x32xbf16>, vector<32x128xbf16>, vector<8x128xf32> -> vector<8x128xf32>
    %377 = vector.broadcast %374 : vector<1x128xf32> to vector<8x128xf32>
    %378 = arith.addf %376, %377 : vector<8x128xf32>
    %cst_145 = arith.constant 5.000000e-01 : f32
    %379 = vector.broadcast %cst_145 : f32 to vector<8x128xf32>
    %380 = arith.mulf %379, %378 : vector<8x128xf32>
    %cst_146 = arith.constant 0.707106769 : f32
    %381 = vector.broadcast %cst_146 : f32 to vector<8x128xf32>
    %382 = arith.mulf %378, %381 : vector<8x128xf32>
    %383 = math.erf %382 : vector<8x128xf32>
    %cst_147 = arith.constant 1.000000e+00 : f32
    %384 = vector.broadcast %cst_147 : f32 to vector<8x128xf32>
    %385 = arith.addf %384, %383 : vector<8x128xf32>
    %386 = arith.mulf %380, %385 : vector<8x128xf32>
    %c1_148 = arith.constant 1 : index
    %c0_149 = arith.constant 0 : index
    %c0_150 = arith.constant 0 : index
    %387 = vector.load %arg13[%c1_148, %c0_149, %c0_150] : memref<2x128x32xbf16, #tpu.memory_space<vmem>>, vector<1x128x32xbf16>
    %388 = vector.shape_cast %387 : vector<1x128x32xbf16> to vector<128x32xbf16>
    %c1_151 = arith.constant 1 : index
    %c0_152 = arith.constant 0 : index
    %c0_153 = arith.constant 0 : index
    %389 = vector.load %arg14[%c1_151, %c0_152, %c0_153] : memref<2x1x32xf32, #tpu.memory_space<vmem>>, vector<1x1x32xf32>
    %390 = vector.shape_cast %389 : vector<1x1x32xf32> to vector<1x32xf32>
    %391 = arith.truncf %386 : vector<8x128xf32> to vector<8x128xbf16>
    %cst_154 = arith.constant dense<0.000000e+00> : vector<8x32xf32>
    %392 = tpu.matmul %391, %388, %cst_154 {dimension_numbers = #tpu.dot_dimension_numbers<[1], [0], [0], [1], [0, 0, 1, 1], [], []>} : vector<8x128xbf16>, vector<128x32xbf16>, vector<8x32xf32> -> vector<8x32xf32>
    %393 = vector.broadcast %390 : vector<1x32xf32> to vector<8x32xf32>
    %394 = arith.addf %392, %393 : vector<8x32xf32>
    %395 = arith.addf %370, %394 : vector<8x32xf32>
    %c1_155 = arith.constant 1 : index
    %c0_156 = arith.constant 0 : index
    %c0_157 = arith.constant 0 : index
    %396 = vector.load %arg15[%c1_155, %c0_156, %c0_157] : memref<2x1x32xf32, #tpu.memory_space<vmem>>, vector<1x1x32xf32>
    %397 = vector.shape_cast %396 : vector<1x1x32xf32> to vector<1x32xf32>
    %c1_158 = arith.constant 1 : index
    %c0_159 = arith.constant 0 : index
    %c0_160 = arith.constant 0 : index
    %398 = vector.load %arg16[%c1_158, %c0_159, %c0_160] : memref<2x1x32xf32, #tpu.memory_space<vmem>>, vector<1x1x32xf32>
    %399 = vector.shape_cast %398 : vector<1x1x32xf32> to vector<1x32xf32>
    %cst_161 = arith.constant dense<0.000000e+00> : vector<8xf32>
    %400 = vector.multi_reduction <add>, %395, %cst_161 [1] : vector<8x32xf32> to vector<8xf32>
    %401 = vector.shape_cast %400 : vector<8xf32> to vector<8x1xf32>
    %cst_162 = arith.constant 3.200000e+01 : f32
    %402 = vector.broadcast %cst_162 : f32 to vector<8x1xf32>
    %403 = arith.divf %401, %402 : vector<8x1xf32>
    %404 = vector.broadcast %403 : vector<8x1xf32> to vector<8x32xf32>
    %405 = arith.subf %395, %404 : vector<8x32xf32>
    %406 = arith.mulf %405, %405 : vector<8x32xf32>
    %cst_163 = arith.constant dense<0.000000e+00> : vector<8xf32>
    %407 = vector.multi_reduction <add>, %406, %cst_163 [1] : vector<8x32xf32> to vector<8xf32>
    %408 = vector.shape_cast %407 : vector<8xf32> to vector<8x1xf32>
    %cst_164 = arith.constant 3.200000e+01 : f32
    %409 = vector.broadcast %cst_164 : f32 to vector<8x1xf32>
    %410 = arith.divf %408, %409 : vector<8x1xf32>
    %cst_165 = arith.constant 9.99999996E-13 : f32
    %411 = vector.broadcast %cst_165 : f32 to vector<8x1xf32>
    %412 = arith.addf %410, %411 : vector<8x1xf32>
    %413 = math.rsqrt %412 : vector<8x1xf32>
    %414 = vector.broadcast %413 : vector<8x1xf32> to vector<8x32xf32>
    %415 = arith.mulf %405, %414 : vector<8x32xf32>
    %416 = vector.broadcast %397 : vector<1x32xf32> to vector<8x32xf32>
    %417 = arith.mulf %415, %416 : vector<8x32xf32>
    %418 = vector.broadcast %399 : vector<1x32xf32> to vector<8x32xf32>
    %419 = arith.addf %417, %418 : vector<8x32xf32>
    %420 = vector.extract_strided_slice %419 {offsets = [0, 0], sizes = [1, 32], strides = [1, 1]} : vector<8x32xf32> to vector<1x32xf32>
    %c0_166 = arith.constant 0 : index
    %c0_167 = arith.constant 0 : index
    %c0_168 = arith.constant 0 : index
    %421 = vector.load %arg17[%c0_166, %c0_167, %c0_168] : memref<1x1x32xf32, #tpu.memory_space<vmem>>, vector<1x1x32xf32>
    %422 = vector.shape_cast %421 : vector<1x1x32xf32> to vector<1x32xf32>
    %423 = vector.shape_cast %420 : vector<1x32xf32> to vector<1x1x32xf32>
    tpu.vector_store %arg17[%c0_166, %c0_167, %c0_168], %423 {strides = array<i32>} : memref<1x1x32xf32, #tpu.memory_space<vmem>>, vector<1x1x32xf32>,
    return
  }
  func.func @transform_0(%arg0: i32) -> (i32, i32, i32) {
    %c0_i32 = arith.constant 0 : i32
    %c0_i32_0 = arith.constant 0 : i32
    %c0_i32_1 = arith.constant 0 : i32
    return %arg0, %c0_i32, %c0_i32_0 : i32, i32, i32
  }
  func.func @transform_1(%arg0: i32) -> (i32, i32, i32) {
    %c0_i32 = arith.constant 0 : i32
    %c0_i32_0 = arith.constant 0 : i32
    %c0_i32_1 = arith.constant 0 : i32
    return %arg0, %c0_i32, %c0_i32_0 : i32, i32, i32
  }
  func.func @transform_2(%arg0: i32) -> (i32, i32) {
    %c0_i32 = arith.constant 0 : i32
    %c0_i32_0 = arith.constant 0 : i32
    %c0_i32_1 = arith.constant 0 : i32
    return %c0_i32, %c0_i32_0 : i32, i32
  }
  func.func @transform_3(%arg0: i32) -> (i32, i32) {
    %c0_i32 = arith.constant 0 : i32
    %c0_i32_0 = arith.constant 0 : i32
    %c0_i32_1 = arith.constant 0 : i32
    return %c0_i32, %c0_i32_0 : i32, i32
  }
  func.func @transform_4(%arg0: i32) -> (i32, i32, i32) {
    %c0_i32 = arith.constant 0 : i32
    %c0_i32_0 = arith.constant 0 : i32
    %c0_i32_1 = arith.constant 0 : i32
    %c0_i32_2 = arith.constant 0 : i32
    return %c0_i32, %c0_i32_0, %c0_i32_1 : i32, i32, i32
  }
  func.func @transform_5(%arg0: i32) -> (i32, i32, i32) {
    %c0_i32 = arith.constant 0 : i32
    %c0_i32_0 = arith.constant 0 : i32
    %c0_i32_1 = arith.constant 0 : i32
    %c0_i32_2 = arith.constant 0 : i32
    return %c0_i32, %c0_i32_0, %c0_i32_1 : i32, i32, i32
  }
  func.func @transform_6(%arg0: i32) -> (i32, i32, i32) {
    %c0_i32 = arith.constant 0 : i32
    %c0_i32_0 = arith.constant 0 : i32
    %c0_i32_1 = arith.constant 0 : i32
    %c0_i32_2 = arith.constant 0 : i32
    return %c0_i32, %c0_i32_0, %c0_i32_1 : i32, i32, i32
  }
  func.func @transform_7(%arg0: i32) -> (i32, i32, i32) {
    %c0_i32 = arith.constant 0 : i32
    %c0_i32_0 = arith.constant 0 : i32
    %c0_i32_1 = arith.constant 0 : i32
    %c0_i32_2 = arith.constant 0 : i32
    return %c0_i32, %c0_i32_0, %c0_i32_1 : i32, i32, i32
  }
  func.func @transform_8(%arg0: i32) -> (i32, i32, i32) {
    %c0_i32 = arith.constant 0 : i32
    %c0_i32_0 = arith.constant 0 : i32
    %c0_i32_1 = arith.constant 0 : i32
    %c0_i32_2 = arith.constant 0 : i32
    return %c0_i32, %c0_i32_0, %c0_i32_1 : i32, i32, i32
  }
  func.func @transform_9(%arg0: i32) -> (i32, i32, i32) {
    %c0_i32 = arith.constant 0 : i32
    %c0_i32_0 = arith.constant 0 : i32
    %c0_i32_1 = arith.constant 0 : i32
    %c0_i32_2 = arith.constant 0 : i32
    return %c0_i32, %c0_i32_0, %c0_i32_1 : i32, i32, i32
  }
  func.func @transform_10(%arg0: i32) -> (i32, i32, i32) {
    %c0_i32 = arith.constant 0 : i32
    %c0_i32_0 = arith.constant 0 : i32
    %c0_i32_1 = arith.constant 0 : i32
    %c0_i32_2 = arith.constant 0 : i32
    return %c0_i32, %c0_i32_0, %c0_i32_1 : i32, i32, i32
  }
  func.func @transform_11(%arg0: i32) -> (i32, i32, i32) {
    %c0_i32 = arith.constant 0 : i32
    %c0_i32_0 = arith.constant 0 : i32
    %c0_i32_1 = arith.constant 0 : i32
    %c0_i32_2 = arith.constant 0 : i32
    return %c0_i32, %c0_i32_0, %c0_i32_1 : i32, i32, i32
  }
  func.func @transform_12(%arg0: i32) -> (i32, i32, i32) {
    %c0_i32 = arith.constant 0 : i32
    %c0_i32_0 = arith.constant 0 : i32
    %c0_i32_1 = arith.constant 0 : i32
    %c0_i32_2 = arith.constant 0 : i32
    return %c0_i32, %c0_i32_0, %c0_i32_1 : i32, i32, i32
  }
  func.func @transform_13(%arg0: i32) -> (i32, i32, i32) {
    %c0_i32 = arith.constant 0 : i32
    %c0_i32_0 = arith.constant 0 : i32
    %c0_i32_1 = arith.constant 0 : i32
    %c0_i32_2 = arith.constant 0 : i32
    return %c0_i32, %c0_i32_0, %c0_i32_1 : i32, i32, i32
  }
  func.func @transform_14(%arg0: i32) -> (i32, i32, i32) {
    %c0_i32 = arith.constant 0 : i32
    %c0_i32_0 = arith.constant 0 : i32
    %c0_i32_1 = arith.constant 0 : i32
    %c0_i32_2 = arith.constant 0 : i32
    return %c0_i32, %c0_i32_0, %c0_i32_1 : i32, i32, i32
  }
  func.func @transform_15(%arg0: i32) -> (i32, i32, i32) {
    %c0_i32 = arith.constant 0 : i32
    %c0_i32_0 = arith.constant 0 : i32
    %c0_i32_1 = arith.constant 0 : i32
    %c0_i32_2 = arith.constant 0 : i32
    return %c0_i32, %c0_i32_0, %c0_i32_1 : i32, i32, i32
  }
  func.func @transform_16(%arg0: i32) -> (i32, i32, i32) {
    %c0_i32 = arith.constant 0 : i32
    %c0_i32_0 = arith.constant 0 : i32
    %c0_i32_1 = arith.constant 0 : i32
    return %arg0, %c0_i32, %c0_i32_0 : i32, i32, i32
  }
}

</mosaic_0001>

<llo_original>
// kernel: tpu_custom_call.1
$region0: #{tpu_custom_call.1}
  #allocation0 [shape = 'u32[]', space=smem, size = 0x4, offset = 0x4, fixed_abs, tag = 'smem constant byte address 0x4 - core index']
  #allocation1 [shape = 'u32[144,128]{1,0:T(1,128)}', space=vmem, size = 0x12000, scoped, tag = 'internal scratch']
  %s0 = inlined_call_operand.vmem [shape: f32[2,8,32], index: 0, kind: input, shape index: {}]
  %s1 = inlined_call_operand.vmem [shape: f32[2,1,8], index: 1, kind: input, shape index: {}]
  %s2 = inlined_call_operand.vmem [shape: f32[1,32], index: 2, kind: input, shape index: {}]
  %s3 = inlined_call_operand.vmem [shape: f32[1,32], index: 3, kind: input, shape index: {}]
  %s4 = inlined_call_operand.vmem [shape: bf16[2,32,96], index: 4, kind: input, shape index: {}]
  %s5 = inlined_call_operand.vmem [shape: f32[2,1,96], index: 5, kind: input, shape index: {}]
  %s6 = inlined_call_operand.vmem [shape: bf16[2,32,32], index: 6, kind: input, shape index: {}]
  %s7 = inlined_call_operand.vmem [shape: f32[2,1,32], index: 7, kind: input, shape index: {}]
  %s8 = inlined_call_operand.vmem [shape: f32[2,1,32], index: 8, kind: input, shape index: {}]
  %s9 = inlined_call_operand.vmem [shape: f32[2,1,32], index: 9, kind: input, shape index: {}]
  %s10 = inlined_call_operand.vmem [shape: bf16[2,32,128], index: 10, kind: input, shape index: {}]
  %s11 = inlined_call_operand.vmem [shape: f32[2,1,128], index: 11, kind: input, shape index: {}]
  %s12 = inlined_call_operand.vmem [shape: bf16[2,128,32], index: 12, kind: input, shape index: {}]
  %s13 = inlined_call_operand.vmem [shape: f32[2,1,32], index: 13, kind: input, shape index: {}]
  %s14 = inlined_call_operand.vmem [shape: f32[2,1,32], index: 14, kind: input, shape index: {}]
  %s15 = inlined_call_operand.vmem [shape: f32[2,1,32], index: 15, kind: input, shape index: {}]
  %s16 = inlined_call_operand.hbm [shape: f32[2,1,32], index: 16, kind: output, shape index: {}]
  %s17 = sld [smem:[#allocation0]]
  $region97: #{tpu_custom_call.1} parent=0
    _
  %s19 = ssub.s32 1, %s17
  %s20 = scalar_select 0, %s19, %s17
  $region1: #{tpu_custom_call.1} parent=0
    #allocation2 [shape = 'u8[1024]{0}', space=vmem, size = 0x400, scoped, tag = 'output window, operand 0']
    #allocation3 [shape = 's32[2]{0}', space=sflag, size = 0x8, scoped, tag = 'scoped memory for tpu_custom_call.1']
    %21 = vsyncpa [#allocation3], 0
    %s22 = scalar_lea.sflag [#allocation3], 1
    %23 = vsyncpa %s22, 0
    loop: start=0, step=1, limit=4
    $region2: #{tpu_custom_call.1} parent=1 // loop_pre_header
      _
    $region3: #{tpu_custom_call.1} parent=1 // loop_header
      %s25 = sphi 0, %s29
      %p26 = scmp.ge.s32.totalorder %s25, 4
      %s35 = sphi 0, %s37
      %s38 = sphi 0, %s35
      %s39 = sphi 0, %s38
      %s55 = sphi 0, %s39
      %s61 = sphi 0, %s63
      %s64 = sphi 0, %s61
      %s65 = sphi 0, %s64
      %s81 = sphi 0, %s65
      %s85 = sphi 0, %s85
      %s87 = sphi 0, %s85
      %s88 = sphi 0, %s87
      %s102 = sphi 0, %s88
      %s106 = sphi 0, %s106
      %s108 = sphi 0, %s106
      %s109 = sphi 0, %s108
      %s123 = sphi 0, %s109
      %s127 = sphi 0, %s127
      %s129 = sphi 0, %s127
      %s130 = sphi 0, %s129
      %s144 = sphi 0, %s130
      %s148 = sphi 0, %s148
      %s150 = sphi 0, %s148
      %s151 = sphi 0, %s150
      %s165 = sphi 0, %s151
      %s169 = sphi 0, %s169
      %s171 = sphi 0, %s169
      %s172 = sphi 0, %s171
      %s186 = sphi 0, %s172
      %s190 = sphi 0, %s190
      %s192 = sphi 0, %s190
      %s193 = sphi 0, %s192
      %s207 = sphi 0, %s193
      %s211 = sphi 0, %s211
      %s213 = sphi 0, %s211
      %s214 = sphi 0, %s213
      %s228 = sphi 0, %s214
      %s232 = sphi 0, %s232
      %s234 = sphi 0, %s232
      %s235 = sphi 0, %s234
      %s249 = sphi 0, %s235
      %s253 = sphi 0, %s253
      %s255 = sphi 0, %s253
      %s256 = sphi 0, %s255
      %s270 = sphi 0, %s256
      %s274 = sphi 0, %s274
      %s276 = sphi 0, %s274
      %s277 = sphi 0, %s276
      %s291 = sphi 0, %s277
      %s295 = sphi 0, %s295
      %s297 = sphi 0, %s295
      %s298 = sphi 0, %s297
      %s312 = sphi 0, %s298
      %s316 = sphi 0, %s316
      %s318 = sphi 0, %s316
      %s319 = sphi 0, %s318
      %s333 = sphi 0, %s319
      %s337 = sphi 0, %s337
      %s339 = sphi 0, %s337
      %s340 = sphi 0, %s339
      %s354 = sphi 0, %s340
      %s358 = sphi 0, %s358
      %s360 = sphi 0, %s358
      %s361 = sphi 0, %s360
      %s375 = sphi 0, %s361
      %s381 = sphi 0, %s383
      %s384 = sphi 0, %s381
      %s385 = sphi 0, %s384
      %s401 = sphi 0, %s385
    $region4: #{tpu_custom_call.1} parent=1 // loop_header_branch
      %28 = sbr.rel (%p26) target = $region8
    $region5: #{tpu_custom_call.1} parent=1 // loop_body
      %s30 = ssub.s32 %s25, 1
      %s31 = ssub.s32 %s25, 2
      %s32 = sadd.s32 %s25, 1
      %s33 = ssub.s32 %s25, %s32
      %p34 = scmp.eq.s32.totalorder %s33, 0
      %s36 = sadd.s32 %s35, 1
      %s37 = scalar_select %p34, %s35, %s36
      %p40 = pneg %p34
      %p41 = scmp.eq.s32.totalorder %s25, 1
      %p42 = por %p40, %p41
      %p43 = scmp.ne.s32.totalorder %s35, %s38
      %p44 = scmp.eq.s32.totalorder %s25, 0
      %p45 = por %p43, %p44
      %p46 = scmp.ne.s32.totalorder %s35, %s38
      %p47 = scmp.eq.s32.totalorder %s30, 1
      %p48 = por %p46, %p47
      %p49 = scmp.ne.s32.totalorder %s38, %s39
      %p50 = scmp.eq.s32.totalorder %s30, 0
      %p51 = por %p49, %p50
      %p52 = scmp.ne.s32.totalorder %s38, %s39
      %p53 = scmp.eq.s32.totalorder %s31, 1
      %p54 = por %p52, %p53
      %p56 = scmp.ne.s32.totalorder %s39, %s55
      %p57 = scmp.eq.s32.totalorder %s31, 0
      %p58 = por %p56, %p57
      %s59 = ssub.s32 %s25, %s32
      %p60 = scmp.eq.s32.totalorder %s59, 0
      %s62 = sadd.s32 %s61, 1
      %s63 = scalar_select %p60, %s61, %s62
      %p66 = pneg %p60
      %p67 = scmp.eq.s32.totalorder %s25, 1
      %p68 = por %p66, %p67
      %p69 = scmp.ne.s32.totalorder %s61, %s64
      %p70 = scmp.eq.s32.totalorder %s25, 0
      %p71 = por %p69, %p70
      %p72 = scmp.ne.s32.totalorder %s61, %s64
      %p73 = scmp.eq.s32.totalorder %s30, 1
      %p74 = por %p72, %p73
      %p75 = scmp.ne.s32.totalorder %s64, %s65
      %p76 = scmp.eq.s32.totalorder %s30, 0
      %p77 = por %p75, %p76
      %p78 = scmp.ne.s32.totalorder %s64, %s65
      %p79 = scmp.eq.s32.totalorder %s31, 1
      %p80 = por %p78, %p79
      %p82 = scmp.ne.s32.totalorder %s65, %s81
      %p83 = scmp.eq.s32.totalorder %s31, 0
      %p84 = por %p82, %p83
      %s86 = sadd.s32 %s85, 1
      %p89 = scmp.eq.s32.totalorder %s25, 1
      %p90 = scmp.ne.s32.totalorder %s85, %s87
      %p91 = scmp.eq.s32.totalorder %s25, 0
      %p92 = por %p90, %p91
      %p93 = scmp.ne.s32.totalorder %s85, %s87
      %p94 = scmp.eq.s32.totalorder %s30, 1
      %p95 = por %p93, %p94
      %p96 = scmp.ne.s32.totalorder %s87, %s88
      %p97 = scmp.eq.s32.totalorder %s30, 0
      %p98 = por %p96, %p97
      %p99 = scmp.ne.s32.totalorder %s87, %s88
      %p100 = scmp.eq.s32.totalorder %s31, 1
      %p101 = por %p99, %p100
      %p103 = scmp.ne.s32.totalorder %s88, %s102
      %p104 = scmp.eq.s32.totalorder %s31, 0
      %p105 = por %p103, %p104
      %s107 = sadd.s32 %s106, 1
      %p110 = scmp.eq.s32.totalorder %s25, 1
      %p111 = scmp.ne.s32.totalorder %s106, %s108
      %p112 = scmp.eq.s32.totalorder %s25, 0
      %p113 = por %p111, %p112
      %p114 = scmp.ne.s32.totalorder %s106, %s108
      %p115 = scmp.eq.s32.totalorder %s30, 1
      %p116 = por %p114, %p115
      %p117 = scmp.ne.s32.totalorder %s108, %s109
      %p118 = scmp.eq.s32.totalorder %s30, 0
      %p119 = por %p117, %p118
      %p120 = scmp.ne.s32.totalorder %s108, %s109
      %p121 = scmp.eq.s32.totalorder %s31, 1
      %p122 = por %p120, %p121
      %p124 = scmp.ne.s32.totalorder %s109, %s123
      %p125 = scmp.eq.s32.totalorder %s31, 0
      %p126 = por %p124, %p125
      %s128 = sadd.s32 %s127, 1
      %p131 = scmp.eq.s32.totalorder %s25, 1
      %p132 = scmp.ne.s32.totalorder %s127, %s129
      %p133 = scmp.eq.s32.totalorder %s25, 0
      %p134 = por %p132, %p133
      %p135 = scmp.ne.s32.totalorder %s127, %s129
      %p136 = scmp.eq.s32.totalorder %s30, 1
      %p137 = por %p135, %p136
      %p138 = scmp.ne.s32.totalorder %s129, %s130
      %p139 = scmp.eq.s32.totalorder %s30, 0
      %p140 = por %p138, %p139
      %p141 = scmp.ne.s32.totalorder %s129, %s130
      %p142 = scmp.eq.s32.totalorder %s31, 1
      %p143 = por %p141, %p142
      %p145 = scmp.ne.s32.totalorder %s130, %s144
      %p146 = scmp.eq.s32.totalorder %s31, 0
      %p147 = por %p145, %p146
      %s149 = sadd.s32 %s148, 1
      %p152 = scmp.eq.s32.totalorder %s25, 1
      %p153 = scmp.ne.s32.totalorder %s148, %s150
      %p154 = scmp.eq.s32.totalorder %s25, 0
      %p155 = por %p153, %p154
      %p156 = scmp.ne.s32.totalorder %s148, %s150
      %p157 = scmp.eq.s32.totalorder %s30, 1
      %p158 = por %p156, %p157
      %p159 = scmp.ne.s32.totalorder %s150, %s151
      %p160 = scmp.eq.s32.totalorder %s30, 0
      %p161 = por %p159, %p160
      %p162 = scmp.ne.s32.totalorder %s150, %s151
      %p163 = scmp.eq.s32.totalorder %s31, 1
      %p164 = por %p162, %p163
      %p166 = scmp.ne.s32.totalorder %s151, %s165
      %p167 = scmp.eq.s32.totalorder %s31, 0
      %p168 = por %p166, %p167
      %s170 = sadd.s32 %s169, 1
      %p173 = scmp.eq.s32.totalorder %s25, 1
      %p174 = scmp.ne.s32.totalorder %s169, %s171
      %p175 = scmp.eq.s32.totalorder %s25, 0
      %p176 = por %p174, %p175
      %p177 = scmp.ne.s32.totalorder %s169, %s171
      %p178 = scmp.eq.s32.totalorder %s30, 1
      %p179 = por %p177, %p178
      %p180 = scmp.ne.s32.totalorder %s171, %s172
      %p181 = scmp.eq.s32.totalorder %s30, 0
      %p182 = por %p180, %p181
      %p183 = scmp.ne.s32.totalorder %s171, %s172
      %p184 = scmp.eq.s32.totalorder %s31, 1
      %p185 = por %p183, %p184
      %p187 = scmp.ne.s32.totalorder %s172, %s186
      %p188 = scmp.eq.s32.totalorder %s31, 0
      %p189 = por %p187, %p188
      %s191 = sadd.s32 %s190, 1
      %p194 = scmp.eq.s32.totalorder %s25, 1
      %p195 = scmp.ne.s32.totalorder %s190, %s192
      %p196 = scmp.eq.s32.totalorder %s25, 0
      %p197 = por %p195, %p196
      %p198 = scmp.ne.s32.totalorder %s190, %s192
      %p199 = scmp.eq.s32.totalorder %s30, 1
      %p200 = por %p198, %p199
      %p201 = scmp.ne.s32.totalorder %s192, %s193
      %p202 = scmp.eq.s32.totalorder %s30, 0
      %p203 = por %p201, %p202
      %p204 = scmp.ne.s32.totalorder %s192, %s193
      %p205 = scmp.eq.s32.totalorder %s31, 1
      %p206 = por %p204, %p205
      %p208 = scmp.ne.s32.totalorder %s193, %s207
      %p209 = scmp.eq.s32.totalorder %s31, 0
      %p210 = por %p208, %p209
      %s212 = sadd.s32 %s211, 1
      %p215 = scmp.eq.s32.totalorder %s25, 1
      %p216 = scmp.ne.s32.totalorder %s211, %s213
      %p217 = scmp.eq.s32.totalorder %s25, 0
      %p218 = por %p216, %p217
      %p219 = scmp.ne.s32.totalorder %s211, %s213
      %p220 = scmp.eq.s32.totalorder %s30, 1
      %p221 = por %p219, %p220
      %p222 = scmp.ne.s32.totalorder %s213, %s214
      %p223 = scmp.eq.s32.totalorder %s30, 0
      %p224 = por %p222, %p223
      %p225 = scmp.ne.s32.totalorder %s213, %s214
      %p226 = scmp.eq.s32.totalorder %s31, 1
      %p227 = por %p225, %p226
      %p229 = scmp.ne.s32.totalorder %s214, %s228
      %p230 = scmp.eq.s32.totalorder %s31, 0
      %p231 = por %p229, %p230
      %s233 = sadd.s32 %s232, 1
      %p236 = scmp.eq.s32.totalorder %s25, 1
      %p237 = scmp.ne.s32.totalorder %s232, %s234
      %p238 = scmp.eq.s32.totalorder %s25, 0
      %p239 = por %p237, %p238
      %p240 = scmp.ne.s32.totalorder %s232, %s234
      %p241 = scmp.eq.s32.totalorder %s30, 1
      %p242 = por %p240, %p241
      %p243 = scmp.ne.s32.totalorder %s234, %s235
      %p244 = scmp.eq.s32.totalorder %s30, 0
      %p245 = por %p243, %p244
      %p246 = scmp.ne.s32.totalorder %s234, %s235
      %p247 = scmp.eq.s32.totalorder %s31, 1
      %p248 = por %p246, %p247
      %p250 = scmp.ne.s32.totalorder %s235, %s249
      %p251 = scmp.eq.s32.totalorder %s31, 0
      %p252 = por %p250, %p251
      %s254 = sadd.s32 %s253, 1
      %p257 = scmp.eq.s32.totalorder %s25, 1
      %p258 = scmp.ne.s32.totalorder %s253, %s255
      %p259 = scmp.eq.s32.totalorder %s25, 0
      %p260 = por %p258, %p259
      %p261 = scmp.ne.s32.totalorder %s253, %s255
      %p262 = scmp.eq.s32.totalorder %s30, 1
      %p263 = por %p261, %p262
      %p264 = scmp.ne.s32.totalorder %s255, %s256
      %p265 = scmp.eq.s32.totalorder %s30, 0
      %p266 = por %p264, %p265
      %p267 = scmp.ne.s32.totalorder %s255, %s256
      %p268 = scmp.eq.s32.totalorder %s31, 1
      %p269 = por %p267, %p268
      %p271 = scmp.ne.s32.totalorder %s256, %s270
      %p272 = scmp.eq.s32.totalorder %s31, 0
      %p273 = por %p271, %p272
      %s275 = sadd.s32 %s274, 1
      %p278 = scmp.eq.s32.totalorder %s25, 1
      %p279 = scmp.ne.s32.totalorder %s274, %s276
      %p280 = scmp.eq.s32.totalorder %s25, 0
      %p281 = por %p279, %p280
      %p282 = scmp.ne.s32.totalorder %s274, %s276
      %p283 = scmp.eq.s32.totalorder %s30, 1
      %p284 = por %p282, %p283
      %p285 = scmp.ne.s32.totalorder %s276, %s277
      %p286 = scmp.eq.s32.totalorder %s30, 0
      %p287 = por %p285, %p286
      %p288 = scmp.ne.s32.totalorder %s276, %s277
      %p289 = scmp.eq.s32.totalorder %s31, 1
      %p290 = por %p288, %p289
      %p292 = scmp.ne.s32.totalorder %s277, %s291
      %p293 = scmp.eq.s32.totalorder %s31, 0
      %p294 = por %p292, %p293
      %s296 = sadd.s32 %s295, 1
      %p299 = scmp.eq.s32.totalorder %s25, 1
      %p300 = scmp.ne.s32.totalorder %s295, %s297
      %p301 = scmp.eq.s32.totalorder %s25, 0
      %p302 = por %p300, %p301
      %p303 = scmp.ne.s32.totalorder %s295, %s297
      %p304 = scmp.eq.s32.totalorder %s30, 1
      %p305 = por %p303, %p304
      %p306 = scmp.ne.s32.totalorder %s297, %s298
      %p307 = scmp.eq.s32.totalorder %s30, 0
      %p308 = por %p306, %p307
      %p309 = scmp.ne.s32.totalorder %s297, %s298
      %p310 = scmp.eq.s32.totalorder %s31, 1
      %p311 = por %p309, %p310
      %p313 = scmp.ne.s32.totalorder %s298, %s312
      %p314 = scmp.eq.s32.totalorder %s31, 0
      %p315 = por %p313, %p314
      %s317 = sadd.s32 %s316, 1
      %p320 = scmp.eq.s32.totalorder %s25, 1
      %p321 = scmp.ne.s32.totalorder %s316, %s318
      %p322 = scmp.eq.s32.totalorder %s25, 0
      %p323 = por %p321, %p322
      %p324 = scmp.ne.s32.totalorder %s316, %s318
      %p325 = scmp.eq.s32.totalorder %s30, 1
      %p326 = por %p324, %p325
      %p327 = scmp.ne.s32.totalorder %s318, %s319
      %p328 = scmp.eq.s32.totalorder %s30, 0
      %p329 = por %p327, %p328
      %p330 = scmp.ne.s32.totalorder %s318, %s319
      %p331 = scmp.eq.s32.totalorder %s31, 1
      %p332 = por %p330, %p331
      %p334 = scmp.ne.s32.totalorder %s319, %s333
      %p335 = scmp.eq.s32.totalorder %s31, 0
      %p336 = por %p334, %p335
      %s338 = sadd.s32 %s337, 1
      %p341 = scmp.eq.s32.totalorder %s25, 1
      %p342 = scmp.ne.s32.totalorder %s337, %s339
      %p343 = scmp.eq.s32.totalorder %s25, 0
      %p344 = por %p342, %p343
      %p345 = scmp.ne.s32.totalorder %s337, %s339
      %p346 = scmp.eq.s32.totalorder %s30, 1
      %p347 = por %p345, %p346
      %p348 = scmp.ne.s32.totalorder %s339, %s340
      %p349 = scmp.eq.s32.totalorder %s30, 0
      %p350 = por %p348, %p349
      %p351 = scmp.ne.s32.totalorder %s339, %s340
      %p352 = scmp.eq.s32.totalorder %s31, 1
      %p353 = por %p351, %p352
      %p355 = scmp.ne.s32.totalorder %s340, %s354
      %p356 = scmp.eq.s32.totalorder %s31, 0
      %p357 = por %p355, %p356
      %s359 = sadd.s32 %s358, 1
      %p362 = scmp.eq.s32.totalorder %s25, 1
      %p363 = scmp.ne.s32.totalorder %s358, %s360
      %p364 = scmp.eq.s32.totalorder %s25, 0
      %p365 = por %p363, %p364
      %p366 = scmp.ne.s32.totalorder %s358, %s360
      %p367 = scmp.eq.s32.totalorder %s30, 1
      %p368 = por %p366, %p367
      %p369 = scmp.ne.s32.totalorder %s360, %s361
      %p370 = scmp.eq.s32.totalorder %s30, 0
      %p371 = por %p369, %p370
      %p372 = scmp.ne.s32.totalorder %s360, %s361
      %p373 = scmp.eq.s32.totalorder %s31, 1
      %p374 = por %p372, %p373
      %p376 = scmp.ne.s32.totalorder %s361, %s375
      %p377 = scmp.eq.s32.totalorder %s31, 0
      %p378 = por %p376, %p377
      %s379 = ssub.s32 %s25, %s32
      %p380 = scmp.eq.s32.totalorder %s379, 0
      %s382 = sadd.s32 %s381, 1
      %s383 = scalar_select %p380, %s381, %s382
      %p386 = pneg %p380
      %p387 = scmp.eq.s32.totalorder %s25, 1
      %p388 = por %p386, %p387
      %p389 = scmp.ne.s32.totalorder %s381, %s384
      %p390 = scmp.eq.s32.totalorder %s25, 0
      %p391 = por %p389, %p390
      %p392 = scmp.ne.s32.totalorder %s381, %s384
      %p393 = scmp.eq.s32.totalorder %s30, 1
      %p394 = por %p392, %p393
      %p395 = scmp.ne.s32.totalorder %s384, %s385
      %p396 = scmp.eq.s32.totalorder %s30, 0
      %p397 = por %p395, %p396
      %p398 = scmp.ne.s32.totalorder %s384, %s385
      %p399 = scmp.eq.s32.totalorder %s31, 1
      %p400 = por %p398, %p399
      %p402 = scmp.ne.s32.totalorder %s385, %s401
      %p403 = scmp.eq.s32.totalorder %s31, 0
      %p404 = por %p402, %p403
      %p405 = scmp.le.s32.totalorder 1, %s25
      %p406 = scmp.lt.s32.totalorder %s25, 3
      %p407 = pnand %p405, %p406
      %p408 = pneg %p407
      // Predicated region
      $region9: #{tpu_custom_call.1} parent=5 // pred_check
        _
      $region10: #{tpu_custom_call.1} parent=5 // pred_check_branch
        %410 = sbr.rel (%p407) target = $region12
      $region11: #{tpu_custom_call.1} parent=5 // pred_region
        %s411 = ssub.s32 %s25, 1
        // Predicated region
        $region13: #{tpu_custom_call.1} parent=11 // pred_check
          %p412 = pneg %p98
        $region14: #{tpu_custom_call.1} parent=11 // pred_check_branch
          %414 = sbr.rel (%p412) target = $region16
        $region15: #{tpu_custom_call.1} parent=11 // pred_region
          _
        $region16: #{tpu_custom_call.1} parent=11 // pred_fallthru
          _
        // Predicated region
        $region17: #{tpu_custom_call.1} parent=11 // pred_check
          %p415 = pneg %p119
        $region18: #{tpu_custom_call.1} parent=11 // pred_check_branch
          %417 = sbr.rel (%p415) target = $region20
        $region19: #{tpu_custom_call.1} parent=11 // pred_region
          _
        $region20: #{tpu_custom_call.1} parent=11 // pred_fallthru
          _
        // Predicated region
        $region21: #{tpu_custom_call.1} parent=11 // pred_check
          %p418 = pneg %p140
        $region22: #{tpu_custom_call.1} parent=11 // pred_check_branch
          %420 = sbr.rel (%p418) target = $region24
        $region23: #{tpu_custom_call.1} parent=11 // pred_region
          _
        $region24: #{tpu_custom_call.1} parent=11 // pred_fallthru
          _
        // Predicated region
        $region25: #{tpu_custom_call.1} parent=11 // pred_check
          %p421 = pneg %p161
        $region26: #{tpu_custom_call.1} parent=11 // pred_check_branch
          %423 = sbr.rel (%p421) target = $region28
        $region27: #{tpu_custom_call.1} parent=11 // pred_region
          _
        $region28: #{tpu_custom_call.1} parent=11 // pred_fallthru
          _
        // Predicated region
        $region29: #{tpu_custom_call.1} parent=11 // pred_check
          %p424 = pneg %p182
        $region30: #{tpu_custom_call.1} parent=11 // pred_check_branch
          %426 = sbr.rel (%p424) target = $region32
        $region31: #{tpu_custom_call.1} parent=11 // pred_region
          _
        $region32: #{tpu_custom_call.1} parent=11 // pred_fallthru
          _
        // Predicated region
        $region33: #{tpu_custom_call.1} parent=11 // pred_check
          %p427 = pneg %p203
        $region34: #{tpu_custom_call.1} parent=11 // pred_check_branch
          %429 = sbr.rel (%p427) target = $region36
        $region35: #{tpu_custom_call.1} parent=11 // pred_region
          _
        $region36: #{tpu_custom_call.1} parent=11 // pred_fallthru
          _
        // Predicated region
        $region37: #{tpu_custom_call.1} parent=11 // pred_check
          %p430 = pneg %p224
        $region38: #{tpu_custom_call.1} parent=11 // pred_check_branch
          %432 = sbr.rel (%p430) target = $region40
        $region39: #{tpu_custom_call.1} parent=11 // pred_region
          _
        $region40: #{tpu_custom_call.1} parent=11 // pred_fallthru
          _
        // Predicated region
        $region41: #{tpu_custom_call.1} parent=11 // pred_check
          %p433 = pneg %p245
        $region42: #{tpu_custom_call.1} parent=11 // pred_check_branch
          %435 = sbr.rel (%p433) target = $region44
        $region43: #{tpu_custom_call.1} parent=11 // pred_region
          _
        $region44: #{tpu_custom_call.1} parent=11 // pred_fallthru
          _
        // Predicated region
        $region45: #{tpu_custom_call.1} parent=11 // pred_check
          %p436 = pneg %p266
        $region46: #{tpu_custom_call.1} parent=11 // pred_check_branch
          %438 = sbr.rel (%p436) target = $region48
        $region47: #{tpu_custom_call.1} parent=11 // pred_region
          _
        $region48: #{tpu_custom_call.1} parent=11 // pred_fallthru
          _
        // Predicated region
        $region49: #{tpu_custom_call.1} parent=11 // pred_check
          %p439 = pneg %p287
        $region50: #{tpu_custom_call.1} parent=11 // pred_check_branch
          %441 = sbr.rel (%p439) target = $region52
        $region51: #{tpu_custom_call.1} parent=11 // pred_region
          _
        $region52: #{tpu_custom_call.1} parent=11 // pred_fallthru
          _
        // Predicated region
        $region53: #{tpu_custom_call.1} parent=11 // pred_check
          %p442 = pneg %p308
        $region54: #{tpu_custom_call.1} parent=11 // pred_check_branch
          %444 = sbr.rel (%p442) target = $region56
        $region55: #{tpu_custom_call.1} parent=11 // pred_region
          _
        $region56: #{tpu_custom_call.1} parent=11 // pred_fallthru
          _
        // Predicated region
        $region57: #{tpu_custom_call.1} parent=11 // pred_check
          %p445 = pneg %p329
        $region58: #{tpu_custom_call.1} parent=11 // pred_check_branch
          %447 = sbr.rel (%p445) target = $region60
        $region59: #{tpu_custom_call.1} parent=11 // pred_region
          _
        $region60: #{tpu_custom_call.1} parent=11 // pred_fallthru
          _
        // Predicated region
        $region61: #{tpu_custom_call.1} parent=11 // pred_check
          %p448 = pneg %p350
        $region62: #{tpu_custom_call.1} parent=11 // pred_check_branch
          %450 = sbr.rel (%p448) target = $region64
        $region63: #{tpu_custom_call.1} parent=11 // pred_region
          _
        $region64: #{tpu_custom_call.1} parent=11 // pred_fallthru
          _
        // Predicated region
        $region65: #{tpu_custom_call.1} parent=11 // pred_check
          %p451 = pneg %p371
        $region66: #{tpu_custom_call.1} parent=11 // pred_check_branch
          %453 = sbr.rel (%p451) target = $region68
        $region67: #{tpu_custom_call.1} parent=11 // pred_region
          _
        $region68: #{tpu_custom_call.1} parent=11 // pred_fallthru
          _
      $region12: #{tpu_custom_call.1} parent=5 // pred_fallthru
        _
      %p454 = scmp.lt.s32.totalorder %s25, 2
      // Predicated region
      $region69: #{tpu_custom_call.1} parent=5 // pred_check
        %p455 = pneg %p454
      $region70: #{tpu_custom_call.1} parent=5 // pred_check_branch
        %457 = sbr.rel (%p455) target = $region72
      $region71: #{tpu_custom_call.1} parent=5 // pred_region
        // Predicated region
        $region73: #{tpu_custom_call.1} parent=71 // pred_check
          %p458 = pneg %p45
        $region74: #{tpu_custom_call.1} parent=71 // pred_check_branch
          %460 = sbr.rel (%p458) target = $region76
        $region75: #{tpu_custom_call.1} parent=71 // pred_region
          %p461 = scmp.lt.s32.totalorder %s25, 1
          %s462 = scalar_select %p461, %s25, 1
          %s463 = smul.addr %s462, 8
          %s464 = scalar_lea.vmem %s0, %s463
        $region76: #{tpu_custom_call.1} parent=71 // pred_fallthru
          _
        // Predicated region
        $region77: #{tpu_custom_call.1} parent=71 // pred_check
          %p465 = pneg %p71
        $region78: #{tpu_custom_call.1} parent=71 // pred_check_branch
          %467 = sbr.rel (%p465) target = $region80
        $region79: #{tpu_custom_call.1} parent=71 // pred_region
          %p468 = scmp.lt.s32.totalorder %s25, 1
          %s469 = scalar_select %p468, %s25, 1
          %s470 = scalar_lea.vmem %s1, %s469
        $region80: #{tpu_custom_call.1} parent=71 // pred_fallthru
          _
      $region72: #{tpu_custom_call.1} parent=5 // pred_fallthru
        _
      %p471 = scmp.le.s32.totalorder 1, %s25
      %p472 = scmp.lt.s32.totalorder %s25, 3
      %p473 = pnand %p471, %p472
      %p474 = pneg %p473
      // Predicated region
      $region81: #{tpu_custom_call.1} parent=5 // pred_check
        _
      $region82: #{tpu_custom_call.1} parent=5 // pred_check_branch
        %476 = sbr.rel (%p473) target = $region84
      $region83: #{tpu_custom_call.1} parent=5 // pred_region
        %s477 = ssub.s32 %s25, 1
        %p478 = scmp.lt.s32.totalorder %s30, 1
        %s479 = scalar_select %p478, %s30, 1
        %s480 = smul.addr %s479, 8
        %s481 = scalar_lea.vmem %s0, %s480
        %p482 = pneg %p51
        %p483 = pneg %p48
        %p484 = scmp.lt.s32.totalorder %s30, 1
        %s485 = scalar_select %p484, %s30, 1
        %s486 = scalar_lea.vmem %s1, %s485
        %p487 = pneg %p77
        %p488 = pneg %p74
        %p489 = pneg %p98
        %p490 = pneg %p95
        %p491 = pneg %p119
        %p492 = pneg %p116
        %p493 = pneg %p140
        %p494 = pneg %p137
        %p495 = pneg %p161
        %p496 = pneg %p158
        %p497 = pneg %p182
        %p498 = pneg %p179
        %p499 = pneg %p203
        %p500 = pneg %p200
        %p501 = pneg %p224
        %p502 = pneg %p221
        %p503 = pneg %p245
        %p504 = pneg %p242
        %p505 = pneg %p266
        %p506 = pneg %p263
        %p507 = pneg %p287
        %p508 = pneg %p284
        %p509 = pneg %p308
        %p510 = pneg %p305
        %p511 = pneg %p329
        %p512 = pneg %p326
        %p513 = pneg %p350
        %p514 = pneg %p347
        %p515 = pneg %p371
        %p516 = pneg %p368
        %p517 = pneg %p397
        %p518 = pneg %p394
        %s519 = sand.u32 %s384, 1
        %s520 = scalar_lea.sflag [#allocation3], %s519
        %s521 = sand.u32 %s384, 1
        %s522 = scalar_lea.vmem [#allocation2], %s521
        %p523 = scmp.lt.s32.totalorder %s30, 1
        %s524 = scalar_select %p523, %s30, 1
        %s525 = smul.addr %s524, 8
        %s526 = scalar_lea.vmem %s0, %s525
        %p527 = scmp.lt.s32.totalorder %s30, 1
        %s528 = scalar_select %p527, %s30, 1
        %s529 = scalar_lea.vmem %s1, %s528
        %v531 = vld [vmem:[%s526] sm:$0xff]
        %v532 = vld [vmem:[%s2] sm:$0x1]
        %v533 = vld [vmem:[%s3] sm:$0x1]
        %vm534 = vcmask 261120
        %v535 = vsel %vm534, %v531, 0.0
        %536 = vadd.xlane.f32.xlu0 %v535
        %v537 = vpop.xlane.xlu0 %536
        %v538 = vrcp.pop 32.0
        %v539 = vmul.f32 %v537, %v538
        %v540 = vsub.f32 %v531, %v539
        %v541 = vmul.f32 %v540, %v540
        %v542 = vsel %vm534, %v541, 0.0
        %543 = vadd.xlane.f32.xlu0 %v542
        %v544 = vpop.xlane.xlu0 %543
        %v545 = vmul.f32 %v544, %v538
        %v546 = vadd.f32 %v545, 1e-12
        %v547 = vrsqrt.pop %v546
        %v548 = vmul.f32 %v540, %v547
        %v550 = vlaneseq
        %v551 = vshrl.u32 %v550, 7
        %v552 = vsub.s32 0, %v551
        %v553 = vrot.slane %v532, %v552
        %v555 = vmul.f32 %v548, %v553
        %v557 = vlaneseq
        %v558 = vshrl.u32 %v557, 7
        %v559 = vsub.s32 0, %v558
        %v560 = vrot.slane %v533, %v559
        %v562 = vadd.f32 %v555, %v560
        %v563 = vld [vmem:[%s529] sm:$0x1]
        %v564 = vld [vmem:[%s4] sm:$0xf]
        %v565 = vld [vmem:[%s4 + $0x4] sm:$0xf]
        %v566 = vld [vmem:[%s4 + $0x8] sm:$0xf]
        %v567 = vld [vmem:[%s4 + $0xc] sm:$0xf]
        %v568 = vld [vmem:[%s5] sm:$0x1]
        %v569 = vpack.c.bf16 %v562, %v562
        %v571 = vlaneseq
        %v572 = vshrl.u32 %v571, 7
        %v573 = vsub.s32 0, %v572
        %v574 = vrot.slane %v568, %v573
        %v580 = vunpack.c.l.b16 %v564
        %v581 = vunpack.c.l.b16 %v565
        %v582 = vunpack.c.l.b16 %v566
        %v583 = vunpack.c.l.b16 %v567
        %v584 = vpack.c.b16 %v581, %v580
        %v585 = vpack.c.b16 %v583, %v582
        %v589 = vsel %vm534, %v569, 0
        %591 = vmatprep.subr.bf16.mxu0 0
        %592 = vmatpush1.bf16.msra.mxu0 %v584
        %593 = vmatprep.subr.bf16.mxu0 0
        %594 = vmatpush1.bf16.msra.mxu0 %v585
        %595 = vmatprep.subr.bf16.mxu0 0
        %596 = vmatpush1.bf16.msra.mxu0 0
        %597 = vmatprep.subr.bf16.mxu0 0
        %598 = vmatpush1.bf16.msra.mxu0 0
        %599 = vmatprep.subr.bf16.mxu0 0
        %600 = vmatpush1.bf16.msra.mxu0 0
        %601 = vmatprep.subr.bf16.mxu0 0
        %602 = vmatpush1.bf16.msra.mxu0 0
        %603 = vmatprep.subr.bf16.mxu0 0
        %604 = vmatpush1.bf16.msra.mxu0 0
        %605 = vmatprep.subr.bf16.mxu0 0
        %606 = vmatpush1.bf16.msra.mxu0 0
        %607 = vmatprep.subr.bf16.mxu0 0
        %608 = vmatpush1.bf16.msra.mxu0 0
        %609 = vmatprep.subr.bf16.mxu0 0
        %610 = vmatpush1.bf16.msra.mxu0 0
        %611 = vmatprep.subr.bf16.mxu0 0
        %612 = vmatpush1.bf16.msra.mxu0 0
        %613 = vmatprep.subr.bf16.mxu0 0
        %614 = vmatpush1.bf16.msra.mxu0 0
        %615 = vmatprep.subr.bf16.mxu0 0
        %616 = vmatpush1.bf16.msra.mxu0 0
        %617 = vmatprep.subr.bf16.mxu0 0
        %618 = vmatpush1.bf16.msra.mxu0 0
        %619 = vmatprep.subr.bf16.mxu0 0
        %620 = vmatpush1.bf16.msra.mxu0 0
        %621 = vmatprep.subr.bf16.mxu0 0
        %622 = vmatpush1.bf16.msra.mxu0 0
        %623 = vmatprep.mubr.bf16.mxu0 0
        %624 = vmatmul.mubr.bf16.gmra.mrb[0].mxu0 %v589
        %v625 = vpop.f32.mrb[0].mxu0
        %v626 = vadd.f32 %v574, %v625
        %v627 = vpop.f32.mrb[0].mxu0
        %v628 = vpop.f32.mrb[0].mxu0
        %v629 = vpop.f32.mrb[0].mxu0
        %630 = vdwg.mxu0
        %v631 = vld [vmem:[%s6] sm:$0xf]
        %v632 = vld [vmem:[%s6 + $0x4] sm:$0xf]
        %v633 = vld [vmem:[%s6 + $0x8] sm:$0xf]
        %v634 = vld [vmem:[%s6 + $0xc] sm:$0xf]
        %v635 = vpack.c.bf16 %v626, %v626
        %637 = vrot.lane.b32.xlu0 %v635, 96
        %v638 = vpop.permute.xlu0 %637
        %vm639 = vcmask 64512
        %v641 = vsel %vm639, %v635, 0
        %v644 = vsel %vm639, %v638, 0
        %646 = vmatprep.subr.bf16.mxu0 0
        %647 = vmatpush1.bf16.xpose.msra.mxu0 %v644
        %648 = vmatprep.subr.bf16.mxu0 0
        %649 = vmatpush1.bf16.xpose.msra.mxu0 0
        %650 = vmatprep.subr.bf16.mxu0 0
        %651 = vmatpush1.bf16.xpose.msra.mxu0 0
        %652 = vmatprep.subr.bf16.mxu0 0
        %653 = vmatpush1.bf16.xpose.msra.mxu0 0
        %654 = vmatprep.subr.bf16.mxu0 0
        %655 = vmatpush1.bf16.xpose.msra.mxu0 0
        %656 = vmatprep.subr.bf16.mxu0 0
        %657 = vmatpush1.bf16.xpose.msra.mxu0 0
        %658 = vmatprep.subr.bf16.mxu0 0
        %659 = vmatpush1.bf16.xpose.msra.mxu0 0
        %660 = vmatprep.subr.bf16.mxu0 0
        %661 = vmatpush1.bf16.xpose.msra.mxu0 0
        %662 = vmatprep.subr.bf16.mxu0 0
        %663 = vmatpush1.bf16.xpose.msra.mxu0 0
        %664 = vmatprep.subr.bf16.mxu0 0
        %665 = vmatpush1.bf16.xpose.msra.mxu0 0
        %666 = vmatprep.subr.bf16.mxu0 0
        %667 = vmatpush1.bf16.xpose.msra.mxu0 0
        %668 = vmatprep.subr.bf16.mxu0 0
        %669 = vmatpush1.bf16.xpose.msra.mxu0 0
        %670 = vmatprep.subr.bf16.mxu0 0
        %671 = vmatpush1.bf16.xpose.msra.mxu0 0
        %672 = vmatprep.subr.bf16.mxu0 0
        %673 = vmatpush1.bf16.xpose.msra.mxu0 0
        %674 = vmatprep.subr.bf16.mxu0 0
        %675 = vmatpush1.bf16.xpose.msra.mxu0 0
        %676 = vmatprep.subr.bf16.mxu0 0
        %677 = vmatpush1.bf16.xpose.msra.mxu0 0
        %678 = vmatprep.mubr.bf16.mxu0 0
        %679 = vmatmul.mubr.bf16.gmra.mrb[0].mxu0 %v641
        %v680 = vpop.f32.mrb[0].mxu0
        %v681 = vadd.f32 0.0, %v680
        %v682 = vpop.f32.mrb[0].mxu0
        %v683 = vpop.f32.mrb[0].mxu0
        %v684 = vpop.f32.mrb[0].mxu0
        %685 = vdwg.mxu0
        %v686 = vmul.f32 %v681, 0.35355338
        %v688 = vlaneseq
        %v689 = vshrl.u32 %v688, 7
        %v690 = vsub.s32 0, %v689
        %v691 = vrot.slane %v563, %v690
        %v693 = vadd.f32 %v686, %v691
        %v694 = vsel %vm639, %v693, -inf
        %695 = vmax.xlane.f32.xlu0 %v694
        %v696 = vpop.xlane.xlu0 %695
        %v697 = vsub.f32 %v693, %v696
        %v698 = vmul.f32 %v697, 1.442695
        %v699 = vpow.pop %v698
        %v700 = vsel %vm639, %v699, 0.0
        %701 = vadd.xlane.f32.xlu0 %v700
        %v702 = vpop.xlane.xlu0 %701
        %v703 = vrcp.pop %v702
        %v704 = vmul.f32 %v699, %v703
        %v705 = vpack.c.bf16 %v704, %v704
        %706 = vrot.lane.b32.xlu0 %v635, 64
        %v707 = vpop.permute.xlu0 %706
        %v709 = vsel %vm639, %v705, 0
        %vm711 = vcmask 1043456
        %v713 = vsel %vm711, %v707, 0
        %715 = vmatprep.subr.bf16.mxu0 0
        %716 = vmatpush1.bf16.msra.mxu0 %v713
        %717 = vmatprep.subr.bf16.mxu0 0
        %718 = vmatpush1.bf16.msra.mxu0 0
        %719 = vmatprep.subr.bf16.mxu0 0
        %720 = vmatpush1.bf16.msra.mxu0 0
        %721 = vmatprep.subr.bf16.mxu0 0
        %722 = vmatpush1.bf16.msra.mxu0 0
        %723 = vmatprep.subr.bf16.mxu0 0
        %724 = vmatpush1.bf16.msra.mxu0 0
        %725 = vmatprep.subr.bf16.mxu0 0
        %726 = vmatpush1.bf16.msra.mxu0 0
        %727 = vmatprep.subr.bf16.mxu0 0
        %728 = vmatpush1.bf16.msra.mxu0 0
        %729 = vmatprep.subr.bf16.mxu0 0
        %730 = vmatpush1.bf16.msra.mxu0 0
        %731 = vmatprep.subr.bf16.mxu0 0
        %732 = vmatpush1.bf16.msra.mxu0 0
        %733 = vmatprep.subr.bf16.mxu0 0
        %734 = vmatpush1.bf16.msra.mxu0 0
        %735 = vmatprep.subr.bf16.mxu0 0
        %736 = vmatpush1.bf16.msra.mxu0 0
        %737 = vmatprep.subr.bf16.mxu0 0
        %738 = vmatpush1.bf16.msra.mxu0 0
        %739 = vmatprep.subr.bf16.mxu0 0
        %740 = vmatpush1.bf16.msra.mxu0 0
        %741 = vmatprep.subr.bf16.mxu0 0
        %742 = vmatpush1.bf16.msra.mxu0 0
        %743 = vmatprep.subr.bf16.mxu0 0
        %744 = vmatpush1.bf16.msra.mxu0 0
        %745 = vmatprep.subr.bf16.mxu0 0
        %746 = vmatpush1.bf16.msra.mxu0 0
        %747 = vmatprep.mubr.bf16.mxu0 0
        %748 = vmatmul.mubr.bf16.gmra.mrb[0].mxu0 %v709
        %v749 = vpop.f32.mrb[0].mxu0
        %v750 = vadd.f32 0.0, %v749
        %v751 = vpop.f32.mrb[0].mxu0
        %v752 = vpop.f32.mrb[0].mxu0
        %v753 = vpop.f32.mrb[0].mxu0
        %754 = vdwg.mxu0
        %v755 = vpack.c.bf16 %v750, %v750
        %756 = vrot.lane.b32.xlu0 %v635, 120
        %v757 = vpop.permute.xlu0 %756
        %758 = vrot.lane.b32.xlu0 %v635, 88
        %v759 = vpop.permute.xlu0 %758
        %v761 = vsel %vm639, %v757, 0
        %v764 = vsel %vm639, %v759, 0
        %766 = vmatprep.subr.bf16.mxu0 0
        %767 = vmatpush1.bf16.xpose.msra.mxu0 %v764
        %768 = vmatprep.subr.bf16.mxu0 0
        %769 = vmatpush1.bf16.xpose.msra.mxu0 0
        %770 = vmatprep.subr.bf16.mxu0 0
        %771 = vmatpush1.bf16.xpose.msra.mxu0 0
        %772 = vmatprep.subr.bf16.mxu0 0
        %773 = vmatpush1.bf16.xpose.msra.mxu0 0
        %774 = vmatprep.subr.bf16.mxu0 0
        %775 = vmatpush1.bf16.xpose.msra.mxu0 0
        %776 = vmatprep.subr.bf16.mxu0 0
        %777 = vmatpush1.bf16.xpose.msra.mxu0 0
        %778 = vmatprep.subr.bf16.mxu0 0
        %779 = vmatpush1.bf16.xpose.msra.mxu0 0
        %780 = vmatprep.subr.bf16.mxu0 0
        %781 = vmatpush1.bf16.xpose.msra.mxu0 0
        %782 = vmatprep.subr.bf16.mxu0 0
        %783 = vmatpush1.bf16.xpose.msra.mxu0 0
        %784 = vmatprep.subr.bf16.mxu0 0
        %785 = vmatpush1.bf16.xpose.msra.mxu0 0
        %786 = vmatprep.subr.bf16.mxu0 0
        %787 = vmatpush1.bf16.xpose.msra.mxu0 0
        %788 = vmatprep.subr.bf16.mxu0 0
        %789 = vmatpush1.bf16.xpose.msra.mxu0 0
        %790 = vmatprep.subr.bf16.mxu0 0
        %791 = vmatpush1.bf16.xpose.msra.mxu0 0
        %792 = vmatprep.subr.bf16.mxu0 0
        %793 = vmatpush1.bf16.xpose.msra.mxu0 0
        %794 = vmatprep.subr.bf16.mxu0 0
        %795 = vmatpush1.bf16.xpose.msra.mxu0 0
        %796 = vmatprep.subr.bf16.mxu0 0
        %797 = vmatpush1.bf16.xpose.msra.mxu0 0
        %798 = vmatprep.mubr.bf16.mxu0 0
        %799 = vmatmul.mubr.bf16.gmra.mrb[0].mxu0 %v761
        %v800 = vpop.f32.mrb[0].mxu0
        %v801 = vadd.f32 0.0, %v800
        %v802 = vpop.f32.mrb[0].mxu0
        %v803 = vpop.f32.mrb[0].mxu0
        %v804 = vpop.f32.mrb[0].mxu0
        %805 = vdwg.mxu0
        %v806 = vmul.f32 %v801, 0.35355338
        %v807 = vadd.f32 %v806, %v691
        %v808 = vsel %vm639, %v807, -inf
        %809 = vmax.xlane.f32.xlu0 %v808
        %v810 = vpop.xlane.xlu0 %809
        %v811 = vsub.f32 %v807, %v810
        %v812 = vmul.f32 %v811, 1.442695
        %v813 = vpow.pop %v812
        %v814 = vsel %vm639, %v813, 0.0
        %815 = vadd.xlane.f32.xlu0 %v814
        %v816 = vpop.xlane.xlu0 %815
        %v817 = vrcp.pop %v816
        %v818 = vmul.f32 %v813, %v817
        %v819 = vpack.c.bf16 %v818, %v818
        %820 = vrot.lane.b32.xlu0 %v635, 56
        %v821 = vpop.permute.xlu0 %820
        %v823 = vsel %vm639, %v819, 0
        %v826 = vsel %vm711, %v821, 0
        %828 = vmatprep.subr.bf16.mxu0 0
        %829 = vmatpush1.bf16.msra.mxu0 %v826
        %830 = vmatprep.subr.bf16.mxu0 0
        %831 = vmatpush1.bf16.msra.mxu0 0
        %832 = vmatprep.subr.bf16.mxu0 0
        %833 = vmatpush1.bf16.msra.mxu0 0
        %834 = vmatprep.subr.bf16.mxu0 0
        %835 = vmatpush1.bf16.msra.mxu0 0
        %836 = vmatprep.subr.bf16.mxu0 0
        %837 = vmatpush1.bf16.msra.mxu0 0
        %838 = vmatprep.subr.bf16.mxu0 0
        %839 = vmatpush1.bf16.msra.mxu0 0
        %840 = vmatprep.subr.bf16.mxu0 0
        %841 = vmatpush1.bf16.msra.mxu0 0
        %842 = vmatprep.subr.bf16.mxu0 0
        %843 = vmatpush1.bf16.msra.mxu0 0
        %844 = vmatprep.subr.bf16.mxu0 0
        %845 = vmatpush1.bf16.msra.mxu0 0
        %846 = vmatprep.subr.bf16.mxu0 0
        %847 = vmatpush1.bf16.msra.mxu0 0
        %848 = vmatprep.subr.bf16.mxu0 0
        %849 = vmatpush1.bf16.msra.mxu0 0
        %850 = vmatprep.subr.bf16.mxu0 0
        %851 = vmatpush1.bf16.msra.mxu0 0
        %852 = vmatprep.subr.bf16.mxu0 0
        %853 = vmatpush1.bf16.msra.mxu0 0
        %854 = vmatprep.subr.bf16.mxu0 0
        %855 = vmatpush1.bf16.msra.mxu0 0
        %856 = vmatprep.subr.bf16.mxu0 0
        %857 = vmatpush1.bf16.msra.mxu0 0
        %858 = vmatprep.subr.bf16.mxu0 0
        %859 = vmatpush1.bf16.msra.mxu0 0
        %860 = vmatprep.mubr.bf16.mxu0 0
        %861 = vmatmul.mubr.bf16.gmra.mrb[0].mxu0 %v823
        %v862 = vpop.f32.mrb[0].mxu0
        %v863 = vadd.f32 0.0, %v862
        %v864 = vpop.f32.mrb[0].mxu0
        %v865 = vpop.f32.mrb[0].mxu0
        %v866 = vpop.f32.mrb[0].mxu0
        %867 = vdwg.mxu0
        %v868 = vpack.c.bf16 %v863, %v863
        %v870 = vsel %vm639, %v868, 0
        %v873 = vsel %vm711, %v632, 0
        %875 = vmatprep.subr.bf16.mxu0 0
        %876 = vmatpush1.bf16.msra.mxu0 %v873
        %877 = vmatprep.subr.bf16.mxu0 0
        %878 = vmatpush1.bf16.msra.mxu0 0
        %879 = vmatprep.subr.bf16.mxu0 0
        %880 = vmatpush1.bf16.msra.mxu0 0
        %881 = vmatprep.subr.bf16.mxu0 0
        %882 = vmatpush1.bf16.msra.mxu0 0
        %883 = vmatprep.subr.bf16.mxu0 0
        %884 = vmatpush1.bf16.msra.mxu0 0
        %885 = vmatprep.subr.bf16.mxu0 0
        %886 = vmatpush1.bf16.msra.mxu0 0
        %887 = vmatprep.subr.bf16.mxu0 0
        %888 = vmatpush1.bf16.msra.mxu0 0
        %889 = vmatprep.subr.bf16.mxu0 0
        %890 = vmatpush1.bf16.msra.mxu0 0
        %891 = vmatprep.subr.bf16.mxu0 0
        %892 = vmatpush1.bf16.msra.mxu0 0
        %893 = vmatprep.subr.bf16.mxu0 0
        %894 = vmatpush1.bf16.msra.mxu0 0
        %895 = vmatprep.subr.bf16.mxu0 0
        %896 = vmatpush1.bf16.msra.mxu0 0
        %897 = vmatprep.subr.bf16.mxu0 0
        %898 = vmatpush1.bf16.msra.mxu0 0
        %899 = vmatprep.subr.bf16.mxu0 0
        %900 = vmatpush1.bf16.msra.mxu0 0
        %901 = vmatprep.subr.bf16.mxu0 0
        %902 = vmatpush1.bf16.msra.mxu0 0
        %903 = vmatprep.subr.bf16.mxu0 0
        %904 = vmatpush1.bf16.msra.mxu0 0
        %905 = vmatprep.subr.bf16.mxu0 0
        %906 = vmatpush1.bf16.msra.mxu0 0
        %907 = vmatprep.mubr.bf16.mxu0 0
        %908 = vmatmul.mubr.bf16.gmra.mrb[0].mxu0 %v870
        %v909 = vpop.f32.mrb[0].mxu0
        %v910 = vadd.f32 0.0, %v909
        %v911 = vpop.f32.mrb[0].mxu0
        %v912 = vpop.f32.mrb[0].mxu0
        %v913 = vpop.f32.mrb[0].mxu0
        %914 = vdwg.mxu0
        %v916 = vsel %vm639, %v755, 0
        %v919 = vsel %vm711, %v631, 0
        %921 = vmatprep.subr.bf16.mxu0 0
        %922 = vmatpush1.bf16.msra.mxu0 %v919
        %923 = vmatprep.subr.bf16.mxu0 0
        %924 = vmatpush1.bf16.msra.mxu0 0
        %925 = vmatprep.subr.bf16.mxu0 0
        %926 = vmatpush1.bf16.msra.mxu0 0
        %927 = vmatprep.subr.bf16.mxu0 0
        %928 = vmatpush1.bf16.msra.mxu0 0
        %929 = vmatprep.subr.bf16.mxu0 0
        %930 = vmatpush1.bf16.msra.mxu0 0
        %931 = vmatprep.subr.bf16.mxu0 0
        %932 = vmatpush1.bf16.msra.mxu0 0
        %933 = vmatprep.subr.bf16.mxu0 0
        %934 = vmatpush1.bf16.msra.mxu0 0
        %935 = vmatprep.subr.bf16.mxu0 0
        %936 = vmatpush1.bf16.msra.mxu0 0
        %937 = vmatprep.subr.bf16.mxu0 0
        %938 = vmatpush1.bf16.msra.mxu0 0
        %939 = vmatprep.subr.bf16.mxu0 0
        %940 = vmatpush1.bf16.msra.mxu0 0
        %941 = vmatprep.subr.bf16.mxu0 0
        %942 = vmatpush1.bf16.msra.mxu0 0
        %943 = vmatprep.subr.bf16.mxu0 0
        %944 = vmatpush1.bf16.msra.mxu0 0
        %945 = vmatprep.subr.bf16.mxu0 0
        %946 = vmatpush1.bf16.msra.mxu0 0
        %947 = vmatprep.subr.bf16.mxu0 0
        %948 = vmatpush1.bf16.msra.mxu0 0
        %949 = vmatprep.subr.bf16.mxu0 0
        %950 = vmatpush1.bf16.msra.mxu0 0
        %951 = vmatprep.subr.bf16.mxu0 0
        %952 = vmatpush1.bf16.msra.mxu0 0
        %953 = vmatprep.mubr.bf16.mxu0 0
        %954 = vmatmul.mubr.bf16.gmra.mrb[0].mxu0 %v916
        %v955 = vpop.f32.mrb[0].mxu0
        %v956 = vadd.f32 %v910, %v955
        %v957 = vpop.f32.mrb[0].mxu0
        %v958 = vpop.f32.mrb[0].mxu0
        %v959 = vpop.f32.mrb[0].mxu0
        %960 = vdwg.mxu0
        %961 = vrot.lane.b32.xlu0 %v635, 112
        %v962 = vpop.permute.xlu0 %961
        %963 = vrot.lane.b32.xlu0 %v635, 80
        %v964 = vpop.permute.xlu0 %963
        %v966 = vsel %vm639, %v962, 0
        %v969 = vsel %vm639, %v964, 0
        %971 = vmatprep.subr.bf16.mxu0 0
        %972 = vmatpush1.bf16.xpose.msra.mxu0 %v969
        %973 = vmatprep.subr.bf16.mxu0 0
        %974 = vmatpush1.bf16.xpose.msra.mxu0 0
        %975 = vmatprep.subr.bf16.mxu0 0
        %976 = vmatpush1.bf16.xpose.msra.mxu0 0
        %977 = vmatprep.subr.bf16.mxu0 0
        %978 = vmatpush1.bf16.xpose.msra.mxu0 0
        %979 = vmatprep.subr.bf16.mxu0 0
        %980 = vmatpush1.bf16.xpose.msra.mxu0 0
        %981 = vmatprep.subr.bf16.mxu0 0
        %982 = vmatpush1.bf16.xpose.msra.mxu0 0
        %983 = vmatprep.subr.bf16.mxu0 0
        %984 = vmatpush1.bf16.xpose.msra.mxu0 0
        %985 = vmatprep.subr.bf16.mxu0 0
        %986 = vmatpush1.bf16.xpose.msra.mxu0 0
        %987 = vmatprep.subr.bf16.mxu0 0
        %988 = vmatpush1.bf16.xpose.msra.mxu0 0
        %989 = vmatprep.subr.bf16.mxu0 0
        %990 = vmatpush1.bf16.xpose.msra.mxu0 0
        %991 = vmatprep.subr.bf16.mxu0 0
        %992 = vmatpush1.bf16.xpose.msra.mxu0 0
        %993 = vmatprep.subr.bf16.mxu0 0
        %994 = vmatpush1.bf16.xpose.msra.mxu0 0
        %995 = vmatprep.subr.bf16.mxu0 0
        %996 = vmatpush1.bf16.xpose.msra.mxu0 0
        %997 = vmatprep.subr.bf16.mxu0 0
        %998 = vmatpush1.bf16.xpose.msra.mxu0 0
        %999 = vmatprep.subr.bf16.mxu0 0
        %1000 = vmatpush1.bf16.xpose.msra.mxu0 0
        %1001 = vmatprep.subr.bf16.mxu0 0
        %1002 = vmatpush1.bf16.xpose.msra.mxu0 0
        %1003 = vmatprep.mubr.bf16.mxu0 0
        %1004 = vmatmul.mubr.bf16.gmra.mrb[0].mxu0 %v966
        %v1005 = vpop.f32.mrb[0].mxu0
        %v1006 = vadd.f32 0.0, %v1005
        %v1007 = vpop.f32.mrb[0].mxu0
        %v1008 = vpop.f32.mrb[0].mxu0
        %v1009 = vpop.f32.mrb[0].mxu0
        %1010 = vdwg.mxu0
        %v1011 = vmul.f32 %v1006, 0.35355338
        %v1012 = vadd.f32 %v1011, %v691
        %v1013 = vsel %vm639, %v1012, -inf
        %1014 = vmax.xlane.f32.xlu0 %v1013
        %v1015 = vpop.xlane.xlu0 %1014
        %v1016 = vsub.f32 %v1012, %v1015
        %v1017 = vmul.f32 %v1016, 1.442695
        %v1018 = vpow.pop %v1017
        %v1019 = vsel %vm639, %v1018, 0.0
        %1020 = vadd.xlane.f32.xlu0 %v1019
        %v1021 = vpop.xlane.xlu0 %1020
        %v1022 = vrcp.pop %v1021
        %v1023 = vmul.f32 %v1018, %v1022
        %v1024 = vpack.c.bf16 %v1023, %v1023
        %1025 = vrot.lane.b32.xlu0 %v635, 48
        %v1026 = vpop.permute.xlu0 %1025
        %v1028 = vsel %vm639, %v1024, 0
        %v1031 = vsel %vm711, %v1026, 0
        %1033 = vmatprep.subr.bf16.mxu0 0
        %1034 = vmatpush1.bf16.msra.mxu0 %v1031
        %1035 = vmatprep.subr.bf16.mxu0 0
        %1036 = vmatpush1.bf16.msra.mxu0 0
        %1037 = vmatprep.subr.bf16.mxu0 0
        %1038 = vmatpush1.bf16.msra.mxu0 0
        %1039 = vmatprep.subr.bf16.mxu0 0
        %1040 = vmatpush1.bf16.msra.mxu0 0
        %1041 = vmatprep.subr.bf16.mxu0 0
        %1042 = vmatpush1.bf16.msra.mxu0 0
        %1043 = vmatprep.subr.bf16.mxu0 0
        %1044 = vmatpush1.bf16.msra.mxu0 0
        %1045 = vmatprep.subr.bf16.mxu0 0
        %1046 = vmatpush1.bf16.msra.mxu0 0
        %1047 = vmatprep.subr.bf16.mxu0 0
        %1048 = vmatpush1.bf16.msra.mxu0 0
        %1049 = vmatprep.subr.bf16.mxu0 0
        %1050 = vmatpush1.bf16.msra.mxu0 0
        %1051 = vmatprep.subr.bf16.mxu0 0
        %1052 = vmatpush1.bf16.msra.mxu0 0
        %1053 = vmatprep.subr.bf16.mxu0 0
        %1054 = vmatpush1.bf16.msra.mxu0 0
        %1055 = vmatprep.subr.bf16.mxu0 0
        %1056 = vmatpush1.bf16.msra.mxu0 0
        %1057 = vmatprep.subr.bf16.mxu0 0
        %1058 = vmatpush1.bf16.msra.mxu0 0
        %1059 = vmatprep.subr.bf16.mxu0 0
        %1060 = vmatpush1.bf16.msra.mxu0 0
        %1061 = vmatprep.subr.bf16.mxu0 0
        %1062 = vmatpush1.bf16.msra.mxu0 0
        %1063 = vmatprep.subr.bf16.mxu0 0
        %1064 = vmatpush1.bf16.msra.mxu0 0
        %1065 = vmatprep.mubr.bf16.mxu0 0
        %1066 = vmatmul.mubr.bf16.gmra.mrb[0].mxu0 %v1028
        %v1067 = vpop.f32.mrb[0].mxu0
        %v1068 = vadd.f32 0.0, %v1067
        %v1069 = vpop.f32.mrb[0].mxu0
        %v1070 = vpop.f32.mrb[0].mxu0
        %v1071 = vpop.f32.mrb[0].mxu0
        %1072 = vdwg.mxu0
        %v1073 = vpack.c.bf16 %v1068, %v1068
        %v1075 = vsel %vm639, %v1073, 0
        %v1078 = vsel %vm711, %v633, 0
        %1080 = vmatprep.subr.bf16.mxu0 0
        %1081 = vmatpush1.bf16.msra.mxu0 %v1078
        %1082 = vmatprep.subr.bf16.mxu0 0
        %1083 = vmatpush1.bf16.msra.mxu0 0
        %1084 = vmatprep.subr.bf16.mxu0 0
        %1085 = vmatpush1.bf16.msra.mxu0 0
        %1086 = vmatprep.subr.bf16.mxu0 0
        %1087 = vmatpush1.bf16.msra.mxu0 0
        %1088 = vmatprep.subr.bf16.mxu0 0
        %1089 = vmatpush1.bf16.msra.mxu0 0
        %1090 = vmatprep.subr.bf16.mxu0 0
        %1091 = vmatpush1.bf16.msra.mxu0 0
        %1092 = vmatprep.subr.bf16.mxu0 0
        %1093 = vmatpush1.bf16.msra.mxu0 0
        %1094 = vmatprep.subr.bf16.mxu0 0
        %1095 = vmatpush1.bf16.msra.mxu0 0
        %1096 = vmatprep.subr.bf16.mxu0 0
        %1097 = vmatpush1.bf16.msra.mxu0 0
        %1098 = vmatprep.subr.bf16.mxu0 0
        %1099 = vmatpush1.bf16.msra.mxu0 0
        %1100 = vmatprep.subr.bf16.mxu0 0
        %1101 = vmatpush1.bf16.msra.mxu0 0
        %1102 = vmatprep.subr.bf16.mxu0 0
        %1103 = vmatpush1.bf16.msra.mxu0 0
        %1104 = vmatprep.subr.bf16.mxu0 0
        %1105 = vmatpush1.bf16.msra.mxu0 0
        %1106 = vmatprep.subr.bf16.mxu0 0
        %1107 = vmatpush1.bf16.msra.mxu0 0
        %1108 = vmatprep.subr.bf16.mxu0 0
        %1109 = vmatpush1.bf16.msra.mxu0 0
        %1110 = vmatprep.subr.bf16.mxu0 0
        %1111 = vmatpush1.bf16.msra.mxu0 0
        %1112 = vmatprep.mubr.bf16.mxu0 0
        %1113 = vmatmul.mubr.bf16.gmra.mrb[0].mxu0 %v1075
        %v1114 = vpop.f32.mrb[0].mxu0
        %v1115 = vadd.f32 0.0, %v1114
        %v1116 = vpop.f32.mrb[0].mxu0
        %v1117 = vpop.f32.mrb[0].mxu0
        %v1118 = vpop.f32.mrb[0].mxu0
        %1119 = vdwg.mxu0
        %v1120 = vadd.f32 %v956, %v1115
        %1121 = vrot.lane.b32.xlu0 %v635, 104
        %v1122 = vpop.permute.xlu0 %1121
        %1123 = vrot.lane.b32.xlu0 %v635, 72
        %v1124 = vpop.permute.xlu0 %1123
        %v1126 = vsel %vm639, %v1122, 0
        %v1129 = vsel %vm639, %v1124, 0
        %1131 = vmatprep.subr.bf16.mxu0 0
        %1132 = vmatpush1.bf16.xpose.msra.mxu0 %v1129
        %1133 = vmatprep.subr.bf16.mxu0 0
        %1134 = vmatpush1.bf16.xpose.msra.mxu0 0
        %1135 = vmatprep.subr.bf16.mxu0 0
        %1136 = vmatpush1.bf16.xpose.msra.mxu0 0
        %1137 = vmatprep.subr.bf16.mxu0 0
        %1138 = vmatpush1.bf16.xpose.msra.mxu0 0
        %1139 = vmatprep.subr.bf16.mxu0 0
        %1140 = vmatpush1.bf16.xpose.msra.mxu0 0
        %1141 = vmatprep.subr.bf16.mxu0 0
        %1142 = vmatpush1.bf16.xpose.msra.mxu0 0
        %1143 = vmatprep.subr.bf16.mxu0 0
        %1144 = vmatpush1.bf16.xpose.msra.mxu0 0
        %1145 = vmatprep.subr.bf16.mxu0 0
        %1146 = vmatpush1.bf16.xpose.msra.mxu0 0
        %1147 = vmatprep.subr.bf16.mxu0 0
        %1148 = vmatpush1.bf16.xpose.msra.mxu0 0
        %1149 = vmatprep.subr.bf16.mxu0 0
        %1150 = vmatpush1.bf16.xpose.msra.mxu0 0
        %1151 = vmatprep.subr.bf16.mxu0 0
        %1152 = vmatpush1.bf16.xpose.msra.mxu0 0
        %1153 = vmatprep.subr.bf16.mxu0 0
        %1154 = vmatpush1.bf16.xpose.msra.mxu0 0
        %1155 = vmatprep.subr.bf16.mxu0 0
        %1156 = vmatpush1.bf16.xpose.msra.mxu0 0
        %1157 = vmatprep.subr.bf16.mxu0 0
        %1158 = vmatpush1.bf16.xpose.msra.mxu0 0
        %1159 = vmatprep.subr.bf16.mxu0 0
        %1160 = vmatpush1.bf16.xpose.msra.mxu0 0
        %1161 = vmatprep.subr.bf16.mxu0 0
        %1162 = vmatpush1.bf16.xpose.msra.mxu0 0
        %1163 = vmatprep.mubr.bf16.mxu0 0
        %1164 = vmatmul.mubr.bf16.gmra.mrb[0].mxu0 %v1126
        %v1165 = vpop.f32.mrb[0].mxu0
        %v1166 = vadd.f32 0.0, %v1165
        %v1167 = vpop.f32.mrb[0].mxu0
        %v1168 = vpop.f32.mrb[0].mxu0
        %v1169 = vpop.f32.mrb[0].mxu0
        %1170 = vdwg.mxu0
        %v1171 = vmul.f32 %v1166, 0.35355338
        %v1172 = vadd.f32 %v1171, %v691
        %v1173 = vsel %vm639, %v1172, -inf
        %1174 = vmax.xlane.f32.xlu0 %v1173
        %v1175 = vpop.xlane.xlu0 %1174
        %v1176 = vsub.f32 %v1172, %v1175
        %v1177 = vmul.f32 %v1176, 1.442695
        %v1178 = vpow.pop %v1177
        %v1179 = vsel %vm639, %v1178, 0.0
        %1180 = vadd.xlane.f32.xlu0 %v1179
        %v1181 = vpop.xlane.xlu0 %1180
        %v1182 = vrcp.pop %v1181
        %v1183 = vmul.f32 %v1178, %v1182
        %v1184 = vpack.c.bf16 %v1183, %v1183
        %1185 = vrot.lane.b32.xlu0 %v635, 40
        %v1186 = vpop.permute.xlu0 %1185
        %v1188 = vsel %vm639, %v1184, 0
        %v1191 = vsel %vm711, %v1186, 0
        %1193 = vmatprep.subr.bf16.mxu0 0
        %1194 = vmatpush1.bf16.msra.mxu0 %v1191
        %1195 = vmatprep.subr.bf16.mxu0 0
        %1196 = vmatpush1.bf16.msra.mxu0 0
        %1197 = vmatprep.subr.bf16.mxu0 0
        %1198 = vmatpush1.bf16.msra.mxu0 0
        %1199 = vmatprep.subr.bf16.mxu0 0
        %1200 = vmatpush1.bf16.msra.mxu0 0
        %1201 = vmatprep.subr.bf16.mxu0 0
        %1202 = vmatpush1.bf16.msra.mxu0 0
        %1203 = vmatprep.subr.bf16.mxu0 0
        %1204 = vmatpush1.bf16.msra.mxu0 0
        %1205 = vmatprep.subr.bf16.mxu0 0
        %1206 = vmatpush1.bf16.msra.mxu0 0
        %1207 = vmatprep.subr.bf16.mxu0 0
        %1208 = vmatpush1.bf16.msra.mxu0 0
        %1209 = vmatprep.subr.bf16.mxu0 0
        %1210 = vmatpush1.bf16.msra.mxu0 0
        %1211 = vmatprep.subr.bf16.mxu0 0
        %1212 = vmatpush1.bf16.msra.mxu0 0
        %1213 = vmatprep.subr.bf16.mxu0 0
        %1214 = vmatpush1.bf16.msra.mxu0 0
        %1215 = vmatprep.subr.bf16.mxu0 0
        %1216 = vmatpush1.bf16.msra.mxu0 0
        %1217 = vmatprep.subr.bf16.mxu0 0
        %1218 = vmatpush1.bf16.msra.mxu0 0
        %1219 = vmatprep.subr.bf16.mxu0 0
        %1220 = vmatpush1.bf16.msra.mxu0 0
        %1221 = vmatprep.subr.bf16.mxu0 0
        %1222 = vmatpush1.bf16.msra.mxu0 0
        %1223 = vmatprep.subr.bf16.mxu0 0
        %1224 = vmatpush1.bf16.msra.mxu0 0
        %1225 = vmatprep.mubr.bf16.mxu0 0
        %1226 = vmatmul.mubr.bf16.gmra.mrb[0].mxu0 %v1188
        %v1227 = vpop.f32.mrb[0].mxu0
        %v1228 = vadd.f32 0.0, %v1227
        %v1229 = vpop.f32.mrb[0].mxu0
        %v1230 = vpop.f32.mrb[0].mxu0
        %v1231 = vpop.f32.mrb[0].mxu0
        %1232 = vdwg.mxu0
        %v1233 = vpack.c.bf16 %v1228, %v1228
        %v1235 = vsel %vm639, %v1233, 0
        %v1238 = vsel %vm711, %v634, 0
        %1240 = vmatprep.subr.bf16.mxu0 0
        %1241 = vmatpush1.bf16.msra.mxu0 %v1238
        %1242 = vmatprep.subr.bf16.mxu0 0
        %1243 = vmatpush1.bf16.msra.mxu0 0
        %1244 = vmatprep.subr.bf16.mxu0 0
        %1245 = vmatpush1.bf16.msra.mxu0 0
        %1246 = vmatprep.subr.bf16.mxu0 0
        %1247 = vmatpush1.bf16.msra.mxu0 0
        %1248 = vmatprep.subr.bf16.mxu0 0
        %1249 = vmatpush1.bf16.msra.mxu0 0
        %1250 = vmatprep.subr.bf16.mxu0 0
        %1251 = vmatpush1.bf16.msra.mxu0 0
        %1252 = vmatprep.subr.bf16.mxu0 0
        %1253 = vmatpush1.bf16.msra.mxu0 0
        %1254 = vmatprep.subr.bf16.mxu0 0
        %1255 = vmatpush1.bf16.msra.mxu0 0
        %1256 = vmatprep.subr.bf16.mxu0 0
        %1257 = vmatpush1.bf16.msra.mxu0 0
        %1258 = vmatprep.subr.bf16.mxu0 0
        %1259 = vmatpush1.bf16.msra.mxu0 0
        %1260 = vmatprep.subr.bf16.mxu0 0
        %1261 = vmatpush1.bf16.msra.mxu0 0
        %1262 = vmatprep.subr.bf16.mxu0 0
        %1263 = vmatpush1.bf16.msra.mxu0 0
        %1264 = vmatprep.subr.bf16.mxu0 0
        %1265 = vmatpush1.bf16.msra.mxu0 0
        %1266 = vmatprep.subr.bf16.mxu0 0
        %1267 = vmatpush1.bf16.msra.mxu0 0
        %1268 = vmatprep.subr.bf16.mxu0 0
        %1269 = vmatpush1.bf16.msra.mxu0 0
        %1270 = vmatprep.subr.bf16.mxu0 0
        %1271 = vmatpush1.bf16.msra.mxu0 0
        %1272 = vmatprep.mubr.bf16.mxu0 0
        %1273 = vmatmul.mubr.bf16.gmra.mrb[0].mxu0 %v1235
        %v1274 = vpop.f32.mrb[0].mxu0
        %v1275 = vadd.f32 0.0, %v1274
        %v1276 = vpop.f32.mrb[0].mxu0
        %v1277 = vpop.f32.mrb[0].mxu0
        %v1278 = vpop.f32.mrb[0].mxu0
        %1279 = vdwg.mxu0
        %v1280 = vadd.f32 %v1120, %v1275
        %v1281 = vld [vmem:[%s7] sm:$0x1]
        %v1283 = vlaneseq
        %v1284 = vshrl.u32 %v1283, 7
        %v1285 = vsub.s32 0, %v1284
        %v1286 = vrot.slane %v1281, %v1285
        %v1288 = vadd.f32 %v1280, %v1286
        %v1289 = vadd.f32 %v562, %v1288
        %v1290 = vld [vmem:[%s8] sm:$0x1]
        %v1291 = vld [vmem:[%s9] sm:$0x1]
        %v1292 = vsel %vm534, %v1289, 0.0
        %1293 = vadd.xlane.f32.xlu0 %v1292
        %v1294 = vpop.xlane.xlu0 %1293
        %v1295 = vmul.f32 %v1294, %v538
        %v1296 = vsub.f32 %v1289, %v1295
        %v1297 = vmul.f32 %v1296, %v1296
        %v1298 = vsel %vm534, %v1297, 0.0
        %1299 = vadd.xlane.f32.xlu0 %v1298
        %v1300 = vpop.xlane.xlu0 %1299
        %v1301 = vmul.f32 %v1300, %v538
        %v1302 = vadd.f32 %v1301, 1e-12
        %v1303 = vrsqrt.pop %v1302
        %v1304 = vmul.f32 %v1296, %v1303
        %v1306 = vlaneseq
        %v1307 = vshrl.u32 %v1306, 7
        %v1308 = vsub.s32 0, %v1307
        %v1309 = vrot.slane %v1290, %v1308
        %v1311 = vmul.f32 %v1304, %v1309
        %v1313 = vlaneseq
        %v1314 = vshrl.u32 %v1313, 7
        %v1315 = vsub.s32 0, %v1314
        %v1316 = vrot.slane %v1291, %v1315
        %v1318 = vadd.f32 %v1311, %v1316
        %v1319 = vld [vmem:[%s10] sm:$0xf]
        %v1320 = vld [vmem:[%s10 + $0x4] sm:$0xf]
        %v1321 = vld [vmem:[%s10 + $0x8] sm:$0xf]
        %v1322 = vld [vmem:[%s10 + $0xc] sm:$0xf]
        %v1323 = vld [vmem:[%s11] sm:$0x1]
        %v1324 = vpack.c.bf16 %v1318, %v1318
        %v1326 = vlaneseq
        %v1327 = vshrl.u32 %v1326, 7
        %v1328 = vsub.s32 0, %v1327
        %v1329 = vrot.slane %v1323, %v1328
        %v1335 = vunpack.c.l.b16 %v1319
        %v1336 = vunpack.c.l.b16 %v1320
        %v1337 = vunpack.c.l.b16 %v1321
        %v1338 = vunpack.c.l.b16 %v1322
        %v1339 = vpack.c.b16 %v1336, %v1335
        %v1340 = vpack.c.b16 %v1338, %v1337
        %v1344 = vsel %vm534, %v1324, 0
        %1346 = vmatprep.subr.bf16.mxu0 0
        %1347 = vmatpush1.bf16.msra.mxu0 %v1339
        %1348 = vmatprep.subr.bf16.mxu0 0
        %1349 = vmatpush1.bf16.msra.mxu0 %v1340
        %1350 = vmatprep.subr.bf16.mxu0 0
        %1351 = vmatpush1.bf16.msra.mxu0 0
        %1352 = vmatprep.subr.bf16.mxu0 0
        %1353 = vmatpush1.bf16.msra.mxu0 0
        %1354 = vmatprep.subr.bf16.mxu0 0
        %1355 = vmatpush1.bf16.msra.mxu0 0
        %1356 = vmatprep.subr.bf16.mxu0 0
        %1357 = vmatpush1.bf16.msra.mxu0 0
        %1358 = vmatprep.subr.bf16.mxu0 0
        %1359 = vmatpush1.bf16.msra.mxu0 0
        %1360 = vmatprep.subr.bf16.mxu0 0
        %1361 = vmatpush1.bf16.msra.mxu0 0
        %1362 = vmatprep.subr.bf16.mxu0 0
        %1363 = vmatpush1.bf16.msra.mxu0 0
        %1364 = vmatprep.subr.bf16.mxu0 0
        %1365 = vmatpush1.bf16.msra.mxu0 0
        %1366 = vmatprep.subr.bf16.mxu0 0
        %1367 = vmatpush1.bf16.msra.mxu0 0
        %1368 = vmatprep.subr.bf16.mxu0 0
        %1369 = vmatpush1.bf16.msra.mxu0 0
        %1370 = vmatprep.subr.bf16.mxu0 0
        %1371 = vmatpush1.bf16.msra.mxu0 0
        %1372 = vmatprep.subr.bf16.mxu0 0
        %1373 = vmatpush1.bf16.msra.mxu0 0
        %1374 = vmatprep.subr.bf16.mxu0 0
        %1375 = vmatpush1.bf16.msra.mxu0 0
        %1376 = vmatprep.subr.bf16.mxu0 0
        %1377 = vmatpush1.bf16.msra.mxu0 0
        %1378 = vmatprep.mubr.bf16.mxu0 0
        %1379 = vmatmul.mubr.bf16.gmra.mrb[0].mxu0 %v1344
        %v1380 = vpop.f32.mrb[0].mxu0
        %v1381 = vadd.f32 %v1329, %v1380
        %v1382 = vpop.f32.mrb[0].mxu0
        %v1383 = vpop.f32.mrb[0].mxu0
        %v1384 = vpop.f32.mrb[0].mxu0
        %1385 = vdwg.mxu0
        %v1386 = vmul.f32 %v1381, 0.5
        %v1387 = vmul.f32 %v1381, 0.70710677
        %v1388 = verf.f32.pop %v1387
        %v1389 = vadd.f32 %v1388, 1.0
        %v1390 = vmul.f32 %v1386, %v1389
        %v1391 = vld [vmem:[%s12] sm:$0xf]
        %v1392 = vld [vmem:[%s12 + $0x4] sm:$0xf]
        %v1393 = vld [vmem:[%s12 + $0x8] sm:$0xf]
        %v1394 = vld [vmem:[%s12 + $0xc] sm:$0xf]
        %v1395 = vld [vmem:[%s12 + $0x10] sm:$0xf]
        %v1396 = vld [vmem:[%s12 + $0x14] sm:$0xf]
        %v1397 = vld [vmem:[%s12 + $0x18] sm:$0xf]
        %v1398 = vld [vmem:[%s12 + $0x1c] sm:$0xf]
        %v1399 = vld [vmem:[%s12 + $0x20] sm:$0xf]
        %v1400 = vld [vmem:[%s12 + $0x24] sm:$0xf]
        %v1401 = vld [vmem:[%s12 + $0x28] sm:$0xf]
        %v1402 = vld [vmem:[%s12 + $0x2c] sm:$0xf]
        %v1403 = vld [vmem:[%s12 + $0x30] sm:$0xf]
        %v1404 = vld [vmem:[%s12 + $0x34] sm:$0xf]
        %v1405 = vld [vmem:[%s12 + $0x38] sm:$0xf]
        %v1406 = vld [vmem:[%s12 + $0x3c] sm:$0xf]
        %v1407 = vld [vmem:[%s13] sm:$0x1]
        %v1408 = vpack.c.bf16 %v1390, %v1390
        %v1410 = vlaneseq
        %v1411 = vshrl.u32 %v1410, 7
        %v1412 = vsub.s32 0, %v1411
        %v1413 = vrot.slane %v1407, %v1412
        %v1431 = vunpack.c.l.b16 %v1391
        %v1432 = vunpack.c.l.b16 %v1392
        %v1433 = vunpack.c.l.b16 %v1393
        %v1434 = vunpack.c.l.b16 %v1394
        %v1435 = vunpack.c.l.b16 %v1395
        %v1436 = vunpack.c.l.b16 %v1396
        %v1437 = vunpack.c.l.b16 %v1397
        %v1438 = vunpack.c.l.b16 %v1398
        %v1439 = vunpack.c.l.b16 %v1399
        %v1440 = vunpack.c.l.b16 %v1400
        %v1441 = vunpack.c.l.b16 %v1401
        %v1442 = vunpack.c.l.b16 %v1402
        %v1443 = vunpack.c.l.b16 %v1403
        %v1444 = vunpack.c.l.b16 %v1404
        %v1445 = vunpack.c.l.b16 %v1405
        %v1446 = vunpack.c.l.b16 %v1406
        %v1447 = vpack.c.b16 %v1432, %v1431
        %v1448 = vpack.c.b16 %v1434, %v1433
        %v1449 = vpack.c.b16 %v1436, %v1435
        %v1450 = vpack.c.b16 %v1438, %v1437
        %v1451 = vpack.c.b16 %v1440, %v1439
        %v1452 = vpack.c.b16 %v1442, %v1441
        %v1453 = vpack.c.b16 %v1444, %v1443
        %v1454 = vpack.c.b16 %v1446, %v1445
        %1463 = vmatprep.subr.bf16.mxu0 0
        %1464 = vmatpush1.bf16.msra.mxu0 %v1447
        %1465 = vmatprep.subr.bf16.mxu0 0
        %1466 = vmatpush1.bf16.msra.mxu0 %v1448
        %1467 = vmatprep.subr.bf16.mxu0 0
        %1468 = vmatpush1.bf16.msra.mxu0 %v1449
        %1469 = vmatprep.subr.bf16.mxu0 0
        %1470 = vmatpush1.bf16.msra.mxu0 %v1450
        %1471 = vmatprep.subr.bf16.mxu0 0
        %1472 = vmatpush1.bf16.msra.mxu0 %v1451
        %1473 = vmatprep.subr.bf16.mxu0 0
        %1474 = vmatpush1.bf16.msra.mxu0 %v1452
        %1475 = vmatprep.subr.bf16.mxu0 0
        %1476 = vmatpush1.bf16.msra.mxu0 %v1453
        %1477 = vmatprep.subr.bf16.mxu0 0
        %1478 = vmatpush1.bf16.msra.mxu0 %v1454
        %1479 = vmatprep.subr.bf16.mxu0 0
        %1480 = vmatpush1.bf16.msra.mxu0 0
        %1481 = vmatprep.subr.bf16.mxu0 0
        %1482 = vmatpush1.bf16.msra.mxu0 0
        %1483 = vmatprep.subr.bf16.mxu0 0
        %1484 = vmatpush1.bf16.msra.mxu0 0
        %1485 = vmatprep.subr.bf16.mxu0 0
        %1486 = vmatpush1.bf16.msra.mxu0 0
        %1487 = vmatprep.subr.bf16.mxu0 0
        %1488 = vmatpush1.bf16.msra.mxu0 0
        %1489 = vmatprep.subr.bf16.mxu0 0
        %1490 = vmatpush1.bf16.msra.mxu0 0
        %1491 = vmatprep.subr.bf16.mxu0 0
        %1492 = vmatpush1.bf16.msra.mxu0 0
        %1493 = vmatprep.subr.bf16.mxu0 0
        %1494 = vmatpush1.bf16.msra.mxu0 0
        %1495 = vmatprep.mubr.bf16.mxu0 0
        %1496 = vmatmul.mubr.bf16.gmra.mrb[0].mxu0 %v1408
        %v1497 = vpop.f32.mrb[0].mxu0
        %v1498 = vadd.f32 %v1413, %v1497
        %v1499 = vpop.f32.mrb[0].mxu0
        %v1500 = vpop.f32.mrb[0].mxu0
        %v1501 = vpop.f32.mrb[0].mxu0
        %1502 = vdwg.mxu0
        %v1503 = vadd.f32 %v1318, %v1498
        %v1504 = vld [vmem:[%s14] sm:$0x1]
        %v1505 = vld [vmem:[%s15] sm:$0x1]
        %v1506 = vsel %vm534, %v1503, 0.0
        %1507 = vadd.xlane.f32.xlu0 %v1506
        %v1508 = vpop.xlane.xlu0 %1507
        %v1509 = vmul.f32 %v1508, %v538
        %v1510 = vsub.f32 %v1503, %v1509
        %v1511 = vmul.f32 %v1510, %v1510
        %v1512 = vsel %vm534, %v1511, 0.0
        %1513 = vadd.xlane.f32.xlu0 %v1512
        %v1514 = vpop.xlane.xlu0 %1513
        %v1515 = vmul.f32 %v1514, %v538
        %v1516 = vadd.f32 %v1515, 1e-12
        %v1517 = vrsqrt.pop %v1516
        %v1518 = vmul.f32 %v1510, %v1517
        %v1520 = vlaneseq
        %v1521 = vshrl.u32 %v1520, 7
        %v1522 = vsub.s32 0, %v1521
        %v1523 = vrot.slane %v1504, %v1522
        %v1525 = vmul.f32 %v1518, %v1523
        %v1527 = vlaneseq
        %v1528 = vshrl.u32 %v1527, 7
        %v1529 = vsub.s32 0, %v1528
        %v1530 = vrot.slane %v1505, %v1529
        %v1532 = vadd.f32 %v1525, %v1530
        %s1533 = scalar_lea.vmem %s4, 16
        %v1534 = vld [vmem:[%s1533] sm:$0xf]
        %v1535 = vld [vmem:[%s1533 + $0x4] sm:$0xf]
        %v1536 = vld [vmem:[%s1533 + $0x8] sm:$0xf]
        %v1537 = vld [vmem:[%s1533 + $0xc] sm:$0xf]
        %s1538 = scalar_lea.vmem %s5, 1
        %v1539 = vld [vmem:[%s1538] sm:$0x1]
        %v1540 = vpack.c.bf16 %v1532, %v1532
        %v1542 = vlaneseq
        %v1543 = vshrl.u32 %v1542, 7
        %v1544 = vsub.s32 0, %v1543
        %v1545 = vrot.slane %v1539, %v1544
        %v1551 = vunpack.c.l.b16 %v1534
        %v1552 = vunpack.c.l.b16 %v1535
        %v1553 = vunpack.c.l.b16 %v1536
        %v1554 = vunpack.c.l.b16 %v1537
        %v1555 = vpack.c.b16 %v1552, %v1551
        %v1556 = vpack.c.b16 %v1554, %v1553
        %v1560 = vsel %vm534, %v1540, 0
        %1562 = vmatprep.subr.bf16.mxu0 0
        %1563 = vmatpush1.bf16.msra.mxu0 %v1555
        %1564 = vmatprep.subr.bf16.mxu0 0
        %1565 = vmatpush1.bf16.msra.mxu0 %v1556
        %1566 = vmatprep.subr.bf16.mxu0 0
        %1567 = vmatpush1.bf16.msra.mxu0 0
        %1568 = vmatprep.subr.bf16.mxu0 0
        %1569 = vmatpush1.bf16.msra.mxu0 0
        %1570 = vmatprep.subr.bf16.mxu0 0
        %1571 = vmatpush1.bf16.msra.mxu0 0
        %1572 = vmatprep.subr.bf16.mxu0 0
        %1573 = vmatpush1.bf16.msra.mxu0 0
        %1574 = vmatprep.subr.bf16.mxu0 0
        %1575 = vmatpush1.bf16.msra.mxu0 0
        %1576 = vmatprep.subr.bf16.mxu0 0
        %1577 = vmatpush1.bf16.msra.mxu0 0
        %1578 = vmatprep.subr.bf16.mxu0 0
        %1579 = vmatpush1.bf16.msra.mxu0 0
        %1580 = vmatprep.subr.bf16.mxu0 0
        %1581 = vmatpush1.bf16.msra.mxu0 0
        %1582 = vmatprep.subr.bf16.mxu0 0
        %1583 = vmatpush1.bf16.msra.mxu0 0
        %1584 = vmatprep.subr.bf16.mxu0 0
        %1585 = vmatpush1.bf16.msra.mxu0 0
        %1586 = vmatprep.subr.bf16.mxu0 0
        %1587 = vmatpush1.bf16.msra.mxu0 0
        %1588 = vmatprep.subr.bf16.mxu0 0
        %1589 = vmatpush1.bf16.msra.mxu0 0
        %1590 = vmatprep.subr.bf16.mxu0 0
        %1591 = vmatpush1.bf16.msra.mxu0 0
        %1592 = vmatprep.subr.bf16.mxu0 0
        %1593 = vmatpush1.bf16.msra.mxu0 0
        %1594 = vmatprep.mubr.bf16.mxu0 0
        %1595 = vmatmul.mubr.bf16.gmra.mrb[0].mxu0 %v1560
        %v1596 = vpop.f32.mrb[0].mxu0
        %v1597 = vadd.f32 %v1545, %v1596
        %v1598 = vpop.f32.mrb[0].mxu0
        %v1599 = vpop.f32.mrb[0].mxu0
        %v1600 = vpop.f32.mrb[0].mxu0
        %1601 = vdwg.mxu0
        %s1602 = scalar_lea.vmem %s6, 16
        %v1603 = vld [vmem:[%s1602] sm:$0xf]
        %v1604 = vld [vmem:[%s1602 + $0x4] sm:$0xf]
        %v1605 = vld [vmem:[%s1602 + $0x8] sm:$0xf]
        %v1606 = vld [vmem:[%s1602 + $0xc] sm:$0xf]
        %v1607 = vpack.c.bf16 %v1597, %v1597
        %1609 = vrot.lane.b32.xlu0 %v1607, 96
        %v1610 = vpop.permute.xlu0 %1609
        %v1612 = vsel %vm639, %v1607, 0
        %v1615 = vsel %vm639, %v1610, 0
        %1617 = vmatprep.subr.bf16.mxu0 0
        %1618 = vmatpush1.bf16.xpose.msra.mxu0 %v1615
        %1619 = vmatprep.subr.bf16.mxu0 0
        %1620 = vmatpush1.bf16.xpose.msra.mxu0 0
        %1621 = vmatprep.subr.bf16.mxu0 0
        %1622 = vmatpush1.bf16.xpose.msra.mxu0 0
        %1623 = vmatprep.subr.bf16.mxu0 0
        %1624 = vmatpush1.bf16.xpose.msra.mxu0 0
        %1625 = vmatprep.subr.bf16.mxu0 0
        %1626 = vmatpush1.bf16.xpose.msra.mxu0 0
        %1627 = vmatprep.subr.bf16.mxu0 0
        %1628 = vmatpush1.bf16.xpose.msra.mxu0 0
        %1629 = vmatprep.subr.bf16.mxu0 0
        %1630 = vmatpush1.bf16.xpose.msra.mxu0 0
        %1631 = vmatprep.subr.bf16.mxu0 0
        %1632 = vmatpush1.bf16.xpose.msra.mxu0 0
        %1633 = vmatprep.subr.bf16.mxu0 0
        %1634 = vmatpush1.bf16.xpose.msra.mxu0 0
        %1635 = vmatprep.subr.bf16.mxu0 0
        %1636 = vmatpush1.bf16.xpose.msra.mxu0 0
        %1637 = vmatprep.subr.bf16.mxu0 0
        %1638 = vmatpush1.bf16.xpose.msra.mxu0 0
        %1639 = vmatprep.subr.bf16.mxu0 0
        %1640 = vmatpush1.bf16.xpose.msra.mxu0 0
        %1641 = vmatprep.subr.bf16.mxu0 0
        %1642 = vmatpush1.bf16.xpose.msra.mxu0 0
        %1643 = vmatprep.subr.bf16.mxu0 0
        %1644 = vmatpush1.bf16.xpose.msra.mxu0 0
        %1645 = vmatprep.subr.bf16.mxu0 0
        %1646 = vmatpush1.bf16.xpose.msra.mxu0 0
        %1647 = vmatprep.subr.bf16.mxu0 0
        %1648 = vmatpush1.bf16.xpose.msra.mxu0 0
        %1649 = vmatprep.mubr.bf16.mxu0 0
        %1650 = vmatmul.mubr.bf16.gmra.mrb[0].mxu0 %v1612
        %v1651 = vpop.f32.mrb[0].mxu0
        %v1652 = vadd.f32 0.0, %v1651
        %v1653 = vpop.f32.mrb[0].mxu0
        %v1654 = vpop.f32.mrb[0].mxu0
        %v1655 = vpop.f32.mrb[0].mxu0
        %1656 = vdwg.mxu0
        %v1657 = vmul.f32 %v1652, 0.35355338
        %v1658 = vadd.f32 %v1657, %v691
        %v1659 = vsel %vm639, %v1658, -inf
        %1660 = vmax.xlane.f32.xlu0 %v1659
        %v1661 = vpop.xlane.xlu0 %1660
        %v1662 = vsub.f32 %v1658, %v1661
        %v1663 = vmul.f32 %v1662, 1.442695
        %v1664 = vpow.pop %v1663
        %v1665 = vsel %vm639, %v1664, 0.0
        %1666 = vadd.xlane.f32.xlu0 %v1665
        %v1667 = vpop.xlane.xlu0 %1666
        %v1668 = vrcp.pop %v1667
        %v1669 = vmul.f32 %v1664, %v1668
        %v1670 = vpack.c.bf16 %v1669, %v1669
        %1671 = vrot.lane.b32.xlu0 %v1607, 64
        %v1672 = vpop.permute.xlu0 %1671
        %v1674 = vsel %vm639, %v1670, 0
        %v1677 = vsel %vm711, %v1672, 0
        %1679 = vmatprep.subr.bf16.mxu0 0
        %1680 = vmatpush1.bf16.msra.mxu0 %v1677
        %1681 = vmatprep.subr.bf16.mxu0 0
        %1682 = vmatpush1.bf16.msra.mxu0 0
        %1683 = vmatprep.subr.bf16.mxu0 0
        %1684 = vmatpush1.bf16.msra.mxu0 0
        %1685 = vmatprep.subr.bf16.mxu0 0
        %1686 = vmatpush1.bf16.msra.mxu0 0
        %1687 = vmatprep.subr.bf16.mxu0 0
        %1688 = vmatpush1.bf16.msra.mxu0 0
        %1689 = vmatprep.subr.bf16.mxu0 0
        %1690 = vmatpush1.bf16.msra.mxu0 0
        %1691 = vmatprep.subr.bf16.mxu0 0
        %1692 = vmatpush1.bf16.msra.mxu0 0
        %1693 = vmatprep.subr.bf16.mxu0 0
        %1694 = vmatpush1.bf16.msra.mxu0 0
        %1695 = vmatprep.subr.bf16.mxu0 0
        %1696 = vmatpush1.bf16.msra.mxu0 0
        %1697 = vmatprep.subr.bf16.mxu0 0
        %1698 = vmatpush1.bf16.msra.mxu0 0
        %1699 = vmatprep.subr.bf16.mxu0 0
        %1700 = vmatpush1.bf16.msra.mxu0 0
        %1701 = vmatprep.subr.bf16.mxu0 0
        %1702 = vmatpush1.bf16.msra.mxu0 0
        %1703 = vmatprep.subr.bf16.mxu0 0
        %1704 = vmatpush1.bf16.msra.mxu0 0
        %1705 = vmatprep.subr.bf16.mxu0 0
        %1706 = vmatpush1.bf16.msra.mxu0 0
        %1707 = vmatprep.subr.bf16.mxu0 0
        %1708 = vmatpush1.bf16.msra.mxu0 0
        %1709 = vmatprep.subr.bf16.mxu0 0
        %1710 = vmatpush1.bf16.msra.mxu0 0
        %1711 = vmatprep.mubr.bf16.mxu0 0
        %1712 = vmatmul.mubr.bf16.gmra.mrb[0].mxu0 %v1674
        %v1713 = vpop.f32.mrb[0].mxu0
        %v1714 = vadd.f32 0.0, %v1713
        %v1715 = vpop.f32.mrb[0].mxu0
        %v1716 = vpop.f32.mrb[0].mxu0
        %v1717 = vpop.f32.mrb[0].mxu0
        %1718 = vdwg.mxu0
        %v1719 = vpack.c.bf16 %v1714, %v1714
        %1720 = vrot.lane.b32.xlu0 %v1607, 120
        %v1721 = vpop.permute.xlu0 %1720
        %1722 = vrot.lane.b32.xlu0 %v1607, 88
        %v1723 = vpop.permute.xlu0 %1722
        %v1725 = vsel %vm639, %v1721, 0
        %v1728 = vsel %vm639, %v1723, 0
        %1730 = vmatprep.subr.bf16.mxu0 0
        %1731 = vmatpush1.bf16.xpose.msra.mxu0 %v1728
        %1732 = vmatprep.subr.bf16.mxu0 0
        %1733 = vmatpush1.bf16.xpose.msra.mxu0 0
        %1734 = vmatprep.subr.bf16.mxu0 0
        %1735 = vmatpush1.bf16.xpose.msra.mxu0 0
        %1736 = vmatprep.subr.bf16.mxu0 0
        %1737 = vmatpush1.bf16.xpose.msra.mxu0 0
        %1738 = vmatprep.subr.bf16.mxu0 0
        %1739 = vmatpush1.bf16.xpose.msra.mxu0 0
        %1740 = vmatprep.subr.bf16.mxu0 0
        %1741 = vmatpush1.bf16.xpose.msra.mxu0 0
        %1742 = vmatprep.subr.bf16.mxu0 0
        %1743 = vmatpush1.bf16.xpose.msra.mxu0 0
        %1744 = vmatprep.subr.bf16.mxu0 0
        %1745 = vmatpush1.bf16.xpose.msra.mxu0 0
        %1746 = vmatprep.subr.bf16.mxu0 0
        %1747 = vmatpush1.bf16.xpose.msra.mxu0 0
        %1748 = vmatprep.subr.bf16.mxu0 0
        %1749 = vmatpush1.bf16.xpose.msra.mxu0 0
        %1750 = vmatprep.subr.bf16.mxu0 0
        %1751 = vmatpush1.bf16.xpose.msra.mxu0 0
        %1752 = vmatprep.subr.bf16.mxu0 0
        %1753 = vmatpush1.bf16.xpose.msra.mxu0 0
        %1754 = vmatprep.subr.bf16.mxu0 0
        %1755 = vmatpush1.bf16.xpose.msra.mxu0 0
        %1756 = vmatprep.subr.bf16.mxu0 0
        %1757 = vmatpush1.bf16.xpose.msra.mxu0 0
        %1758 = vmatprep.subr.bf16.mxu0 0
        %1759 = vmatpush1.bf16.xpose.msra.mxu0 0
        %1760 = vmatprep.subr.bf16.mxu0 0
        %1761 = vmatpush1.bf16.xpose.msra.mxu0 0
        %1762 = vmatprep.mubr.bf16.mxu0 0
        %1763 = vmatmul.mubr.bf16.gmra.mrb[0].mxu0 %v1725
        %v1764 = vpop.f32.mrb[0].mxu0
        %v1765 = vadd.f32 0.0, %v1764
        %v1766 = vpop.f32.mrb[0].mxu0
        %v1767 = vpop.f32.mrb[0].mxu0
        %v1768 = vpop.f32.mrb[0].mxu0
        %1769 = vdwg.mxu0
        %v1770 = vmul.f32 %v1765, 0.35355338
        %v1771 = vadd.f32 %v1770, %v691
        %v1772 = vsel %vm639, %v1771, -inf
        %1773 = vmax.xlane.f32.xlu0 %v1772
        %v1774 = vpop.xlane.xlu0 %1773
        %v1775 = vsub.f32 %v1771, %v1774
        %v1776 = vmul.f32 %v1775, 1.442695
        %v1777 = vpow.pop %v1776
        %v1778 = vsel %vm639, %v1777, 0.0
        %1779 = vadd.xlane.f32.xlu0 %v1778
        %v1780 = vpop.xlane.xlu0 %1779
        %v1781 = vrcp.pop %v1780
        %v1782 = vmul.f32 %v1777, %v1781
        %v1783 = vpack.c.bf16 %v1782, %v1782
        %1784 = vrot.lane.b32.xlu0 %v1607, 56
        %v1785 = vpop.permute.xlu0 %1784
        %v1787 = vsel %vm639, %v1783, 0
        %v1790 = vsel %vm711, %v1785, 0
        %1792 = vmatprep.subr.bf16.mxu0 0
        %1793 = vmatpush1.bf16.msra.mxu0 %v1790
        %1794 = vmatprep.subr.bf16.mxu0 0
        %1795 = vmatpush1.bf16.msra.mxu0 0
        %1796 = vmatprep.subr.bf16.mxu0 0
        %1797 = vmatpush1.bf16.msra.mxu0 0
        %1798 = vmatprep.subr.bf16.mxu0 0
        %1799 = vmatpush1.bf16.msra.mxu0 0
        %1800 = vmatprep.subr.bf16.mxu0 0
        %1801 = vmatpush1.bf16.msra.mxu0 0
        %1802 = vmatprep.subr.bf16.mxu0 0
        %1803 = vmatpush1.bf16.msra.mxu0 0
        %1804 = vmatprep.subr.bf16.mxu0 0
        %1805 = vmatpush1.bf16.msra.mxu0 0
        %1806 = vmatprep.subr.bf16.mxu0 0
        %1807 = vmatpush1.bf16.msra.mxu0 0
        %1808 = vmatprep.subr.bf16.mxu0 0
        %1809 = vmatpush1.bf16.msra.mxu0 0
        %1810 = vmatprep.subr.bf16.mxu0 0
        %1811 = vmatpush1.bf16.msra.mxu0 0
        %1812 = vmatprep.subr.bf16.mxu0 0
        %1813 = vmatpush1.bf16.msra.mxu0 0
        %1814 = vmatprep.subr.bf16.mxu0 0
        %1815 = vmatpush1.bf16.msra.mxu0 0
        %1816 = vmatprep.subr.bf16.mxu0 0
        %1817 = vmatpush1.bf16.msra.mxu0 0
        %1818 = vmatprep.subr.bf16.mxu0 0
        %1819 = vmatpush1.bf16.msra.mxu0 0
        %1820 = vmatprep.subr.bf16.mxu0 0
        %1821 = vmatpush1.bf16.msra.mxu0 0
        %1822 = vmatprep.subr.bf16.mxu0 0
        %1823 = vmatpush1.bf16.msra.mxu0 0
        %1824 = vmatprep.mubr.bf16.mxu0 0
        %1825 = vmatmul.mubr.bf16.gmra.mrb[0].mxu0 %v1787
        %v1826 = vpop.f32.mrb[0].mxu0
        %v1827 = vadd.f32 0.0, %v1826
        %v1828 = vpop.f32.mrb[0].mxu0
        %v1829 = vpop.f32.mrb[0].mxu0
        %v1830 = vpop.f32.mrb[0].mxu0
        %1831 = vdwg.mxu0
        %v1832 = vpack.c.bf16 %v1827, %v1827
        %v1834 = vsel %vm639, %v1832, 0
        %v1837 = vsel %vm711, %v1604, 0
        %1839 = vmatprep.subr.bf16.mxu0 0
        %1840 = vmatpush1.bf16.msra.mxu0 %v1837
        %1841 = vmatprep.subr.bf16.mxu0 0
        %1842 = vmatpush1.bf16.msra.mxu0 0
        %1843 = vmatprep.subr.bf16.mxu0 0
        %1844 = vmatpush1.bf16.msra.mxu0 0
        %1845 = vmatprep.subr.bf16.mxu0 0
        %1846 = vmatpush1.bf16.msra.mxu0 0
        %1847 = vmatprep.subr.bf16.mxu0 0
        %1848 = vmatpush1.bf16.msra.mxu0 0
        %1849 = vmatprep.subr.bf16.mxu0 0
        %1850 = vmatpush1.bf16.msra.mxu0 0
        %1851 = vmatprep.subr.bf16.mxu0 0
        %1852 = vmatpush1.bf16.msra.mxu0 0
        %1853 = vmatprep.subr.bf16.mxu0 0
        %1854 = vmatpush1.bf16.msra.mxu0 0
        %1855 = vmatprep.subr.bf16.mxu0 0
        %1856 = vmatpush1.bf16.msra.mxu0 0
        %1857 = vmatprep.subr.bf16.mxu0 0
        %1858 = vmatpush1.bf16.msra.mxu0 0
        %1859 = vmatprep.subr.bf16.mxu0 0
        %1860 = vmatpush1.bf16.msra.mxu0 0
        %1861 = vmatprep.subr.bf16.mxu0 0
        %1862 = vmatpush1.bf16.msra.mxu0 0
        %1863 = vmatprep.subr.bf16.mxu0 0
        %1864 = vmatpush1.bf16.msra.mxu0 0
        %1865 = vmatprep.subr.bf16.mxu0 0
        %1866 = vmatpush1.bf16.msra.mxu0 0
        %1867 = vmatprep.subr.bf16.mxu0 0
        %1868 = vmatpush1.bf16.msra.mxu0 0
        %1869 = vmatprep.subr.bf16.mxu0 0
        %1870 = vmatpush1.bf16.msra.mxu0 0
        %1871 = vmatprep.mubr.bf16.mxu0 0
        %1872 = vmatmul.mubr.bf16.gmra.mrb[0].mxu0 %v1834
        %v1873 = vpop.f32.mrb[0].mxu0
        %v1874 = vadd.f32 0.0, %v1873
        %v1875 = vpop.f32.mrb[0].mxu0
        %v1876 = vpop.f32.mrb[0].mxu0
        %v1877 = vpop.f32.mrb[0].mxu0
        %1878 = vdwg.mxu0
        %v1880 = vsel %vm639, %v1719, 0
        %v1883 = vsel %vm711, %v1603, 0
        %1885 = vmatprep.subr.bf16.mxu0 0
        %1886 = vmatpush1.bf16.msra.mxu0 %v1883
        %1887 = vmatprep.subr.bf16.mxu0 0
        %1888 = vmatpush1.bf16.msra.mxu0 0
        %1889 = vmatprep.subr.bf16.mxu0 0
        %1890 = vmatpush1.bf16.msra.mxu0 0
        %1891 = vmatprep.subr.bf16.mxu0 0
        %1892 = vmatpush1.bf16.msra.mxu0 0
        %1893 = vmatprep.subr.bf16.mxu0 0
        %1894 = vmatpush1.bf16.msra.mxu0 0
        %1895 = vmatprep.subr.bf16.mxu0 0
        %1896 = vmatpush1.bf16.msra.mxu0 0
        %1897 = vmatprep.subr.bf16.mxu0 0
        %1898 = vmatpush1.bf16.msra.mxu0 0
        %1899 = vmatprep.subr.bf16.mxu0 0
        %1900 = vmatpush1.bf16.msra.mxu0 0
        %1901 = vmatprep.subr.bf16.mxu0 0
        %1902 = vmatpush1.bf16.msra.mxu0 0
        %1903 = vmatprep.subr.bf16.mxu0 0
        %1904 = vmatpush1.bf16.msra.mxu0 0
        %1905 = vmatprep.subr.bf16.mxu0 0
        %1906 = vmatpush1.bf16.msra.mxu0 0
        %1907 = vmatprep.subr.bf16.mxu0 0
        %1908 = vmatpush1.bf16.msra.mxu0 0
        %1909 = vmatprep.subr.bf16.mxu0 0
        %1910 = vmatpush1.bf16.msra.mxu0 0
        %1911 = vmatprep.subr.bf16.mxu0 0
        %1912 = vmatpush1.bf16.msra.mxu0 0
        %1913 = vmatprep.subr.bf16.mxu0 0
        %1914 = vmatpush1.bf16.msra.mxu0 0
        %1915 = vmatprep.subr.bf16.mxu0 0
        %1916 = vmatpush1.bf16.msra.mxu0 0
        %1917 = vmatprep.mubr.bf16.mxu0 0
        %1918 = vmatmul.mubr.bf16.gmra.mrb[0].mxu0 %v1880
        %v1919 = vpop.f32.mrb[0].mxu0
        %v1920 = vadd.f32 %v1874, %v1919
        %v1921 = vpop.f32.mrb[0].mxu0
        %v1922 = vpop.f32.mrb[0].mxu0
        %v1923 = vpop.f32.mrb[0].mxu0
        %1924 = vdwg.mxu0
        %1925 = vrot.lane.b32.xlu0 %v1607, 112
        %v1926 = vpop.permute.xlu0 %1925
        %1927 = vrot.lane.b32.xlu0 %v1607, 80
        %v1928 = vpop.permute.xlu0 %1927
        %v1930 = vsel %vm639, %v1926, 0
        %v1933 = vsel %vm639, %v1928, 0
        %1935 = vmatprep.subr.bf16.mxu0 0
        %1936 = vmatpush1.bf16.xpose.msra.mxu0 %v1933
        %1937 = vmatprep.subr.bf16.mxu0 0
        %1938 = vmatpush1.bf16.xpose.msra.mxu0 0
        %1939 = vmatprep.subr.bf16.mxu0 0
        %1940 = vmatpush1.bf16.xpose.msra.mxu0 0
        %1941 = vmatprep.subr.bf16.mxu0 0
        %1942 = vmatpush1.bf16.xpose.msra.mxu0 0
        %1943 = vmatprep.subr.bf16.mxu0 0
        %1944 = vmatpush1.bf16.xpose.msra.mxu0 0
        %1945 = vmatprep.subr.bf16.mxu0 0
        %1946 = vmatpush1.bf16.xpose.msra.mxu0 0
        %1947 = vmatprep.subr.bf16.mxu0 0
        %1948 = vmatpush1.bf16.xpose.msra.mxu0 0
        %1949 = vmatprep.subr.bf16.mxu0 0
        %1950 = vmatpush1.bf16.xpose.msra.mxu0 0
        %1951 = vmatprep.subr.bf16.mxu0 0
        %1952 = vmatpush1.bf16.xpose.msra.mxu0 0
        %1953 = vmatprep.subr.bf16.mxu0 0
        %1954 = vmatpush1.bf16.xpose.msra.mxu0 0
        %1955 = vmatprep.subr.bf16.mxu0 0
        %1956 = vmatpush1.bf16.xpose.msra.mxu0 0
        %1957 = vmatprep.subr.bf16.mxu0 0
        %1958 = vmatpush1.bf16.xpose.msra.mxu0 0
        %1959 = vmatprep.subr.bf16.mxu0 0
        %1960 = vmatpush1.bf16.xpose.msra.mxu0 0
        %1961 = vmatprep.subr.bf16.mxu0 0
        %1962 = vmatpush1.bf16.xpose.msra.mxu0 0
        %1963 = vmatprep.subr.bf16.mxu0 0
        %1964 = vmatpush1.bf16.xpose.msra.mxu0 0
        %1965 = vmatprep.subr.bf16.mxu0 0
        %1966 = vmatpush1.bf16.xpose.msra.mxu0 0
        %1967 = vmatprep.mubr.bf16.mxu0 0
        %1968 = vmatmul.mubr.bf16.gmra.mrb[0].mxu0 %v1930
        %v1969 = vpop.f32.mrb[0].mxu0
        %v1970 = vadd.f32 0.0, %v1969
        %v1971 = vpop.f32.mrb[0].mxu0
        %v1972 = vpop.f32.mrb[0].mxu0
        %v1973 = vpop.f32.mrb[0].mxu0
        %1974 = vdwg.mxu0
        %v1975 = vmul.f32 %v1970, 0.35355338
        %v1976 = vadd.f32 %v1975, %v691
        %v1977 = vsel %vm639, %v1976, -inf
        %1978 = vmax.xlane.f32.xlu0 %v1977
        %v1979 = vpop.xlane.xlu0 %1978
        %v1980 = vsub.f32 %v1976, %v1979
        %v1981 = vmul.f32 %v1980, 1.442695
        %v1982 = vpow.pop %v1981
        %v1983 = vsel %vm639, %v1982, 0.0
        %1984 = vadd.xlane.f32.xlu0 %v1983
        %v1985 = vpop.xlane.xlu0 %1984
        %v1986 = vrcp.pop %v1985
        %v1987 = vmul.f32 %v1982, %v1986
        %v1988 = vpack.c.bf16 %v1987, %v1987
        %1989 = vrot.lane.b32.xlu0 %v1607, 48
        %v1990 = vpop.permute.xlu0 %1989
        %v1992 = vsel %vm639, %v1988, 0
        %v1995 = vsel %vm711, %v1990, 0
        %1997 = vmatprep.subr.bf16.mxu0 0
        %1998 = vmatpush1.bf16.msra.mxu0 %v1995
        %1999 = vmatprep.subr.bf16.mxu0 0
        %2000 = vmatpush1.bf16.msra.mxu0 0
        %2001 = vmatprep.subr.bf16.mxu0 0
        %2002 = vmatpush1.bf16.msra.mxu0 0
        %2003 = vmatprep.subr.bf16.mxu0 0
        %2004 = vmatpush1.bf16.msra.mxu0 0
        %2005 = vmatprep.subr.bf16.mxu0 0
        %2006 = vmatpush1.bf16.msra.mxu0 0
        %2007 = vmatprep.subr.bf16.mxu0 0
        %2008 = vmatpush1.bf16.msra.mxu0 0
        %2009 = vmatprep.subr.bf16.mxu0 0
        %2010 = vmatpush1.bf16.msra.mxu0 0
        %2011 = vmatprep.subr.bf16.mxu0 0
        %2012 = vmatpush1.bf16.msra.mxu0 0
        %2013 = vmatprep.subr.bf16.mxu0 0
        %2014 = vmatpush1.bf16.msra.mxu0 0
        %2015 = vmatprep.subr.bf16.mxu0 0
        %2016 = vmatpush1.bf16.msra.mxu0 0
        %2017 = vmatprep.subr.bf16.mxu0 0
        %2018 = vmatpush1.bf16.msra.mxu0 0
        %2019 = vmatprep.subr.bf16.mxu0 0
        %2020 = vmatpush1.bf16.msra.mxu0 0
        %2021 = vmatprep.subr.bf16.mxu0 0
        %2022 = vmatpush1.bf16.msra.mxu0 0
        %2023 = vmatprep.subr.bf16.mxu0 0
        %2024 = vmatpush1.bf16.msra.mxu0 0
        %2025 = vmatprep.subr.bf16.mxu0 0
        %2026 = vmatpush1.bf16.msra.mxu0 0
        %2027 = vmatprep.subr.bf16.mxu0 0
        %2028 = vmatpush1.bf16.msra.mxu0 0
        %2029 = vmatprep.mubr.bf16.mxu0 0
        %2030 = vmatmul.mubr.bf16.gmra.mrb[0].mxu0 %v1992
        %v2031 = vpop.f32.mrb[0].mxu0
        %v2032 = vadd.f32 0.0, %v2031
        %v2033 = vpop.f32.mrb[0].mxu0
        %v2034 = vpop.f32.mrb[0].mxu0
        %v2035 = vpop.f32.mrb[0].mxu0
        %2036 = vdwg.mxu0
        %v2037 = vpack.c.bf16 %v2032, %v2032
        %v2039 = vsel %vm639, %v2037, 0
        %v2042 = vsel %vm711, %v1605, 0
        %2044 = vmatprep.subr.bf16.mxu0 0
        %2045 = vmatpush1.bf16.msra.mxu0 %v2042
        %2046 = vmatprep.subr.bf16.mxu0 0
        %2047 = vmatpush1.bf16.msra.mxu0 0
        %2048 = vmatprep.subr.bf16.mxu0 0
        %2049 = vmatpush1.bf16.msra.mxu0 0
        %2050 = vmatprep.subr.bf16.mxu0 0
        %2051 = vmatpush1.bf16.msra.mxu0 0
        %2052 = vmatprep.subr.bf16.mxu0 0
        %2053 = vmatpush1.bf16.msra.mxu0 0
        %2054 = vmatprep.subr.bf16.mxu0 0
        %2055 = vmatpush1.bf16.msra.mxu0 0
        %2056 = vmatprep.subr.bf16.mxu0 0
        %2057 = vmatpush1.bf16.msra.mxu0 0
        %2058 = vmatprep.subr.bf16.mxu0 0
        %2059 = vmatpush1.bf16.msra.mxu0 0
        %2060 = vmatprep.subr.bf16.mxu0 0
        %2061 = vmatpush1.bf16.msra.mxu0 0
        %2062 = vmatprep.subr.bf16.mxu0 0
        %2063 = vmatpush1.bf16.msra.mxu0 0
        %2064 = vmatprep.subr.bf16.mxu0 0
        %2065 = vmatpush1.bf16.msra.mxu0 0
        %2066 = vmatprep.subr.bf16.mxu0 0
        %2067 = vmatpush1.bf16.msra.mxu0 0
        %2068 = vmatprep.subr.bf16.mxu0 0
        %2069 = vmatpush1.bf16.msra.mxu0 0
        %2070 = vmatprep.subr.bf16.mxu0 0
        %2071 = vmatpush1.bf16.msra.mxu0 0
        %2072 = vmatprep.subr.bf16.mxu0 0
        %2073 = vmatpush1.bf16.msra.mxu0 0
        %2074 = vmatprep.subr.bf16.mxu0 0
        %2075 = vmatpush1.bf16.msra.mxu0 0
        %2076 = vmatprep.mubr.bf16.mxu0 0
        %2077 = vmatmul.mubr.bf16.gmra.mrb[0].mxu0 %v2039
        %v2078 = vpop.f32.mrb[0].mxu0
        %v2079 = vadd.f32 0.0, %v2078
        %v2080 = vpop.f32.mrb[0].mxu0
        %v2081 = vpop.f32.mrb[0].mxu0
        %v2082 = vpop.f32.mrb[0].mxu0
        %2083 = vdwg.mxu0
        %v2084 = vadd.f32 %v1920, %v2079
        %2085 = vrot.lane.b32.xlu0 %v1607, 104
        %v2086 = vpop.permute.xlu0 %2085
        %2087 = vrot.lane.b32.xlu0 %v1607, 72
        %v2088 = vpop.permute.xlu0 %2087
        %v2090 = vsel %vm639, %v2086, 0
        %v2093 = vsel %vm639, %v2088, 0
        %2095 = vmatprep.subr.bf16.mxu0 0
        %2096 = vmatpush1.bf16.xpose.msra.mxu0 %v2093
        %2097 = vmatprep.subr.bf16.mxu0 0
        %2098 = vmatpush1.bf16.xpose.msra.mxu0 0
        %2099 = vmatprep.subr.bf16.mxu0 0
        %2100 = vmatpush1.bf16.xpose.msra.mxu0 0
        %2101 = vmatprep.subr.bf16.mxu0 0
        %2102 = vmatpush1.bf16.xpose.msra.mxu0 0
        %2103 = vmatprep.subr.bf16.mxu0 0
        %2104 = vmatpush1.bf16.xpose.msra.mxu0 0
        %2105 = vmatprep.subr.bf16.mxu0 0
        %2106 = vmatpush1.bf16.xpose.msra.mxu0 0
        %2107 = vmatprep.subr.bf16.mxu0 0
        %2108 = vmatpush1.bf16.xpose.msra.mxu0 0
        %2109 = vmatprep.subr.bf16.mxu0 0
        %2110 = vmatpush1.bf16.xpose.msra.mxu0 0
        %2111 = vmatprep.subr.bf16.mxu0 0
        %2112 = vmatpush1.bf16.xpose.msra.mxu0 0
        %2113 = vmatprep.subr.bf16.mxu0 0
        %2114 = vmatpush1.bf16.xpose.msra.mxu0 0
        %2115 = vmatprep.subr.bf16.mxu0 0
        %2116 = vmatpush1.bf16.xpose.msra.mxu0 0
        %2117 = vmatprep.subr.bf16.mxu0 0
        %2118 = vmatpush1.bf16.xpose.msra.mxu0 0
        %2119 = vmatprep.subr.bf16.mxu0 0
        %2120 = vmatpush1.bf16.xpose.msra.mxu0 0
        %2121 = vmatprep.subr.bf16.mxu0 0
        %2122 = vmatpush1.bf16.xpose.msra.mxu0 0
        %2123 = vmatprep.subr.bf16.mxu0 0
        %2124 = vmatpush1.bf16.xpose.msra.mxu0 0
        %2125 = vmatprep.subr.bf16.mxu0 0
        %2126 = vmatpush1.bf16.xpose.msra.mxu0 0
        %2127 = vmatprep.mubr.bf16.mxu0 0
        %2128 = vmatmul.mubr.bf16.gmra.mrb[0].mxu0 %v2090
        %v2129 = vpop.f32.mrb[0].mxu0
        %v2130 = vadd.f32 0.0, %v2129
        %v2131 = vpop.f32.mrb[0].mxu0
        %v2132 = vpop.f32.mrb[0].mxu0
        %v2133 = vpop.f32.mrb[0].mxu0
        %2134 = vdwg.mxu0
        %v2135 = vmul.f32 %v2130, 0.35355338
        %v2136 = vadd.f32 %v2135, %v691
        %v2137 = vsel %vm639, %v2136, -inf
        %2138 = vmax.xlane.f32.xlu0 %v2137
        %v2139 = vpop.xlane.xlu0 %2138
        %v2140 = vsub.f32 %v2136, %v2139
        %v2141 = vmul.f32 %v2140, 1.442695
        %v2142 = vpow.pop %v2141
        %v2143 = vsel %vm639, %v2142, 0.0
        %2144 = vadd.xlane.f32.xlu0 %v2143
        %v2145 = vpop.xlane.xlu0 %2144
        %v2146 = vrcp.pop %v2145
        %v2147 = vmul.f32 %v2142, %v2146
        %v2148 = vpack.c.bf16 %v2147, %v2147
        %2149 = vrot.lane.b32.xlu0 %v1607, 40
        %v2150 = vpop.permute.xlu0 %2149
        %v2152 = vsel %vm639, %v2148, 0
        %v2155 = vsel %vm711, %v2150, 0
        %2157 = vmatprep.subr.bf16.mxu0 0
        %2158 = vmatpush1.bf16.msra.mxu0 %v2155
        %2159 = vmatprep.subr.bf16.mxu0 0
        %2160 = vmatpush1.bf16.msra.mxu0 0
        %2161 = vmatprep.subr.bf16.mxu0 0
        %2162 = vmatpush1.bf16.msra.mxu0 0
        %2163 = vmatprep.subr.bf16.mxu0 0
        %2164 = vmatpush1.bf16.msra.mxu0 0
        %2165 = vmatprep.subr.bf16.mxu0 0
        %2166 = vmatpush1.bf16.msra.mxu0 0
        %2167 = vmatprep.subr.bf16.mxu0 0
        %2168 = vmatpush1.bf16.msra.mxu0 0
        %2169 = vmatprep.subr.bf16.mxu0 0
        %2170 = vmatpush1.bf16.msra.mxu0 0
        %2171 = vmatprep.subr.bf16.mxu0 0
        %2172 = vmatpush1.bf16.msra.mxu0 0
        %2173 = vmatprep.subr.bf16.mxu0 0
        %2174 = vmatpush1.bf16.msra.mxu0 0
        %2175 = vmatprep.subr.bf16.mxu0 0
        %2176 = vmatpush1.bf16.msra.mxu0 0
        %2177 = vmatprep.subr.bf16.mxu0 0
        %2178 = vmatpush1.bf16.msra.mxu0 0
        %2179 = vmatprep.subr.bf16.mxu0 0
        %2180 = vmatpush1.bf16.msra.mxu0 0
        %2181 = vmatprep.subr.bf16.mxu0 0
        %2182 = vmatpush1.bf16.msra.mxu0 0
        %2183 = vmatprep.subr.bf16.mxu0 0
        %2184 = vmatpush1.bf16.msra.mxu0 0
        %2185 = vmatprep.subr.bf16.mxu0 0
        %2186 = vmatpush1.bf16.msra.mxu0 0
        %2187 = vmatprep.subr.bf16.mxu0 0
        %2188 = vmatpush1.bf16.msra.mxu0 0
        %2189 = vmatprep.mubr.bf16.mxu0 0
        %2190 = vmatmul.mubr.bf16.gmra.mrb[0].mxu0 %v2152
        %v2191 = vpop.f32.mrb[0].mxu0
        %v2192 = vadd.f32 0.0, %v2191
        %v2193 = vpop.f32.mrb[0].mxu0
        %v2194 = vpop.f32.mrb[0].mxu0
        %v2195 = vpop.f32.mrb[0].mxu0
        %2196 = vdwg.mxu0
        %v2197 = vpack.c.bf16 %v2192, %v2192
        %v2199 = vsel %vm639, %v2197, 0
        %v2202 = vsel %vm711, %v1606, 0
        %2204 = vmatprep.subr.bf16.mxu0 0
        %2205 = vmatpush1.bf16.msra.mxu0 %v2202
        %2206 = vmatprep.subr.bf16.mxu0 0
        %2207 = vmatpush1.bf16.msra.mxu0 0
        %2208 = vmatprep.subr.bf16.mxu0 0
        %2209 = vmatpush1.bf16.msra.mxu0 0
        %2210 = vmatprep.subr.bf16.mxu0 0
        %2211 = vmatpush1.bf16.msra.mxu0 0
        %2212 = vmatprep.subr.bf16.mxu0 0
        %2213 = vmatpush1.bf16.msra.mxu0 0
        %2214 = vmatprep.subr.bf16.mxu0 0
        %2215 = vmatpush1.bf16.msra.mxu0 0
        %2216 = vmatprep.subr.bf16.mxu0 0
        %2217 = vmatpush1.bf16.msra.mxu0 0
        %2218 = vmatprep.subr.bf16.mxu0 0
        %2219 = vmatpush1.bf16.msra.mxu0 0
        %2220 = vmatprep.subr.bf16.mxu0 0
        %2221 = vmatpush1.bf16.msra.mxu0 0
        %2222 = vmatprep.subr.bf16.mxu0 0
        %2223 = vmatpush1.bf16.msra.mxu0 0
        %2224 = vmatprep.subr.bf16.mxu0 0
        %2225 = vmatpush1.bf16.msra.mxu0 0
        %2226 = vmatprep.subr.bf16.mxu0 0
        %2227 = vmatpush1.bf16.msra.mxu0 0
        %2228 = vmatprep.subr.bf16.mxu0 0
        %2229 = vmatpush1.bf16.msra.mxu0 0
        %2230 = vmatprep.subr.bf16.mxu0 0
        %2231 = vmatpush1.bf16.msra.mxu0 0
        %2232 = vmatprep.subr.bf16.mxu0 0
        %2233 = vmatpush1.bf16.msra.mxu0 0
        %2234 = vmatprep.subr.bf16.mxu0 0
        %2235 = vmatpush1.bf16.msra.mxu0 0
        %2236 = vmatprep.mubr.bf16.mxu0 0
        %2237 = vmatmul.mubr.bf16.gmra.mrb[0].mxu0 %v2199
        %v2238 = vpop.f32.mrb[0].mxu0
        %v2239 = vadd.f32 0.0, %v2238
        %v2240 = vpop.f32.mrb[0].mxu0
        %v2241 = vpop.f32.mrb[0].mxu0
        %v2242 = vpop.f32.mrb[0].mxu0
        %2243 = vdwg.mxu0
        %v2244 = vadd.f32 %v2084, %v2239
        %s2245 = scalar_lea.vmem %s7, 1
        %v2246 = vld [vmem:[%s2245] sm:$0x1]
        %v2248 = vlaneseq
        %v2249 = vshrl.u32 %v2248, 7
        %v2250 = vsub.s32 0, %v2249
        %v2251 = vrot.slane %v2246, %v2250
        %v2253 = vadd.f32 %v2244, %v2251
        %v2254 = vadd.f32 %v1532, %v2253
        %s2255 = scalar_lea.vmem %s8, 1
        %v2256 = vld [vmem:[%s2255] sm:$0x1]
        %s2257 = scalar_lea.vmem %s9, 1
        %v2258 = vld [vmem:[%s2257] sm:$0x1]
        %v2259 = vsel %vm534, %v2254, 0.0
        %2260 = vadd.xlane.f32.xlu0 %v2259
        %v2261 = vpop.xlane.xlu0 %2260
        %v2262 = vmul.f32 %v2261, %v538
        %v2263 = vsub.f32 %v2254, %v2262
        %v2264 = vmul.f32 %v2263, %v2263
        %v2265 = vsel %vm534, %v2264, 0.0
        %2266 = vadd.xlane.f32.xlu0 %v2265
        %v2267 = vpop.xlane.xlu0 %2266
        %v2268 = vmul.f32 %v2267, %v538
        %v2269 = vadd.f32 %v2268, 1e-12
        %v2270 = vrsqrt.pop %v2269
        %v2271 = vmul.f32 %v2263, %v2270
        %v2273 = vlaneseq
        %v2274 = vshrl.u32 %v2273, 7
        %v2275 = vsub.s32 0, %v2274
        %v2276 = vrot.slane %v2256, %v2275
        %v2278 = vmul.f32 %v2271, %v2276
        %v2280 = vlaneseq
        %v2281 = vshrl.u32 %v2280, 7
        %v2282 = vsub.s32 0, %v2281
        %v2283 = vrot.slane %v2258, %v2282
        %v2285 = vadd.f32 %v2278, %v2283
        %s2286 = scalar_lea.vmem %s10, 16
        %v2287 = vld [vmem:[%s2286] sm:$0xf]
        %v2288 = vld [vmem:[%s2286 + $0x4] sm:$0xf]
        %v2289 = vld [vmem:[%s2286 + $0x8] sm:$0xf]
        %v2290 = vld [vmem:[%s2286 + $0xc] sm:$0xf]
        %s2291 = scalar_lea.vmem %s11, 1
        %v2292 = vld [vmem:[%s2291] sm:$0x1]
        %v2293 = vpack.c.bf16 %v2285, %v2285
        %v2295 = vlaneseq
        %v2296 = vshrl.u32 %v2295, 7
        %v2297 = vsub.s32 0, %v2296
        %v2298 = vrot.slane %v2292, %v2297
        %v2304 = vunpack.c.l.b16 %v2287
        %v2305 = vunpack.c.l.b16 %v2288
        %v2306 = vunpack.c.l.b16 %v2289
        %v2307 = vunpack.c.l.b16 %v2290
        %v2308 = vpack.c.b16 %v2305, %v2304
        %v2309 = vpack.c.b16 %v2307, %v2306
        %v2313 = vsel %vm534, %v2293, 0
        %2315 = vmatprep.subr.bf16.mxu0 0
        %2316 = vmatpush1.bf16.msra.mxu0 %v2308
        %2317 = vmatprep.subr.bf16.mxu0 0
        %2318 = vmatpush1.bf16.msra.mxu0 %v2309
        %2319 = vmatprep.subr.bf16.mxu0 0
        %2320 = vmatpush1.bf16.msra.mxu0 0
        %2321 = vmatprep.subr.bf16.mxu0 0
        %2322 = vmatpush1.bf16.msra.mxu0 0
        %2323 = vmatprep.subr.bf16.mxu0 0
        %2324 = vmatpush1.bf16.msra.mxu0 0
        %2325 = vmatprep.subr.bf16.mxu0 0
        %2326 = vmatpush1.bf16.msra.mxu0 0
        %2327 = vmatprep.subr.bf16.mxu0 0
        %2328 = vmatpush1.bf16.msra.mxu0 0
        %2329 = vmatprep.subr.bf16.mxu0 0
        %2330 = vmatpush1.bf16.msra.mxu0 0
        %2331 = vmatprep.subr.bf16.mxu0 0
        %2332 = vmatpush1.bf16.msra.mxu0 0
        %2333 = vmatprep.subr.bf16.mxu0 0
        %2334 = vmatpush1.bf16.msra.mxu0 0
        %2335 = vmatprep.subr.bf16.mxu0 0
        %2336 = vmatpush1.bf16.msra.mxu0 0
        %2337 = vmatprep.subr.bf16.mxu0 0
        %2338 = vmatpush1.bf16.msra.mxu0 0
        %2339 = vmatprep.subr.bf16.mxu0 0
        %2340 = vmatpush1.bf16.msra.mxu0 0
        %2341 = vmatprep.subr.bf16.mxu0 0
        %2342 = vmatpush1.bf16.msra.mxu0 0
        %2343 = vmatprep.subr.bf16.mxu0 0
        %2344 = vmatpush1.bf16.msra.mxu0 0
        %2345 = vmatprep.subr.bf16.mxu0 0
        %2346 = vmatpush1.bf16.msra.mxu0 0
        %2347 = vmatprep.mubr.bf16.mxu0 0
        %2348 = vmatmul.mubr.bf16.gmra.mrb[0].mxu0 %v2313
        %v2349 = vpop.f32.mrb[0].mxu0
        %v2350 = vadd.f32 %v2298, %v2349
        %v2351 = vpop.f32.mrb[0].mxu0
        %v2352 = vpop.f32.mrb[0].mxu0
        %v2353 = vpop.f32.mrb[0].mxu0
        %2354 = vdwg.mxu0
        %v2355 = vmul.f32 %v2350, 0.5
        %v2356 = vmul.f32 %v2350, 0.70710677
        %v2357 = verf.f32.pop %v2356
        %v2358 = vadd.f32 %v2357, 1.0
        %v2359 = vmul.f32 %v2355, %v2358
        %s2360 = scalar_lea.vmem %s12, 64
        %v2361 = vld [vmem:[%s2360] sm:$0xf]
        %v2362 = vld [vmem:[%s2360 + $0x4] sm:$0xf]
        %v2363 = vld [vmem:[%s2360 + $0x8] sm:$0xf]
        %v2364 = vld [vmem:[%s2360 + $0xc] sm:$0xf]
        %v2365 = vld [vmem:[%s2360 + $0x10] sm:$0xf]
        %v2366 = vld [vmem:[%s2360 + $0x14] sm:$0xf]
        %v2367 = vld [vmem:[%s2360 + $0x18] sm:$0xf]
        %v2368 = vld [vmem:[%s2360 + $0x1c] sm:$0xf]
        %v2369 = vld [vmem:[%s2360 + $0x20] sm:$0xf]
        %v2370 = vld [vmem:[%s2360 + $0x24] sm:$0xf]
        %v2371 = vld [vmem:[%s2360 + $0x28] sm:$0xf]
        %v2372 = vld [vmem:[%s2360 + $0x2c] sm:$0xf]
        %v2373 = vld [vmem:[%s2360 + $0x30] sm:$0xf]
        %v2374 = vld [vmem:[%s2360 + $0x34] sm:$0xf]
        %v2375 = vld [vmem:[%s2360 + $0x38] sm:$0xf]
        %v2376 = vld [vmem:[%s2360 + $0x3c] sm:$0xf]
        %s2377 = scalar_lea.vmem %s13, 1
        %v2378 = vld [vmem:[%s2377] sm:$0x1]
        %v2379 = vpack.c.bf16 %v2359, %v2359
        %v2381 = vlaneseq
        %v2382 = vshrl.u32 %v2381, 7
        %v2383 = vsub.s32 0, %v2382
        %v2384 = vrot.slane %v2378, %v2383
        %v2402 = vunpack.c.l.b16 %v2361
        %v2403 = vunpack.c.l.b16 %v2362
        %v2404 = vunpack.c.l.b16 %v2363
        %v2405 = vunpack.c.l.b16 %v2364
        %v2406 = vunpack.c.l.b16 %v2365
        %v2407 = vunpack.c.l.b16 %v2366
        %v2408 = vunpack.c.l.b16 %v2367
        %v2409 = vunpack.c.l.b16 %v2368
        %v2410 = vunpack.c.l.b16 %v2369
        %v2411 = vunpack.c.l.b16 %v2370
        %v2412 = vunpack.c.l.b16 %v2371
        %v2413 = vunpack.c.l.b16 %v2372
        %v2414 = vunpack.c.l.b16 %v2373
        %v2415 = vunpack.c.l.b16 %v2374
        %v2416 = vunpack.c.l.b16 %v2375
        %v2417 = vunpack.c.l.b16 %v2376
        %v2418 = vpack.c.b16 %v2403, %v2402
        %v2419 = vpack.c.b16 %v2405, %v2404
        %v2420 = vpack.c.b16 %v2407, %v2406
        %v2421 = vpack.c.b16 %v2409, %v2408
        %v2422 = vpack.c.b16 %v2411, %v2410
        %v2423 = vpack.c.b16 %v2413, %v2412
        %v2424 = vpack.c.b16 %v2415, %v2414
        %v2425 = vpack.c.b16 %v2417, %v2416
        %2434 = vmatprep.subr.bf16.mxu0 0
        %2435 = vmatpush1.bf16.msra.mxu0 %v2418
        %2436 = vmatprep.subr.bf16.mxu0 0
        %2437 = vmatpush1.bf16.msra.mxu0 %v2419
        %2438 = vmatprep.subr.bf16.mxu0 0
        %2439 = vmatpush1.bf16.msra.mxu0 %v2420
        %2440 = vmatprep.subr.bf16.mxu0 0
        %2441 = vmatpush1.bf16.msra.mxu0 %v2421
        %2442 = vmatprep.subr.bf16.mxu0 0
        %2443 = vmatpush1.bf16.msra.mxu0 %v2422
        %2444 = vmatprep.subr.bf16.mxu0 0
        %2445 = vmatpush1.bf16.msra.mxu0 %v2423
        %2446 = vmatprep.subr.bf16.mxu0 0
        %2447 = vmatpush1.bf16.msra.mxu0 %v2424
        %2448 = vmatprep.subr.bf16.mxu0 0
        %2449 = vmatpush1.bf16.msra.mxu0 %v2425
        %2450 = vmatprep.subr.bf16.mxu0 0
        %2451 = vmatpush1.bf16.msra.mxu0 0
        %2452 = vmatprep.subr.bf16.mxu0 0
        %2453 = vmatpush1.bf16.msra.mxu0 0
        %2454 = vmatprep.subr.bf16.mxu0 0
        %2455 = vmatpush1.bf16.msra.mxu0 0
        %2456 = vmatprep.subr.bf16.mxu0 0
        %2457 = vmatpush1.bf16.msra.mxu0 0
        %2458 = vmatprep.subr.bf16.mxu0 0
        %2459 = vmatpush1.bf16.msra.mxu0 0
        %2460 = vmatprep.subr.bf16.mxu0 0
        %2461 = vmatpush1.bf16.msra.mxu0 0
        %2462 = vmatprep.subr.bf16.mxu0 0
        %2463 = vmatpush1.bf16.msra.mxu0 0
        %2464 = vmatprep.subr.bf16.mxu0 0
        %2465 = vmatpush1.bf16.msra.mxu0 0
        %2466 = vmatprep.mubr.bf16.mxu0 0
        %2467 = vmatmul.mubr.bf16.gmra.mrb[0].mxu0 %v2379
        %v2468 = vpop.f32.mrb[0].mxu0
        %v2469 = vadd.f32 %v2384, %v2468
        %v2470 = vpop.f32.mrb[0].mxu0
        %v2471 = vpop.f32.mrb[0].mxu0
        %v2472 = vpop.f32.mrb[0].mxu0
        %2473 = vdwg.mxu0
        %v2474 = vadd.f32 %v2285, %v2469
        %s2475 = scalar_lea.vmem %s14, 1
        %v2476 = vld [vmem:[%s2475] sm:$0x1]
        %s2477 = scalar_lea.vmem %s15, 1
        %v2478 = vld [vmem:[%s2477] sm:$0x1]
        %v2479 = vsel %vm534, %v2474, 0.0
        %2480 = vadd.xlane.f32.xlu0 %v2479
        %v2481 = vpop.xlane.xlu0 %2480
        %v2482 = vmul.f32 %v2481, %v538
        %v2483 = vsub.f32 %v2474, %v2482
        %v2484 = vmul.f32 %v2483, %v2483
        %v2485 = vsel %vm534, %v2484, 0.0
        %2486 = vadd.xlane.f32.xlu0 %v2485
        %v2487 = vpop.xlane.xlu0 %2486
        %v2488 = vmul.f32 %v2487, %v538
        %v2489 = vadd.f32 %v2488, 1e-12
        %v2490 = vrsqrt.pop %v2489
        %v2491 = vmul.f32 %v2483, %v2490
        %v2493 = vlaneseq
        %v2494 = vshrl.u32 %v2493, 7
        %v2495 = vsub.s32 0, %v2494
        %v2496 = vrot.slane %v2476, %v2495
        %v2498 = vmul.f32 %v2491, %v2496
        %v2500 = vlaneseq
        %v2501 = vshrl.u32 %v2500, 7
        %v2502 = vsub.s32 0, %v2501
        %v2503 = vrot.slane %v2478, %v2502
        %v2505 = vadd.f32 %v2498, %v2503
        %vm2506 = vcmask 253952
        %2507 = vst.msk [vmem:[%s522] sm:$0x1] %vm2506, %v2505
        %s2508 = sand.u32 %s384, 1
        %s2509 = scalar_lea.sflag [#allocation3], %s2508
        %s2510 = sand.u32 %s384, 1
        %s2511 = scalar_lea.vmem [#allocation2], %s2510
        // Predicated region
        $region85: #{tpu_custom_call.1} parent=83 // pred_check
          %p2512 = pneg %p394
        $region86: #{tpu_custom_call.1} parent=83 // pred_check_branch
          %2514 = sbr.rel (%p2512) target = $region88
        $region87: #{tpu_custom_call.1} parent=83 // pred_region
          %s2516 = ssub.s32 16, 16
          %2517 = vsyncadd %s2509, %s2516
          %s2518 = smul.addr %s30, 16
          %s2519 = scalar_lea.hbm %s16, %s2518
          %s2521 = sshll.u32 %s2511, 4
          %s2522 = int_to_ptr.vmem [resolvable:$true] %s2521
          %2524 = dma.vmem_to_hbm [thread:$0]  %s2522, 16, %s2519, %s2509
        $region88: #{tpu_custom_call.1} parent=83 // pred_fallthru
          _
      $region84: #{tpu_custom_call.1} parent=5 // pred_fallthru
        _
      %p2525 = scmp.le.s32.totalorder 2, %s25
      // Predicated region
      $region89: #{tpu_custom_call.1} parent=5 // pred_check
        %p2526 = pneg %p2525
      $region90: #{tpu_custom_call.1} parent=5 // pred_check_branch
        %2528 = sbr.rel (%p2526) target = $region92
      $region91: #{tpu_custom_call.1} parent=5 // pred_region
        %s2529 = ssub.s32 %s25, 2
        // Predicated region
        $region93: #{tpu_custom_call.1} parent=91 // pred_check
          %p2530 = pneg %p400
        $region94: #{tpu_custom_call.1} parent=91 // pred_check_branch
          %2532 = sbr.rel (%p2530) target = $region96
        $region95: #{tpu_custom_call.1} parent=91 // pred_region
          %s2533 = sand.u32 %s385, 1
          %s2534 = scalar_lea.sflag [#allocation3], %s2533
          %s2535 = sand.u32 %s385, 1
          %s2536 = scalar_lea.vmem [#allocation2], %s2535
          %2537 = dma.done %s2534, 16
        $region96: #{tpu_custom_call.1} parent=91 // pred_fallthru
          _
      $region92: #{tpu_custom_call.1} parent=5 // pred_fallthru
        _
    $region6: #{tpu_custom_call.1} parent=1 // loop_footer
      %s29 = sadd.s32 1, %s25
    $region7: #{tpu_custom_call.1} parent=1 // loop_footer_branch
      %24 = sbr.rel target = $region3
    $region8: #{tpu_custom_call.1} parent=1 // loop_exit
      _
    %2538 = vsyncpa [#allocation3], 1
    %s2539 = scalar_lea.sflag [#allocation3], 1
    %2540 = vsyncpa %s2539, 1

</llo_original>
